<compile_context>
chip_gen: v6e
topology: v6e:2x2x1
jax: 0.10.0
libtpu: 0.0.40
codegen_flags: <defaults>
</compile_context>

<pallas_src>
import numpy as np
import jax
import jax.numpy as jnp
from jax.experimental import pallas as pl
from jax.experimental.pallas import tpu as pltpu


def build_upsample_matrix(n_in, n_out):
    """1-D bilinear interpolation matrix (n_out, n_in), align_corners=True."""
    dst = np.arange(n_out)
    if n_out == 1:
        src = np.zeros(1, dtype=np.float64)
    else:
        src = dst * (n_in - 1) / (n_out - 1)
    i0 = np.clip(np.floor(src).astype(np.int64), 0, n_in - 1)
    i1 = np.minimum(i0 + 1, n_in - 1)
    w1 = (src - i0).astype(np.float32)
    w0 = 1.0 - w1
    M = np.zeros((n_out, n_in), np.float32)
    np.add.at(M, (np.arange(n_out), i0), w0)
    np.add.at(M, (np.arange(n_out), i1), w1)
    return M


def upsample_layer_forward(x_nchw, w_hwio, bias, gamma, beta, run_mean, run_var,
                           eps=1e-5):
    """x_nchw: (N, Cin, H, W) f32 -> (N, Cout, 2H, 2W) f32."""
    N, Cin, H, W = x_nchw.shape
    Cout = w_hwio.shape[-1]
    H2, W2 = 2 * H, 2 * W
    HW, S2 = H * W, H2 * W2

    # Widened flattened layout: data region [B, B+S2) of width L, zero elsewhere.
    # A 3x3 tap (dp, dq) then reads the contiguous slice [B + dp*W2 + dq, ... + S2).
    B = W2 + 1
    L = S2 + 2 * (W2 + 1)
    L = ((L + 127) // 128) * 128          # round lanes up to a multiple of 128

    # ---- host precompute ---------------------------------------------------
    uh = build_upsample_matrix(H, H2)                     # (H2, H)
    uw = build_upsample_matrix(W, W2)                     # (W2, W)
    kmat = np.kron(uh, uw)                                # (S2, HW): bilinear x2 operator
    ut_wide = np.zeros((HW, L), np.float32)
    ut_wide[:, B:B + S2] = kmat.T                         # (HW, L)
    ut_wide = jnp.asarray(ut_wide)

    # 3x3 conv weights as 9 LHS matrices (Cout, Cin), tap order t = dh*3 + dw.
    wt = jnp.transpose(w_hwio, (0, 1, 3, 2)).reshape(9, Cout, Cin).astype(jnp.float32)

    # Horizontal-edge masks for dw = 0 / dw = 2 taps (vertical edges are already
    # handled by the zero padding baked into ut_wide).
    qidx = np.arange(S2) % W2
    masks = jnp.asarray(np.stack([(qidx > 0), (qidx < W2 - 1)]).astype(np.float32))

    # Fold conv bias + eval-mode BatchNorm into per-channel scale/shift.
    # TODO(synk): training-mode BatchNorm (batch statistics) not implemented;
    # eval-mode running statistics are used instead.
    scale = (gamma / jnp.sqrt(run_var + eps)).astype(jnp.float32)
    shift = (scale * (bias - run_mean) + beta).astype(jnp.float32)
    scale2 = scale.reshape(Cout, 1)
    shift2 = shift.reshape(Cout, 1)

    # NCHW kept; only a contiguous reshape (no transpose, no extra HBM pass).
    x_flat = x_nchw.reshape(N, Cin, HW).astype(jnp.float32)

    def kernel(x_ref, ut_ref, wt_ref, mask_ref, scale_ref, shift_ref, o_ref):
        x = x_ref[0]                                                    # (Cin, HW)
        # Bilinear x2 upsample: single matmul (K = HW) into the widened slab.
        uwide = jnp.dot(x, ut_ref[...],
                        preferred_element_type=jnp.float32)             # (Cin, L)

        # Conv 3x3 (padding=1): 9 static lane slices, weights-as-LHS matmuls,
        # accumulating into a fully packed lane-dense (Cout, S2) accumulator.
        acc = jnp.zeros((Cout, S2), jnp.float32)
        t = 0
        for dp in (-1, 0, 1):
            for dq in (-1, 0, 1):
                start = B + dp * W2 + dq
                slab = uwide[:, start:start + S2]                        # (Cin, S2)
                if dq == -1:
                    slab = slab * mask_ref[0:1, :]
                elif dq == 1:
                    slab = slab * mask_ref[1:2, :]
                acc = acc + jnp.dot(wt_ref[t], slab,
                                    preferred_element_type=jnp.float32)  # (Cout, S2)
                t += 1

        # Fused (conv bias + BatchNorm) scale/shift + ReLU; lane-dense store.
        o_ref[0] = jnp.maximum(acc * scale_ref[...] + shift_ref[...],
                               0.0).astype(o_ref.dtype)

    out_flat = pl.pallas_call(
        kernel,
        out_shape=jax.ShapeDtypeStruct((N, Cout, S2), jnp.float32),
        grid_spec=pltpu.PrefetchScalarGridSpec(
            num_scalar_prefetch=0,
            grid=(N,),
            in_specs=[
                pl.BlockSpec((1, Cin, HW), lambda n: (n, 0, 0)),
                pl.BlockSpec((HW, L), lambda n: (0, 0)),          # loaded once
                pl.BlockSpec((9, Cout, Cin), lambda n: (0, 0, 0)),
                pl.BlockSpec((2, S2), lambda n: (0, 0)),
                pl.BlockSpec((Cout, 1), lambda n: (0, 0)),
                pl.BlockSpec((Cout, 1), lambda n: (0, 0)),
            ],
            out_specs=pl.BlockSpec((1, Cout, S2), lambda n: (n, 0, 0)),
        ),
        compiler_params=pltpu.CompilerParams(
            dimension_semantics=("parallel",)),
    )(x_flat, ut_wide, wt, masks, scale2, shift2)

    return out_flat.reshape(N, Cout, H2, W2)


def reference_forward(x_nchw, w_hwio, bias, gamma, beta, run_mean, run_var, eps=1e-5):
    N, Cin, H, W = x_nchw.shape
    H2, W2 = 2 * H, 2 * W
    x = jnp.transpose(x_nchw, (0, 2, 3, 1)).astype(jnp.float32)
    uh = jnp.asarray(build_upsample_matrix(H, H2))
    uw = jnp.asarray(build_upsample_matrix(W, W2))
    u = jnp.einsum('ph,nhwc->npwc', uh, x)
    u = jnp.einsum('qw,npwc->npqc', uw, u)
    y = jax.lax.conv_general_dilated(
        u, w_hwio, window_strides=(1, 1), padding='SAME',
        dimension_numbers=('NHWC', 'HWIO', 'NHWC')) + bias
    y = (y - run_mean) * gamma / jnp.sqrt(run_var + eps) + beta
    y = jnp.maximum(y, 0.0)
    return jnp.transpose(y, (0, 3, 1, 2))


if __name__ == "__main__":
    N, Cin, Cout, H, W = 2, 4, 8, 16, 16

    key = jax.random.PRNGKey(0)
    kx, kw, kb, kg, kbe, km, kv = jax.random.split(key, 7)

    x = jax.random.normal(kx, (N, Cin, H, W), dtype=jnp.float32)

    # Conv2d(in_ch=4, out_ch=8, kernel_size=3) weights in HWIO layout.
    w_hwio = 0.1 * jax.random.normal(kw, (3, 3, Cin, Cout), dtype=jnp.float32)
    bias = 0.1 * jax.random.normal(kb, (Cout,), dtype=jnp.float32)

    # BatchNorm2d(out_ch) parameters (deterministic, eval-mode stats).
    gamma = 1.0 + 0.1 * jax.random.normal(kg, (Cout,), dtype=jnp.float32)
    beta = 0.1 * jax.random.normal(kbe, (Cout,), dtype=jnp.float32)
    run_mean = 0.1 * jax.random.normal(km, (Cout,), dtype=jnp.float32)
    run_var = jax.random.uniform(kv, (Cout,), minval=0.5, maxval=1.5,
                                 dtype=jnp.float32)

    out = upsample_layer_forward(x, w_hwio, bias, gamma, beta, run_mean, run_var)
    out = jax.block_until_ready(out)

    ref = reference_forward(x, w_hwio, bias, gamma, beta, run_mean, run_var)
    ref = jax.block_until_ready(ref)

    assert out.shape == (N, Cout, 2 * H, 2 * W), out.shape
    np.testing.assert_allclose(np.asarray(out), np.asarray(ref),
                               rtol=1e-2, atol=1e-2)
    print("KERNEL_OK")
</pallas_src>

<mosaic_0001>
module attributes {stable_mosaic.version = 11 : i64} {
  func.func @kernel(%arg0: i32, %arg1: memref<1x4x256xf32, #tpu.memory_space<vmem>>, %arg2: memref<256x1152xf32, #tpu.memory_space<vmem>>, %arg3: memref<9x8x4xf32, #tpu.memory_space<vmem>>, %arg4: memref<2x1024xf32, #tpu.memory_space<vmem>>, %arg5: memref<8x1xf32, #tpu.memory_space<vmem>>, %arg6: memref<8x1xf32, #tpu.memory_space<vmem>>, %arg7: memref<1x8x1024xf32, #tpu.memory_space<vmem>>) attributes {dimension_semantics = [#tpu.dimension_semantics<parallel>], iteration_bounds = array<i64: 2>, scalar_prefetch = 0 : i64, scratch_operands = 0 : i64, tpu.core_type = #tpu.core_type<tc>, window_params = [{transform_indices = @transform_0, window_bounds = array<i64: 1, 4, 256>}, {pipeline_mode = #tpu.pipeline_mode<synchronous>, transform_indices = @transform_1, window_bounds = array<i64: 256, 1152>}, {pipeline_mode = #tpu.pipeline_mode<synchronous>, transform_indices = @transform_2, window_bounds = array<i64: 9, 8, 4>}, {pipeline_mode = #tpu.pipeline_mode<synchronous>, transform_indices = @transform_3, window_bounds = array<i64: 2, 1024>}, {pipeline_mode = #tpu.pipeline_mode<synchronous>, transform_indices = @transform_4, window_bounds = array<i64: 8, 1>}, {pipeline_mode = #tpu.pipeline_mode<synchronous>, transform_indices = @transform_5, window_bounds = array<i64: 8, 1>}, {transform_indices = @transform_6, window_bounds = array<i64: 1, 8, 1024>}]} {
    %c0 = arith.constant 0 : index
    %c0_0 = arith.constant 0 : index
    %c0_1 = arith.constant 0 : index
    %0 = vector.load %arg1[%c0, %c0_0, %c0_1] : memref<1x4x256xf32, #tpu.memory_space<vmem>>, vector<1x4x256xf32>
    %1 = vector.shape_cast %0 : vector<1x4x256xf32> to vector<4x256xf32>
    %c0_2 = arith.constant 0 : index
    %c0_3 = arith.constant 0 : index
    %2 = vector.load %arg2[%c0_2, %c0_3] : memref<256x1152xf32, #tpu.memory_space<vmem>>, vector<256x1152xf32>
    %cst = arith.constant dense<0.000000e+00> : vector<4x1152xf32>
    %3 = tpu.matmul %1, %2, %cst {dimension_numbers = #tpu.dot_dimension_numbers<[1], [0], [0], [1], [0, 0, 1, 1], [], []>} : vector<4x256xf32>, vector<256x1152xf32>, vector<4x1152xf32> -> vector<4x1152xf32>
    %cst_4 = arith.constant 0.000000e+00 : f32
    %4 = vector.broadcast %cst_4 : f32 to vector<8x1024xf32>
    %5 = vector.extract_strided_slice %3 {offsets = [0, 0], sizes = [4, 1024], strides = [1, 1]} : vector<4x1152xf32> to vector<4x1024xf32>
    %c0_5 = arith.constant 0 : index
    %c0_6 = arith.constant 0 : index
    %6 = vector.load %arg4[%c0_5, %c0_6] : memref<2x1024xf32, #tpu.memory_space<vmem>>, vector<1x1024xf32>
    %7 = vector.broadcast %6 : vector<1x1024xf32> to vector<4x1024xf32>
    %8 = arith.mulf %5, %7 : vector<4x1024xf32>
    %c0_7 = arith.constant 0 : index
    %c0_8 = arith.constant 0 : index
    %c0_9 = arith.constant 0 : index
    %9 = vector.load %arg3[%c0_7, %c0_8, %c0_9] : memref<9x8x4xf32, #tpu.memory_space<vmem>>, vector<1x8x4xf32>
    %10 = vector.shape_cast %9 : vector<1x8x4xf32> to vector<8x4xf32>
    %cst_10 = arith.constant dense<0.000000e+00> : vector<8x1024xf32>
    %11 = tpu.matmul %10, %8, %cst_10 {dimension_numbers = #tpu.dot_dimension_numbers<[1], [0], [0], [1], [0, 0, 1, 1], [], []>} : vector<8x4xf32>, vector<4x1024xf32>, vector<8x1024xf32> -> vector<8x1024xf32>
    %12 = arith.addf %4, %11 : vector<8x1024xf32>
    %13 = vector.extract_strided_slice %3 {offsets = [0, 1], sizes = [4, 1024], strides = [1, 1]} : vector<4x1152xf32> to vector<4x1024xf32>
    %c1 = arith.constant 1 : index
    %c0_11 = arith.constant 0 : index
    %c0_12 = arith.constant 0 : index
    %14 = vector.load %arg3[%c1, %c0_11, %c0_12] : memref<9x8x4xf32, #tpu.memory_space<vmem>>, vector<1x8x4xf32>
    %15 = vector.shape_cast %14 : vector<1x8x4xf32> to vector<8x4xf32>
    %cst_13 = arith.constant dense<0.000000e+00> : vector<8x1024xf32>
    %16 = tpu.matmul %15, %13, %cst_13 {dimension_numbers = #tpu.dot_dimension_numbers<[1], [0], [0], [1], [0, 0, 1, 1], [], []>} : vector<8x4xf32>, vector<4x1024xf32>, vector<8x1024xf32> -> vector<8x1024xf32>
    %17 = arith.addf %12, %16 : vector<8x1024xf32>
    %18 = vector.extract_strided_slice %3 {offsets = [0, 2], sizes = [4, 1024], strides = [1, 1]} : vector<4x1152xf32> to vector<4x1024xf32>
    %c1_14 = arith.constant 1 : index
    %c0_15 = arith.constant 0 : index
    %19 = vector.load %arg4[%c1_14, %c0_15] : memref<2x1024xf32, #tpu.memory_space<vmem>>, vector<1x1024xf32>
    %20 = vector.broadcast %19 : vector<1x1024xf32> to vector<4x1024xf32>
    %21 = arith.mulf %18, %20 : vector<4x1024xf32>
    %c2 = arith.constant 2 : index
    %c0_16 = arith.constant 0 : index
    %c0_17 = arith.constant 0 : index
    %22 = vector.load %arg3[%c2, %c0_16, %c0_17] : memref<9x8x4xf32, #tpu.memory_space<vmem>>, vector<1x8x4xf32>
    %23 = vector.shape_cast %22 : vector<1x8x4xf32> to vector<8x4xf32>
    %cst_18 = arith.constant dense<0.000000e+00> : vector<8x1024xf32>
    %24 = tpu.matmul %23, %21, %cst_18 {dimension_numbers = #tpu.dot_dimension_numbers<[1], [0], [0], [1], [0, 0, 1, 1], [], []>} : vector<8x4xf32>, vector<4x1024xf32>, vector<8x1024xf32> -> vector<8x1024xf32>
    %25 = arith.addf %17, %24 : vector<8x1024xf32>
    %26 = vector.extract_strided_slice %3 {offsets = [0, 32], sizes = [4, 1024], strides = [1, 1]} : vector<4x1152xf32> to vector<4x1024xf32>
    %c0_19 = arith.constant 0 : index
    %c0_20 = arith.constant 0 : index
    %27 = vector.load %arg4[%c0_19, %c0_20] : memref<2x1024xf32, #tpu.memory_space<vmem>>, vector<1x1024xf32>
    %28 = vector.broadcast %27 : vector<1x1024xf32> to vector<4x1024xf32>
    %29 = arith.mulf %26, %28 : vector<4x1024xf32>
    %c3 = arith.constant 3 : index
    %c0_21 = arith.constant 0 : index
    %c0_22 = arith.constant 0 : index
    %30 = vector.load %arg3[%c3, %c0_21, %c0_22] : memref<9x8x4xf32, #tpu.memory_space<vmem>>, vector<1x8x4xf32>
    %31 = vector.shape_cast %30 : vector<1x8x4xf32> to vector<8x4xf32>
    %cst_23 = arith.constant dense<0.000000e+00> : vector<8x1024xf32>
    %32 = tpu.matmul %31, %29, %cst_23 {dimension_numbers = #tpu.dot_dimension_numbers<[1], [0], [0], [1], [0, 0, 1, 1], [], []>} : vector<8x4xf32>, vector<4x1024xf32>, vector<8x1024xf32> -> vector<8x1024xf32>
    %33 = arith.addf %25, %32 : vector<8x1024xf32>
    %34 = vector.extract_strided_slice %3 {offsets = [0, 33], sizes = [4, 1024], strides = [1, 1]} : vector<4x1152xf32> to vector<4x1024xf32>
    %c4 = arith.constant 4 : index
    %c0_24 = arith.constant 0 : index
    %c0_25 = arith.constant 0 : index
    %35 = vector.load %arg3[%c4, %c0_24, %c0_25] : memref<9x8x4xf32, #tpu.memory_space<vmem>>, vector<1x8x4xf32>
    %36 = vector.shape_cast %35 : vector<1x8x4xf32> to vector<8x4xf32>
    %cst_26 = arith.constant dense<0.000000e+00> : vector<8x1024xf32>
    %37 = tpu.matmul %36, %34, %cst_26 {dimension_numbers = #tpu.dot_dimension_numbers<[1], [0], [0], [1], [0, 0, 1, 1], [], []>} : vector<8x4xf32>, vector<4x1024xf32>, vector<8x1024xf32> -> vector<8x1024xf32>
    %38 = arith.addf %33, %37 : vector<8x1024xf32>
    %39 = vector.extract_strided_slice %3 {offsets = [0, 34], sizes = [4, 1024], strides = [1, 1]} : vector<4x1152xf32> to vector<4x1024xf32>
    %c1_27 = arith.constant 1 : index
    %c0_28 = arith.constant 0 : index
    %40 = vector.load %arg4[%c1_27, %c0_28] : memref<2x1024xf32, #tpu.memory_space<vmem>>, vector<1x1024xf32>
    %41 = vector.broadcast %40 : vector<1x1024xf32> to vector<4x1024xf32>
    %42 = arith.mulf %39, %41 : vector<4x1024xf32>
    %c5 = arith.constant 5 : index
    %c0_29 = arith.constant 0 : index
    %c0_30 = arith.constant 0 : index
    %43 = vector.load %arg3[%c5, %c0_29, %c0_30] : memref<9x8x4xf32, #tpu.memory_space<vmem>>, vector<1x8x4xf32>
    %44 = vector.shape_cast %43 : vector<1x8x4xf32> to vector<8x4xf32>
    %cst_31 = arith.constant dense<0.000000e+00> : vector<8x1024xf32>
    %45 = tpu.matmul %44, %42, %cst_31 {dimension_numbers = #tpu.dot_dimension_numbers<[1], [0], [0], [1], [0, 0, 1, 1], [], []>} : vector<8x4xf32>, vector<4x1024xf32>, vector<8x1024xf32> -> vector<8x1024xf32>
    %46 = arith.addf %38, %45 : vector<8x1024xf32>
    %47 = vector.extract_strided_slice %3 {offsets = [0, 64], sizes = [4, 1024], strides = [1, 1]} : vector<4x1152xf32> to vector<4x1024xf32>
    %c0_32 = arith.constant 0 : index
    %c0_33 = arith.constant 0 : index
    %48 = vector.load %arg4[%c0_32, %c0_33] : memref<2x1024xf32, #tpu.memory_space<vmem>>, vector<1x1024xf32>
    %49 = vector.broadcast %48 : vector<1x1024xf32> to vector<4x1024xf32>
    %50 = arith.mulf %47, %49 : vector<4x1024xf32>
    %c6 = arith.constant 6 : index
    %c0_34 = arith.constant 0 : index
    %c0_35 = arith.constant 0 : index
    %51 = vector.load %arg3[%c6, %c0_34, %c0_35] : memref<9x8x4xf32, #tpu.memory_space<vmem>>, vector<1x8x4xf32>
    %52 = vector.shape_cast %51 : vector<1x8x4xf32> to vector<8x4xf32>
    %cst_36 = arith.constant dense<0.000000e+00> : vector<8x1024xf32>
    %53 = tpu.matmul %52, %50, %cst_36 {dimension_numbers = #tpu.dot_dimension_numbers<[1], [0], [0], [1], [0, 0, 1, 1], [], []>} : vector<8x4xf32>, vector<4x1024xf32>, vector<8x1024xf32> -> vector<8x1024xf32>
    %54 = arith.addf %46, %53 : vector<8x1024xf32>
    %55 = vector.extract_strided_slice %3 {offsets = [0, 65], sizes = [4, 1024], strides = [1, 1]} : vector<4x1152xf32> to vector<4x1024xf32>
    %c7 = arith.constant 7 : index
    %c0_37 = arith.constant 0 : index
    %c0_38 = arith.constant 0 : index
    %56 = vector.load %arg3[%c7, %c0_37, %c0_38] : memref<9x8x4xf32, #tpu.memory_space<vmem>>, vector<1x8x4xf32>
    %57 = vector.shape_cast %56 : vector<1x8x4xf32> to vector<8x4xf32>
    %cst_39 = arith.constant dense<0.000000e+00> : vector<8x1024xf32>
    %58 = tpu.matmul %57, %55, %cst_39 {dimension_numbers = #tpu.dot_dimension_numbers<[1], [0], [0], [1], [0, 0, 1, 1], [], []>} : vector<8x4xf32>, vector<4x1024xf32>, vector<8x1024xf32> -> vector<8x1024xf32>
    %59 = arith.addf %54, %58 : vector<8x1024xf32>
    %60 = vector.extract_strided_slice %3 {offsets = [0, 66], sizes = [4, 1024], strides = [1, 1]} : vector<4x1152xf32> to vector<4x1024xf32>
    %c1_40 = arith.constant 1 : index
    %c0_41 = arith.constant 0 : index
    %61 = vector.load %arg4[%c1_40, %c0_41] : memref<2x1024xf32, #tpu.memory_space<vmem>>, vector<1x1024xf32>
    %62 = vector.broadcast %61 : vector<1x1024xf32> to vector<4x1024xf32>
    %63 = arith.mulf %60, %62 : vector<4x1024xf32>
    %c8 = arith.constant 8 : index
    %c0_42 = arith.constant 0 : index
    %c0_43 = arith.constant 0 : index
    %64 = vector.load %arg3[%c8, %c0_42, %c0_43] : memref<9x8x4xf32, #tpu.memory_space<vmem>>, vector<1x8x4xf32>
    %65 = vector.shape_cast %64 : vector<1x8x4xf32> to vector<8x4xf32>
    %cst_44 = arith.constant dense<0.000000e+00> : vector<8x1024xf32>
    %66 = tpu.matmul %65, %63, %cst_44 {dimension_numbers = #tpu.dot_dimension_numbers<[1], [0], [0], [1], [0, 0, 1, 1], [], []>} : vector<8x4xf32>, vector<4x1024xf32>, vector<8x1024xf32> -> vector<8x1024xf32>
    %67 = arith.addf %59, %66 : vector<8x1024xf32>
    %c0_45 = arith.constant 0 : index
    %c0_46 = arith.constant 0 : index
    %68 = vector.load %arg5[%c0_45, %c0_46] : memref<8x1xf32, #tpu.memory_space<vmem>>, vector<8x1xf32>
    %69 = vector.broadcast %68 : vector<8x1xf32> to vector<8x1024xf32>
    %70 = arith.mulf %67, %69 : vector<8x1024xf32>
    %c0_47 = arith.constant 0 : index
    %c0_48 = arith.constant 0 : index
    %71 = vector.load %arg6[%c0_47, %c0_48] : memref<8x1xf32, #tpu.memory_space<vmem>>, vector<8x1xf32>
    %72 = vector.broadcast %71 : vector<8x1xf32> to vector<8x1024xf32>
    %73 = arith.addf %70, %72 : vector<8x1024xf32>
    %cst_49 = arith.constant 0.000000e+00 : f32
    %74 = vector.broadcast %cst_49 : f32 to vector<8x1024xf32>
    %75 = arith.maximumf %73, %74 : vector<8x1024xf32>
    %c0_50 = arith.constant 0 : index
    %c0_51 = arith.constant 0 : index
    %c0_52 = arith.constant 0 : index
    %76 = vector.load %arg7[%c0_50, %c0_51, %c0_52] : memref<1x8x1024xf32, #tpu.memory_space<vmem>>, vector<1x8x1024xf32>
    %77 = vector.shape_cast %76 : vector<1x8x1024xf32> to vector<8x1024xf32>
    %78 = vector.shape_cast %75 : vector<8x1024xf32> to vector<1x8x1024xf32>
    tpu.vector_store %arg7[%c0_50, %c0_51, %c0_52], %78 {strides = array<i32>} : memref<1x8x1024xf32, #tpu.memory_space<vmem>>, vector<1x8x1024xf32>,
    return
  }
  func.func @transform_0(%arg0: i32) -> (i32, i32, i32) {
    %c0_i32 = arith.constant 0 : i32
    %c0_i32_0 = arith.constant 0 : i32
    %c0_i32_1 = arith.constant 0 : i32
    return %arg0, %c0_i32, %c0_i32_0 : i32, i32, i32
  }
  func.func @transform_1(%arg0: i32) -> (i32, i32) {
    %c0_i32 = arith.constant 0 : i32
    %c0_i32_0 = arith.constant 0 : i32
    %c0_i32_1 = arith.constant 0 : i32
    return %c0_i32, %c0_i32_0 : i32, i32
  }
  func.func @transform_2(%arg0: i32) -> (i32, i32, i32) {
    %c0_i32 = arith.constant 0 : i32
    %c0_i32_0 = arith.constant 0 : i32
    %c0_i32_1 = arith.constant 0 : i32
    %c0_i32_2 = arith.constant 0 : i32
    return %c0_i32, %c0_i32_0, %c0_i32_1 : i32, i32, i32
  }
  func.func @transform_3(%arg0: i32) -> (i32, i32) {
    %c0_i32 = arith.constant 0 : i32
    %c0_i32_0 = arith.constant 0 : i32
    %c0_i32_1 = arith.constant 0 : i32
    return %c0_i32, %c0_i32_0 : i32, i32
  }
  func.func @transform_4(%arg0: i32) -> (i32, i32) {
    %c0_i32 = arith.constant 0 : i32
    %c0_i32_0 = arith.constant 0 : i32
    %c0_i32_1 = arith.constant 0 : i32
    return %c0_i32, %c0_i32_0 : i32, i32
  }
  func.func @transform_5(%arg0: i32) -> (i32, i32) {
    %c0_i32 = arith.constant 0 : i32
    %c0_i32_0 = arith.constant 0 : i32
    %c0_i32_1 = arith.constant 0 : i32
    return %c0_i32, %c0_i32_0 : i32, i32
  }
  func.func @transform_6(%arg0: i32) -> (i32, i32, i32) {
    %c0_i32 = arith.constant 0 : i32
    %c0_i32_0 = arith.constant 0 : i32
    %c0_i32_1 = arith.constant 0 : i32
    return %arg0, %c0_i32, %c0_i32_0 : i32, i32, i32
  }
}

</mosaic_0001>

<llo_original>
// kernel: tpu_custom_call.1
$region0: #{tpu_custom_call.1}
  #allocation0 [shape = 'u32[]', space=smem, size = 0x4, offset = 0x4, fixed_abs, tag = 'smem constant byte address 0x4 - core index']
  #allocation1 [shape = 'u32[144,128]{1,0:T(1,128)}', space=vmem, size = 0x12000, scoped, tag = 'internal scratch']
  %s0 = inlined_call_operand.hbm [shape: f32[2,4,256], index: 0, kind: input, shape index: {}]
  %s1 = inlined_call_operand.hbm [shape: f32[256,1152], index: 1, kind: input, shape index: {}]
  %s2 = inlined_call_operand.vmem [shape: f32[9,8,4], index: 2, kind: input, shape index: {}]
  %s3 = inlined_call_operand.hbm [shape: f32[2,1024], index: 3, kind: input, shape index: {}]
  %s4 = inlined_call_operand.vmem [shape: f32[8,1], index: 4, kind: input, shape index: {}]
  %s5 = inlined_call_operand.vmem [shape: f32[8,1], index: 5, kind: input, shape index: {}]
  %s6 = inlined_call_operand.hbm [shape: f32[2,8,1024], index: 6, kind: output, shape index: {}]
  %s7 = sld [smem:[#allocation0]]
  $region69: #{tpu_custom_call.1} parent=0
    _
  %s9 = ssub.s32 1, %s7
  %s10 = scalar_select 0, %s9, %s7
  $region1: #{tpu_custom_call.1} parent=0
    #allocation2 [shape = 'u8[8192]{0}', space=vmem, size = 0x2000, scoped, tag = 'input window, operand 0']
    #allocation3 [shape = 's32[2]{0}', space=sflag, size = 0x8, scoped, tag = 'scoped memory for tpu_custom_call.1']
    #allocation4 [shape = 's32[2]{0}', space=sflag, size = 0x8, scoped, tag = 'scoped memory for tpu_custom_call.1']
    #allocation5 [shape = 'u8[1179648]{0}', space=vmem, size = 0x120000, scoped, tag = 'input window, operand 1, single buffered']
    #allocation6 [shape = 's32[1]{0}', space=sflag, size = 0x4, scoped, tag = 'scoped memory for tpu_custom_call.1']
    #allocation7 [shape = 'u8[8192]{0}', space=vmem, size = 0x2000, scoped, tag = 'input window, operand 3, single buffered']
    #allocation8 [shape = 'u8[65536]{0}', space=vmem, size = 0x10000, scoped, tag = 'output window, operand 0']
    %11 = vsyncpa [#allocation3], 0
    %s12 = scalar_lea.sflag [#allocation3], 1
    %13 = vsyncpa %s12, 0
    %14 = vsyncpa [#allocation6], 0
    %15 = vsyncpa [#allocation4], 0
    %s16 = scalar_lea.sflag [#allocation4], 1
    %17 = vsyncpa %s16, 0
    loop: start=0, step=1, limit=4
    $region2: #{tpu_custom_call.1} parent=1 // loop_pre_header
      _
    $region3: #{tpu_custom_call.1} parent=1 // loop_header
      %s19 = sphi 0, %s23
      %p20 = scmp.ge.s32.totalorder %s19, 4
      %s29 = sphi 0, %s31
      %s32 = sphi 0, %s29
      %s33 = sphi 0, %s32
      %s49 = sphi 0, %s33
      %s53 = sphi 0, %s53
      %s55 = sphi 0, %s53
      %s56 = sphi 0, %s55
      %s70 = sphi 0, %s56
      %s74 = sphi 0, %s74
      %s76 = sphi 0, %s74
      %s77 = sphi 0, %s76
      %s91 = sphi 0, %s77
      %s95 = sphi 0, %s95
      %s97 = sphi 0, %s95
      %s98 = sphi 0, %s97
      %s112 = sphi 0, %s98
      %s116 = sphi 0, %s116
      %s118 = sphi 0, %s116
      %s119 = sphi 0, %s118
      %s133 = sphi 0, %s119
      %s137 = sphi 0, %s137
      %s139 = sphi 0, %s137
      %s140 = sphi 0, %s139
      %s154 = sphi 0, %s140
      %s160 = sphi 0, %s162
      %s163 = sphi 0, %s160
      %s164 = sphi 0, %s163
      %s180 = sphi 0, %s164
    $region4: #{tpu_custom_call.1} parent=1 // loop_header_branch
      %22 = sbr.rel (%p20) target = $region8
    $region5: #{tpu_custom_call.1} parent=1 // loop_body
      %s24 = ssub.s32 %s19, 1
      %s25 = ssub.s32 %s19, 2
      %s26 = sadd.s32 %s19, 1
      %s27 = ssub.s32 %s19, %s26
      %p28 = scmp.eq.s32.totalorder %s27, 0
      %s30 = sadd.s32 %s29, 1
      %s31 = scalar_select %p28, %s29, %s30
      %p34 = pneg %p28
      %p35 = scmp.eq.s32.totalorder %s19, 1
      %p36 = por %p34, %p35
      %p37 = scmp.ne.s32.totalorder %s29, %s32
      %p38 = scmp.eq.s32.totalorder %s19, 0
      %p39 = por %p37, %p38
      %p40 = scmp.ne.s32.totalorder %s29, %s32
      %p41 = scmp.eq.s32.totalorder %s24, 1
      %p42 = por %p40, %p41
      %p43 = scmp.ne.s32.totalorder %s32, %s33
      %p44 = scmp.eq.s32.totalorder %s24, 0
      %p45 = por %p43, %p44
      %p46 = scmp.ne.s32.totalorder %s32, %s33
      %p47 = scmp.eq.s32.totalorder %s25, 1
      %p48 = por %p46, %p47
      %p50 = scmp.ne.s32.totalorder %s33, %s49
      %p51 = scmp.eq.s32.totalorder %s25, 0
      %p52 = por %p50, %p51
      %s54 = sadd.s32 %s53, 1
      %p57 = scmp.eq.s32.totalorder %s19, 1
      %p58 = scmp.ne.s32.totalorder %s53, %s55
      %p59 = scmp.eq.s32.totalorder %s19, 0
      %p60 = por %p58, %p59
      %p61 = scmp.ne.s32.totalorder %s53, %s55
      %p62 = scmp.eq.s32.totalorder %s24, 1
      %p63 = por %p61, %p62
      %p64 = scmp.ne.s32.totalorder %s55, %s56
      %p65 = scmp.eq.s32.totalorder %s24, 0
      %p66 = por %p64, %p65
      %p67 = scmp.ne.s32.totalorder %s55, %s56
      %p68 = scmp.eq.s32.totalorder %s25, 1
      %p69 = por %p67, %p68
      %p71 = scmp.ne.s32.totalorder %s56, %s70
      %p72 = scmp.eq.s32.totalorder %s25, 0
      %p73 = por %p71, %p72
      %s75 = sadd.s32 %s74, 1
      %p78 = scmp.eq.s32.totalorder %s19, 1
      %p79 = scmp.ne.s32.totalorder %s74, %s76
      %p80 = scmp.eq.s32.totalorder %s19, 0
      %p81 = por %p79, %p80
      %p82 = scmp.ne.s32.totalorder %s74, %s76
      %p83 = scmp.eq.s32.totalorder %s24, 1
      %p84 = por %p82, %p83
      %p85 = scmp.ne.s32.totalorder %s76, %s77
      %p86 = scmp.eq.s32.totalorder %s24, 0
      %p87 = por %p85, %p86
      %p88 = scmp.ne.s32.totalorder %s76, %s77
      %p89 = scmp.eq.s32.totalorder %s25, 1
      %p90 = por %p88, %p89
      %p92 = scmp.ne.s32.totalorder %s77, %s91
      %p93 = scmp.eq.s32.totalorder %s25, 0
      %p94 = por %p92, %p93
      %s96 = sadd.s32 %s95, 1
      %p99 = scmp.eq.s32.totalorder %s19, 1
      %p100 = scmp.ne.s32.totalorder %s95, %s97
      %p101 = scmp.eq.s32.totalorder %s19, 0
      %p102 = por %p100, %p101
      %p103 = scmp.ne.s32.totalorder %s95, %s97
      %p104 = scmp.eq.s32.totalorder %s24, 1
      %p105 = por %p103, %p104
      %p106 = scmp.ne.s32.totalorder %s97, %s98
      %p107 = scmp.eq.s32.totalorder %s24, 0
      %p108 = por %p106, %p107
      %p109 = scmp.ne.s32.totalorder %s97, %s98
      %p110 = scmp.eq.s32.totalorder %s25, 1
      %p111 = por %p109, %p110
      %p113 = scmp.ne.s32.totalorder %s98, %s112
      %p114 = scmp.eq.s32.totalorder %s25, 0
      %p115 = por %p113, %p114
      %s117 = sadd.s32 %s116, 1
      %p120 = scmp.eq.s32.totalorder %s19, 1
      %p121 = scmp.ne.s32.totalorder %s116, %s118
      %p122 = scmp.eq.s32.totalorder %s19, 0
      %p123 = por %p121, %p122
      %p124 = scmp.ne.s32.totalorder %s116, %s118
      %p125 = scmp.eq.s32.totalorder %s24, 1
      %p126 = por %p124, %p125
      %p127 = scmp.ne.s32.totalorder %s118, %s119
      %p128 = scmp.eq.s32.totalorder %s24, 0
      %p129 = por %p127, %p128
      %p130 = scmp.ne.s32.totalorder %s118, %s119
      %p131 = scmp.eq.s32.totalorder %s25, 1
      %p132 = por %p130, %p131
      %p134 = scmp.ne.s32.totalorder %s119, %s133
      %p135 = scmp.eq.s32.totalorder %s25, 0
      %p136 = por %p134, %p135
      %s138 = sadd.s32 %s137, 1
      %p141 = scmp.eq.s32.totalorder %s19, 1
      %p142 = scmp.ne.s32.totalorder %s137, %s139
      %p143 = scmp.eq.s32.totalorder %s19, 0
      %p144 = por %p142, %p143
      %p145 = scmp.ne.s32.totalorder %s137, %s139
      %p146 = scmp.eq.s32.totalorder %s24, 1
      %p147 = por %p145, %p146
      %p148 = scmp.ne.s32.totalorder %s139, %s140
      %p149 = scmp.eq.s32.totalorder %s24, 0
      %p150 = por %p148, %p149
      %p151 = scmp.ne.s32.totalorder %s139, %s140
      %p152 = scmp.eq.s32.totalorder %s25, 1
      %p153 = por %p151, %p152
      %p155 = scmp.ne.s32.totalorder %s140, %s154
      %p156 = scmp.eq.s32.totalorder %s25, 0
      %p157 = por %p155, %p156
      %s158 = ssub.s32 %s19, %s26
      %p159 = scmp.eq.s32.totalorder %s158, 0
      %s161 = sadd.s32 %s160, 1
      %s162 = scalar_select %p159, %s160, %s161
      %p165 = pneg %p159
      %p166 = scmp.eq.s32.totalorder %s19, 1
      %p167 = por %p165, %p166
      %p168 = scmp.ne.s32.totalorder %s160, %s163
      %p169 = scmp.eq.s32.totalorder %s19, 0
      %p170 = por %p168, %p169
      %p171 = scmp.ne.s32.totalorder %s160, %s163
      %p172 = scmp.eq.s32.totalorder %s24, 1
      %p173 = por %p171, %p172
      %p174 = scmp.ne.s32.totalorder %s163, %s164
      %p175 = scmp.eq.s32.totalorder %s24, 0
      %p176 = por %p174, %p175
      %p177 = scmp.ne.s32.totalorder %s163, %s164
      %p178 = scmp.eq.s32.totalorder %s25, 1
      %p179 = por %p177, %p178
      %p181 = scmp.ne.s32.totalorder %s164, %s180
      %p182 = scmp.eq.s32.totalorder %s25, 0
      %p183 = por %p181, %p182
      %p184 = scmp.le.s32.totalorder 1, %s19
      %p185 = scmp.lt.s32.totalorder %s19, 3
      %p186 = pnand %p184, %p185
      %p187 = pneg %p186
      // Predicated region
      $region9: #{tpu_custom_call.1} parent=5 // pred_check
        _
      $region10: #{tpu_custom_call.1} parent=5 // pred_check_branch
        %189 = sbr.rel (%p186) target = $region12
      $region11: #{tpu_custom_call.1} parent=5 // pred_region
        %s190 = ssub.s32 %s19, 1
        // Predicated region
        $region13: #{tpu_custom_call.1} parent=11 // pred_check
          %p191 = pneg %p66
        $region14: #{tpu_custom_call.1} parent=11 // pred_check_branch
          %193 = sbr.rel (%p191) target = $region16
        $region15: #{tpu_custom_call.1} parent=11 // pred_region
          %s195 = ssub.s32 36864, 36864
          %196 = vsyncadd [#allocation6], %s195
          %s197 = sshll.u32 [#allocation5], 4
          %s198 = int_to_ptr.vmem [resolvable:$true] %s197
          %203 = dma.hbm_to_vmem [thread:$0]  %s1, 36864, %s198, [#allocation6], 1152, 1152, 72
        $region16: #{tpu_custom_call.1} parent=11 // pred_fallthru
          _
        // Predicated region
        $region17: #{tpu_custom_call.1} parent=11 // pred_check
          %p204 = pneg %p87
        $region18: #{tpu_custom_call.1} parent=11 // pred_check_branch
          %206 = sbr.rel (%p204) target = $region20
        $region19: #{tpu_custom_call.1} parent=11 // pred_region
          _
        $region20: #{tpu_custom_call.1} parent=11 // pred_fallthru
          _
        // Predicated region
        $region21: #{tpu_custom_call.1} parent=11 // pred_check
          %p207 = pneg %p108
        $region22: #{tpu_custom_call.1} parent=11 // pred_check_branch
          %209 = sbr.rel (%p207) target = $region24
        $region23: #{tpu_custom_call.1} parent=11 // pred_region
          %s211 = ssub.s32 256, 256
          %212 = vsyncadd [#allocation6], %s211
          %s214 = sshll.u32 [#allocation7], 4
          %s215 = int_to_ptr.vmem [resolvable:$true] %s214
          %217 = dma.hbm_to_vmem [thread:$0]  %s3, 256, %s215, [#allocation6]
        $region24: #{tpu_custom_call.1} parent=11 // pred_fallthru
          _
        // Predicated region
        $region25: #{tpu_custom_call.1} parent=11 // pred_check
          %p218 = pneg %p129
        $region26: #{tpu_custom_call.1} parent=11 // pred_check_branch
          %220 = sbr.rel (%p218) target = $region28
        $region27: #{tpu_custom_call.1} parent=11 // pred_region
          _
        $region28: #{tpu_custom_call.1} parent=11 // pred_fallthru
          _
        // Predicated region
        $region29: #{tpu_custom_call.1} parent=11 // pred_check
          %p221 = pneg %p150
        $region30: #{tpu_custom_call.1} parent=11 // pred_check_branch
          %223 = sbr.rel (%p221) target = $region32
        $region31: #{tpu_custom_call.1} parent=11 // pred_region
          _
        $region32: #{tpu_custom_call.1} parent=11 // pred_fallthru
          _
      $region12: #{tpu_custom_call.1} parent=5 // pred_fallthru
        _
      %p224 = scmp.lt.s32.totalorder %s19, 2
      // Predicated region
      $region33: #{tpu_custom_call.1} parent=5 // pred_check
        %p225 = pneg %p224
      $region34: #{tpu_custom_call.1} parent=5 // pred_check_branch
        %227 = sbr.rel (%p225) target = $region36
      $region35: #{tpu_custom_call.1} parent=5 // pred_region
        // Predicated region
        $region37: #{tpu_custom_call.1} parent=35 // pred_check
          %p228 = pneg %p39
        $region38: #{tpu_custom_call.1} parent=35 // pred_check_branch
          %230 = sbr.rel (%p228) target = $region40
        $region39: #{tpu_custom_call.1} parent=35 // pred_region
          %s231 = sand.u32 %s29, 1
          %s232 = scalar_lea.sflag [#allocation3], %s231
          %s233 = sand.u32 %s29, 1
          %s234 = smul.addr %s233, 8
          %s235 = scalar_lea.vmem [#allocation2], %s234
          %s237 = ssub.s32 128, 128
          %238 = vsyncadd %s232, %s237
          %s239 = smul.addr %s19, 2
          %s240 = smul.addr %s239, 64
          %s241 = scalar_lea.hbm %s0, %s240
          %s243 = sshll.u32 %s235, 4
          %s244 = int_to_ptr.vmem [resolvable:$true] %s243
          %246 = dma.hbm_to_vmem [thread:$0]  %s241, 128, %s244, %s232
        $region40: #{tpu_custom_call.1} parent=35 // pred_fallthru
          _
      $region36: #{tpu_custom_call.1} parent=5 // pred_fallthru
        _
      %p247 = scmp.le.s32.totalorder 1, %s19
      %p248 = scmp.lt.s32.totalorder %s19, 3
      %p249 = pnand %p247, %p248
      %p250 = pneg %p249
      // Predicated region
      $region41: #{tpu_custom_call.1} parent=5 // pred_check
        _
      $region42: #{tpu_custom_call.1} parent=5 // pred_check_branch
        %252 = sbr.rel (%p249) target = $region44
      $region43: #{tpu_custom_call.1} parent=5 // pred_region
        %s253 = ssub.s32 %s19, 1
        %s254 = sand.u32 %s32, 1
        %s255 = scalar_lea.sflag [#allocation3], %s254
        %s256 = sand.u32 %s32, 1
        %s257 = smul.addr %s256, 8
        %s258 = scalar_lea.vmem [#allocation2], %s257
        // Predicated region
        $region45: #{tpu_custom_call.1} parent=43 // pred_check
          %p259 = pneg %p45
        $region46: #{tpu_custom_call.1} parent=43 // pred_check_branch
          %261 = sbr.rel (%p259) target = $region48
        $region47: #{tpu_custom_call.1} parent=43 // pred_region
          %262 = dma.done %s255, 128
        $region48: #{tpu_custom_call.1} parent=43 // pred_fallthru
          _
        // Predicated region
        $region49: #{tpu_custom_call.1} parent=43 // pred_check
          %p263 = pneg %p66
        $region50: #{tpu_custom_call.1} parent=43 // pred_check_branch
          %265 = sbr.rel (%p263) target = $region52
        $region51: #{tpu_custom_call.1} parent=43 // pred_region
          %266 = dma.done [#allocation6], 36864
        $region52: #{tpu_custom_call.1} parent=43 // pred_fallthru
          _
        // Predicated region
        $region53: #{tpu_custom_call.1} parent=43 // pred_check
          %p267 = pneg %p108
        $region54: #{tpu_custom_call.1} parent=43 // pred_check_branch
          %269 = sbr.rel (%p267) target = $region56
        $region55: #{tpu_custom_call.1} parent=43 // pred_region
          %270 = dma.done [#allocation6], 256
        $region56: #{tpu_custom_call.1} parent=43 // pred_fallthru
          _
        %s271 = sand.u32 %s32, 1
        %s272 = scalar_lea.sflag [#allocation3], %s271
        %s273 = sand.u32 %s32, 1
        %s274 = smul.addr %s273, 8
        %s275 = scalar_lea.vmem [#allocation2], %s274
        %p276 = pneg %p45
        %p277 = pneg %p42
        %p278 = pneg %p66
        %p279 = pneg %p63
        %p280 = pneg %p87
        %p281 = pneg %p84
        %p282 = pneg %p108
        %p283 = pneg %p105
        %p284 = pneg %p129
        %p285 = pneg %p126
        %p286 = pneg %p150
        %p287 = pneg %p147
        %p288 = pneg %p176
        %p289 = pneg %p173
        %s290 = sand.u32 %s163, 1
        %s291 = scalar_lea.sflag [#allocation4], %s290
        %s292 = sand.u32 %s163, 1
        %s293 = smul.addr %s292, 64
        %s294 = scalar_lea.vmem [#allocation8], %s293
        %v295 = vld [vmem:[%s258] sm:$0xff]
        %v296 = vld [vmem:[#allocation5] sm:$0xff]
        %v297 = vld [vmem:[#allocation5 + $0x8] sm:$0xff]
        %v298 = vld [vmem:[#allocation5 + $0x10] sm:$0xff]
        %v299 = vld [vmem:[#allocation5 + $0x18] sm:$0xff]
        %v300 = vld [vmem:[#allocation5 + $0x20] sm:$0xff]
        %v301 = vld [vmem:[#allocation5 + $0x28] sm:$0xff]
        %v302 = vld [vmem:[#allocation5 + $0x30] sm:$0xff]
        %v303 = vld [vmem:[#allocation5 + $0x38] sm:$0xff]
        %v304 = vld [vmem:[#allocation5 + $0x40] sm:$0xff]
        %v305 = vld [vmem:[#allocation5 + $0x48] sm:$0xff]
        %v306 = vld [vmem:[#allocation5 + $0x50] sm:$0xff]
        %v307 = vld [vmem:[#allocation5 + $0x58] sm:$0xff]
        %v308 = vld [vmem:[#allocation5 + $0x60] sm:$0xff]
        %v309 = vld [vmem:[#allocation5 + $0x68] sm:$0xff]
        %v310 = vld [vmem:[#allocation5 + $0x70] sm:$0xff]
        %v311 = vld [vmem:[#allocation5 + $0x78] sm:$0xff]
        %v312 = vld [vmem:[#allocation5 + $0x80] sm:$0xff]
        %v313 = vld [vmem:[#allocation5 + $0x88] sm:$0xff]
        %v314 = vld [vmem:[#allocation5 + $0x90] sm:$0xff]
        %v315 = vld [vmem:[#allocation5 + $0x98] sm:$0xff]
        %v316 = vld [vmem:[#allocation5 + $0xa0] sm:$0xff]
        %v317 = vld [vmem:[#allocation5 + $0xa8] sm:$0xff]
        %v318 = vld [vmem:[#allocation5 + $0xb0] sm:$0xff]
        %v319 = vld [vmem:[#allocation5 + $0xb8] sm:$0xff]
        %v320 = vld [vmem:[#allocation5 + $0xc0] sm:$0xff]
        %v321 = vld [vmem:[#allocation5 + $0xc8] sm:$0xff]
        %v322 = vld [vmem:[#allocation5 + $0xd0] sm:$0xff]
        %v323 = vld [vmem:[#allocation5 + $0xd8] sm:$0xff]
        %v324 = vld [vmem:[#allocation5 + $0xe0] sm:$0xff]
        %v325 = vld [vmem:[#allocation5 + $0xe8] sm:$0xff]
        %v326 = vld [vmem:[#allocation5 + $0xf0] sm:$0xff]
        %v327 = vld [vmem:[#allocation5 + $0xf8] sm:$0xff]
        %v328 = vld [vmem:[#allocation5 + $0x100] sm:$0xff]
        %v329 = vld [vmem:[#allocation5 + $0x108] sm:$0xff]
        %v330 = vld [vmem:[#allocation5 + $0x110] sm:$0xff]
        %v331 = vld [vmem:[#allocation5 + $0x118] sm:$0xff]
        %v332 = vld [vmem:[#allocation5 + $0x120] sm:$0xff]
        %v333 = vld [vmem:[#allocation5 + $0x128] sm:$0xff]
        %v334 = vld [vmem:[#allocation5 + $0x130] sm:$0xff]
        %v335 = vld [vmem:[#allocation5 + $0x138] sm:$0xff]
        %v336 = vld [vmem:[#allocation5 + $0x140] sm:$0xff]
        %v337 = vld [vmem:[#allocation5 + $0x148] sm:$0xff]
        %v338 = vld [vmem:[#allocation5 + $0x150] sm:$0xff]
        %v339 = vld [vmem:[#allocation5 + $0x158] sm:$0xff]
        %v340 = vld [vmem:[#allocation5 + $0x160] sm:$0xff]
        %v341 = vld [vmem:[#allocation5 + $0x168] sm:$0xff]
        %v342 = vld [vmem:[#allocation5 + $0x170] sm:$0xff]
        %v343 = vld [vmem:[#allocation5 + $0x178] sm:$0xff]
        %v344 = vld [vmem:[#allocation5 + $0x180] sm:$0xff]
        %v345 = vld [vmem:[#allocation5 + $0x188] sm:$0xff]
        %v346 = vld [vmem:[#allocation5 + $0x190] sm:$0xff]
        %v347 = vld [vmem:[#allocation5 + $0x198] sm:$0xff]
        %v348 = vld [vmem:[#allocation5 + $0x1a0] sm:$0xff]
        %v349 = vld [vmem:[#allocation5 + $0x1a8] sm:$0xff]
        %v350 = vld [vmem:[#allocation5 + $0x1b0] sm:$0xff]
        %v351 = vld [vmem:[#allocation5 + $0x1b8] sm:$0xff]
        %v352 = vld [vmem:[#allocation5 + $0x1c0] sm:$0xff]
        %v353 = vld [vmem:[#allocation5 + $0x1c8] sm:$0xff]
        %v354 = vld [vmem:[#allocation5 + $0x1d0] sm:$0xff]
        %v355 = vld [vmem:[#allocation5 + $0x1d8] sm:$0xff]
        %v356 = vld [vmem:[#allocation5 + $0x1e0] sm:$0xff]
        %v357 = vld [vmem:[#allocation5 + $0x1e8] sm:$0xff]
        %v358 = vld [vmem:[#allocation5 + $0x1f0] sm:$0xff]
        %v359 = vld [vmem:[#allocation5 + $0x1f8] sm:$0xff]
        %v360 = vld [vmem:[#allocation5 + $0x200] sm:$0xff]
        %v361 = vld [vmem:[#allocation5 + $0x208] sm:$0xff]
        %v362 = vld [vmem:[#allocation5 + $0x210] sm:$0xff]
        %v363 = vld [vmem:[#allocation5 + $0x218] sm:$0xff]
        %v364 = vld [vmem:[#allocation5 + $0x220] sm:$0xff]
        %v365 = vld [vmem:[#allocation5 + $0x228] sm:$0xff]
        %v366 = vld [vmem:[#allocation5 + $0x230] sm:$0xff]
        %v367 = vld [vmem:[#allocation5 + $0x238] sm:$0xff]
        %v368 = vld [vmem:[#allocation5 + $0x240] sm:$0xff]
        %v369 = vld [vmem:[#allocation5 + $0x248] sm:$0xff]
        %v370 = vld [vmem:[#allocation5 + $0x250] sm:$0xff]
        %v371 = vld [vmem:[#allocation5 + $0x258] sm:$0xff]
        %v372 = vld [vmem:[#allocation5 + $0x260] sm:$0xff]
        %v373 = vld [vmem:[#allocation5 + $0x268] sm:$0xff]
        %v374 = vld [vmem:[#allocation5 + $0x270] sm:$0xff]
        %v375 = vld [vmem:[#allocation5 + $0x278] sm:$0xff]
        %v376 = vld [vmem:[#allocation5 + $0x280] sm:$0xff]
        %v377 = vld [vmem:[#allocation5 + $0x288] sm:$0xff]
        %v378 = vld [vmem:[#allocation5 + $0x290] sm:$0xff]
        %v379 = vld [vmem:[#allocation5 + $0x298] sm:$0xff]
        %v380 = vld [vmem:[#allocation5 + $0x2a0] sm:$0xff]
        %v381 = vld [vmem:[#allocation5 + $0x2a8] sm:$0xff]
        %v382 = vld [vmem:[#allocation5 + $0x2b0] sm:$0xff]
        %v383 = vld [vmem:[#allocation5 + $0x2b8] sm:$0xff]
        %v384 = vld [vmem:[#allocation5 + $0x2c0] sm:$0xff]
        %v385 = vld [vmem:[#allocation5 + $0x2c8] sm:$0xff]
        %v386 = vld [vmem:[#allocation5 + $0x2d0] sm:$0xff]
        %v387 = vld [vmem:[#allocation5 + $0x2d8] sm:$0xff]
        %v388 = vld [vmem:[#allocation5 + $0x2e0] sm:$0xff]
        %v389 = vld [vmem:[#allocation5 + $0x2e8] sm:$0xff]
        %v390 = vld [vmem:[#allocation5 + $0x2f0] sm:$0xff]
        %v391 = vld [vmem:[#allocation5 + $0x2f8] sm:$0xff]
        %v392 = vld [vmem:[#allocation5 + $0x300] sm:$0xff]
        %v393 = vld [vmem:[#allocation5 + $0x308] sm:$0xff]
        %v394 = vld [vmem:[#allocation5 + $0x310] sm:$0xff]
        %v395 = vld [vmem:[#allocation5 + $0x318] sm:$0xff]
        %v396 = vld [vmem:[#allocation5 + $0x320] sm:$0xff]
        %v397 = vld [vmem:[#allocation5 + $0x328] sm:$0xff]
        %v398 = vld [vmem:[#allocation5 + $0x330] sm:$0xff]
        %v399 = vld [vmem:[#allocation5 + $0x338] sm:$0xff]
        %v400 = vld [vmem:[#allocation5 + $0x340] sm:$0xff]
        %v401 = vld [vmem:[#allocation5 + $0x348] sm:$0xff]
        %v402 = vld [vmem:[#allocation5 + $0x350] sm:$0xff]
        %v403 = vld [vmem:[#allocation5 + $0x358] sm:$0xff]
        %v404 = vld [vmem:[#allocation5 + $0x360] sm:$0xff]
        %v405 = vld [vmem:[#allocation5 + $0x368] sm:$0xff]
        %v406 = vld [vmem:[#allocation5 + $0x370] sm:$0xff]
        %v407 = vld [vmem:[#allocation5 + $0x378] sm:$0xff]
        %v408 = vld [vmem:[#allocation5 + $0x380] sm:$0xff]
        %v409 = vld [vmem:[#allocation5 + $0x388] sm:$0xff]
        %v410 = vld [vmem:[#allocation5 + $0x390] sm:$0xff]
        %v411 = vld [vmem:[#allocation5 + $0x398] sm:$0xff]
        %v412 = vld [vmem:[#allocation5 + $0x3a0] sm:$0xff]
        %v413 = vld [vmem:[#allocation5 + $0x3a8] sm:$0xff]
        %v414 = vld [vmem:[#allocation5 + $0x3b0] sm:$0xff]
        %v415 = vld [vmem:[#allocation5 + $0x3b8] sm:$0xff]
        %v416 = vld [vmem:[#allocation5 + $0x3c0] sm:$0xff]
        %v417 = vld [vmem:[#allocation5 + $0x3c8] sm:$0xff]
        %v418 = vld [vmem:[#allocation5 + $0x3d0] sm:$0xff]
        %v419 = vld [vmem:[#allocation5 + $0x3d8] sm:$0xff]
        %v420 = vld [vmem:[#allocation5 + $0x3e0] sm:$0xff]
        %v421 = vld [vmem:[#allocation5 + $0x3e8] sm:$0xff]
        %v422 = vld [vmem:[#allocation5 + $0x3f0] sm:$0xff]
        %v423 = vld [vmem:[#allocation5 + $0x3f8] sm:$0xff]
        %v424 = vld [vmem:[#allocation5 + $0x400] sm:$0xff]
        %v425 = vld [vmem:[#allocation5 + $0x408] sm:$0xff]
        %v426 = vld [vmem:[#allocation5 + $0x410] sm:$0xff]
        %v427 = vld [vmem:[#allocation5 + $0x418] sm:$0xff]
        %v428 = vld [vmem:[#allocation5 + $0x420] sm:$0xff]
        %v429 = vld [vmem:[#allocation5 + $0x428] sm:$0xff]
        %v430 = vld [vmem:[#allocation5 + $0x430] sm:$0xff]
        %v431 = vld [vmem:[#allocation5 + $0x438] sm:$0xff]
        %v432 = vld [vmem:[#allocation5 + $0x440] sm:$0xff]
        %v433 = vld [vmem:[#allocation5 + $0x448] sm:$0xff]
        %v434 = vld [vmem:[#allocation5 + $0x450] sm:$0xff]
        %v435 = vld [vmem:[#allocation5 + $0x458] sm:$0xff]
        %v436 = vld [vmem:[#allocation5 + $0x460] sm:$0xff]
        %v437 = vld [vmem:[#allocation5 + $0x468] sm:$0xff]
        %v438 = vld [vmem:[#allocation5 + $0x470] sm:$0xff]
        %v439 = vld [vmem:[#allocation5 + $0x478] sm:$0xff]
        %v440 = vld [vmem:[#allocation5 + $0x480] sm:$0xff]
        %v441 = vld [vmem:[#allocation5 + $0x488] sm:$0xff]
        %v442 = vld [vmem:[#allocation5 + $0x490] sm:$0xff]
        %v443 = vld [vmem:[#allocation5 + $0x498] sm:$0xff]
        %v444 = vld [vmem:[#allocation5 + $0x4a0] sm:$0xff]
        %v445 = vld [vmem:[#allocation5 + $0x4a8] sm:$0xff]
        %v446 = vld [vmem:[#allocation5 + $0x4b0] sm:$0xff]
        %v447 = vld [vmem:[#allocation5 + $0x4b8] sm:$0xff]
        %v448 = vld [vmem:[#allocation5 + $0x4c0] sm:$0xff]
        %v449 = vld [vmem:[#allocation5 + $0x4c8] sm:$0xff]
        %v450 = vld [vmem:[#allocation5 + $0x4d0] sm:$0xff]
        %v451 = vld [vmem:[#allocation5 + $0x4d8] sm:$0xff]
        %v452 = vld [vmem:[#allocation5 + $0x4e0] sm:$0xff]
        %v453 = vld [vmem:[#allocation5 + $0x4e8] sm:$0xff]
        %v454 = vld [vmem:[#allocation5 + $0x4f0] sm:$0xff]
        %v455 = vld [vmem:[#allocation5 + $0x4f8] sm:$0xff]
        %v456 = vld [vmem:[#allocation5 + $0x500] sm:$0xff]
        %v457 = vld [vmem:[#allocation5 + $0x508] sm:$0xff]
        %v458 = vld [vmem:[#allocation5 + $0x510] sm:$0xff]
        %v459 = vld [vmem:[#allocation5 + $0x518] sm:$0xff]
        %v460 = vld [vmem:[#allocation5 + $0x520] sm:$0xff]
        %v461 = vld [vmem:[#allocation5 + $0x528] sm:$0xff]
        %v462 = vld [vmem:[#allocation5 + $0x530] sm:$0xff]
        %v463 = vld [vmem:[#allocation5 + $0x538] sm:$0xff]
        %v464 = vld [vmem:[#allocation5 + $0x540] sm:$0xff]
        %v465 = vld [vmem:[#allocation5 + $0x548] sm:$0xff]
        %v466 = vld [vmem:[#allocation5 + $0x550] sm:$0xff]
        %v467 = vld [vmem:[#allocation5 + $0x558] sm:$0xff]
        %v468 = vld [vmem:[#allocation5 + $0x560] sm:$0xff]
        %v469 = vld [vmem:[#allocation5 + $0x568] sm:$0xff]
        %v470 = vld [vmem:[#allocation5 + $0x570] sm:$0xff]
        %v471 = vld [vmem:[#allocation5 + $0x578] sm:$0xff]
        %v472 = vld [vmem:[#allocation5 + $0x580] sm:$0xff]
        %v473 = vld [vmem:[#allocation5 + $0x588] sm:$0xff]
        %v474 = vld [vmem:[#allocation5 + $0x590] sm:$0xff]
        %v475 = vld [vmem:[#allocation5 + $0x598] sm:$0xff]
        %v476 = vld [vmem:[#allocation5 + $0x5a0] sm:$0xff]
        %v477 = vld [vmem:[#allocation5 + $0x5a8] sm:$0xff]
        %v478 = vld [vmem:[#allocation5 + $0x5b0] sm:$0xff]
        %v479 = vld [vmem:[#allocation5 + $0x5b8] sm:$0xff]
        %v480 = vld [vmem:[#allocation5 + $0x5c0] sm:$0xff]
        %v481 = vld [vmem:[#allocation5 + $0x5c8] sm:$0xff]
        %v482 = vld [vmem:[#allocation5 + $0x5d0] sm:$0xff]
        %v483 = vld [vmem:[#allocation5 + $0x5d8] sm:$0xff]
        %v484 = vld [vmem:[#allocation5 + $0x5e0] sm:$0xff]
        %v485 = vld [vmem:[#allocation5 + $0x5e8] sm:$0xff]
        %v486 = vld [vmem:[#allocation5 + $0x5f0] sm:$0xff]
        %v487 = vld [vmem:[#allocation5 + $0x5f8] sm:$0xff]
        %v488 = vld [vmem:[#allocation5 + $0x600] sm:$0xff]
        %v489 = vld [vmem:[#allocation5 + $0x608] sm:$0xff]
        %v490 = vld [vmem:[#allocation5 + $0x610] sm:$0xff]
        %v491 = vld [vmem:[#allocation5 + $0x618] sm:$0xff]
        %v492 = vld [vmem:[#allocation5 + $0x620] sm:$0xff]
        %v493 = vld [vmem:[#allocation5 + $0x628] sm:$0xff]
        %v494 = vld [vmem:[#allocation5 + $0x630] sm:$0xff]
        %v495 = vld [vmem:[#allocation5 + $0x638] sm:$0xff]
        %v496 = vld [vmem:[#allocation5 + $0x640] sm:$0xff]
        %v497 = vld [vmem:[#allocation5 + $0x648] sm:$0xff]
        %v498 = vld [vmem:[#allocation5 + $0x650] sm:$0xff]
        %v499 = vld [vmem:[#allocation5 + $0x658] sm:$0xff]
        %v500 = vld [vmem:[#allocation5 + $0x660] sm:$0xff]
        %v501 = vld [vmem:[#allocation5 + $0x668] sm:$0xff]
        %v502 = vld [vmem:[#allocation5 + $0x670] sm:$0xff]
        %v503 = vld [vmem:[#allocation5 + $0x678] sm:$0xff]
        %v504 = vld [vmem:[#allocation5 + $0x680] sm:$0xff]
        %v505 = vld [vmem:[#allocation5 + $0x688] sm:$0xff]
        %v506 = vld [vmem:[#allocation5 + $0x690] sm:$0xff]
        %v507 = vld [vmem:[#allocation5 + $0x698] sm:$0xff]
        %v508 = vld [vmem:[#allocation5 + $0x6a0] sm:$0xff]
        %v509 = vld [vmem:[#allocation5 + $0x6a8] sm:$0xff]
        %v510 = vld [vmem:[#allocation5 + $0x6b0] sm:$0xff]
        %v511 = vld [vmem:[#allocation5 + $0x6b8] sm:$0xff]
        %v512 = vld [vmem:[#allocation5 + $0x6c0] sm:$0xff]
        %v513 = vld [vmem:[#allocation5 + $0x6c8] sm:$0xff]
        %v514 = vld [vmem:[#allocation5 + $0x6d0] sm:$0xff]
        %v515 = vld [vmem:[#allocation5 + $0x6d8] sm:$0xff]
        %v516 = vld [vmem:[#allocation5 + $0x6e0] sm:$0xff]
        %v517 = vld [vmem:[#allocation5 + $0x6e8] sm:$0xff]
        %v518 = vld [vmem:[#allocation5 + $0x6f0] sm:$0xff]
        %v519 = vld [vmem:[#allocation5 + $0x6f8] sm:$0xff]
        %v520 = vld [vmem:[#allocation5 + $0x700] sm:$0xff]
        %v521 = vld [vmem:[#allocation5 + $0x708] sm:$0xff]
        %v522 = vld [vmem:[#allocation5 + $0x710] sm:$0xff]
        %v523 = vld [vmem:[#allocation5 + $0x718] sm:$0xff]
        %v524 = vld [vmem:[#allocation5 + $0x720] sm:$0xff]
        %v525 = vld [vmem:[#allocation5 + $0x728] sm:$0xff]
        %v526 = vld [vmem:[#allocation5 + $0x730] sm:$0xff]
        %v527 = vld [vmem:[#allocation5 + $0x738] sm:$0xff]
        %v528 = vld [vmem:[#allocation5 + $0x740] sm:$0xff]
        %v529 = vld [vmem:[#allocation5 + $0x748] sm:$0xff]
        %v530 = vld [vmem:[#allocation5 + $0x750] sm:$0xff]
        %v531 = vld [vmem:[#allocation5 + $0x758] sm:$0xff]
        %v532 = vld [vmem:[#allocation5 + $0x760] sm:$0xff]
        %v533 = vld [vmem:[#allocation5 + $0x768] sm:$0xff]
        %v534 = vld [vmem:[#allocation5 + $0x770] sm:$0xff]
        %v535 = vld [vmem:[#allocation5 + $0x778] sm:$0xff]
        %v536 = vld [vmem:[#allocation5 + $0x780] sm:$0xff]
        %v537 = vld [vmem:[#allocation5 + $0x788] sm:$0xff]
        %v538 = vld [vmem:[#allocation5 + $0x790] sm:$0xff]
        %v539 = vld [vmem:[#allocation5 + $0x798] sm:$0xff]
        %v540 = vld [vmem:[#allocation5 + $0x7a0] sm:$0xff]
        %v541 = vld [vmem:[#allocation5 + $0x7a8] sm:$0xff]
        %v542 = vld [vmem:[#allocation5 + $0x7b0] sm:$0xff]
        %v543 = vld [vmem:[#allocation5 + $0x7b8] sm:$0xff]
        %v544 = vld [vmem:[#allocation5 + $0x7c0] sm:$0xff]
        %v545 = vld [vmem:[#allocation5 + $0x7c8] sm:$0xff]
        %v546 = vld [vmem:[#allocation5 + $0x7d0] sm:$0xff]
        %v547 = vld [vmem:[#allocation5 + $0x7d8] sm:$0xff]
        %v548 = vld [vmem:[#allocation5 + $0x7e0] sm:$0xff]
        %v549 = vld [vmem:[#allocation5 + $0x7e8] sm:$0xff]
        %v550 = vld [vmem:[#allocation5 + $0x7f0] sm:$0xff]
        %v551 = vld [vmem:[#allocation5 + $0x7f8] sm:$0xff]
        %v552 = vld [vmem:[#allocation5 + $0x800] sm:$0xff]
        %v553 = vld [vmem:[#allocation5 + $0x808] sm:$0xff]
        %v554 = vld [vmem:[#allocation5 + $0x810] sm:$0xff]
        %v555 = vld [vmem:[#allocation5 + $0x818] sm:$0xff]
        %v556 = vld [vmem:[#allocation5 + $0x820] sm:$0xff]
        %v557 = vld [vmem:[#allocation5 + $0x828] sm:$0xff]
        %v558 = vld [vmem:[#allocation5 + $0x830] sm:$0xff]
        %v559 = vld [vmem:[#allocation5 + $0x838] sm:$0xff]
        %v560 = vld [vmem:[#allocation5 + $0x840] sm:$0xff]
        %v561 = vld [vmem:[#allocation5 + $0x848] sm:$0xff]
        %v562 = vld [vmem:[#allocation5 + $0x850] sm:$0xff]
        %v563 = vld [vmem:[#allocation5 + $0x858] sm:$0xff]
        %v564 = vld [vmem:[#allocation5 + $0x860] sm:$0xff]
        %v565 = vld [vmem:[#allocation5 + $0x868] sm:$0xff]
        %v566 = vld [vmem:[#allocation5 + $0x870] sm:$0xff]
        %v567 = vld [vmem:[#allocation5 + $0x878] sm:$0xff]
        %v568 = vld [vmem:[#allocation5 + $0x880] sm:$0xff]
        %v569 = vld [vmem:[#allocation5 + $0x888] sm:$0xff]
        %v570 = vld [vmem:[#allocation5 + $0x890] sm:$0xff]
        %v571 = vld [vmem:[#allocation5 + $0x898] sm:$0xff]
        %v572 = vld [vmem:[#allocation5 + $0x8a0] sm:$0xff]
        %v573 = vld [vmem:[#allocation5 + $0x8a8] sm:$0xff]
        %v574 = vld [vmem:[#allocation5 + $0x8b0] sm:$0xff]
        %v575 = vld [vmem:[#allocation5 + $0x8b8] sm:$0xff]
        %v576 = vld [vmem:[#allocation5 + $0x8c0] sm:$0xff]
        %v577 = vld [vmem:[#allocation5 + $0x8c8] sm:$0xff]
        %v578 = vld [vmem:[#allocation5 + $0x8d0] sm:$0xff]
        %v579 = vld [vmem:[#allocation5 + $0x8d8] sm:$0xff]
        %v580 = vld [vmem:[#allocation5 + $0x8e0] sm:$0xff]
        %v581 = vld [vmem:[#allocation5 + $0x8e8] sm:$0xff]
        %v582 = vld [vmem:[#allocation5 + $0x8f0] sm:$0xff]
        %v583 = vld [vmem:[#allocation5 + $0x8f8] sm:$0xff]
        %v585 = vcombine.high %v295, %v295
        %587 = vmatprep.subr.mxu0 %v432
        %588 = vmatpush1.msra.mxu0 %v431
        %589 = vmatprep.subr.mxu0 %v423
        %590 = vmatpush1.msra.mxu0 %v422
        %591 = vmatprep.subr.mxu0 %v414
        %592 = vmatpush1.msra.mxu0 %v413
        %593 = vmatprep.subr.mxu0 %v405
        %594 = vmatpush1.msra.mxu0 %v404
        %595 = vmatprep.subr.mxu0 %v396
        %596 = vmatpush1.msra.mxu0 %v395
        %597 = vmatprep.subr.mxu0 %v387
        %598 = vmatpush1.msra.mxu0 %v386
        %599 = vmatprep.subr.mxu0 %v378
        %600 = vmatpush1.msra.mxu0 %v377
        %601 = vmatprep.subr.mxu0 %v369
        %602 = vmatpush1.msra.mxu0 %v368
        %603 = vmatprep.subr.mxu0 %v360
        %604 = vmatpush1.msra.mxu0 %v359
        %605 = vmatprep.subr.mxu0 %v351
        %606 = vmatpush1.msra.mxu0 %v350
        %607 = vmatprep.subr.mxu0 %v342
        %608 = vmatpush1.msra.mxu0 %v341
        %609 = vmatprep.subr.mxu0 %v333
        %610 = vmatpush1.msra.mxu0 %v332
        %611 = vmatprep.subr.mxu0 %v324
        %612 = vmatpush1.msra.mxu0 %v323
        %613 = vmatprep.subr.mxu0 %v315
        %614 = vmatpush1.msra.mxu0 %v314
        %615 = vmatprep.subr.mxu0 %v306
        %616 = vmatpush1.msra.mxu0 %v305
        %617 = vmatprep.subr.mxu0 %v297
        %618 = vmatpush1.msra.mxu0 %v296
        %619 = vmatprep.subr.mxu0 %v576
        %620 = vmatpush2.msra.mxu0 %v575
        %621 = vmatprep.subr.mxu0 %v567
        %622 = vmatpush2.msra.mxu0 %v566
        %623 = vmatprep.subr.mxu0 %v558
        %624 = vmatpush2.msra.mxu0 %v557
        %625 = vmatprep.subr.mxu0 %v549
        %626 = vmatpush2.msra.mxu0 %v548
        %627 = vmatprep.subr.mxu0 %v540
        %628 = vmatpush2.msra.mxu0 %v539
        %629 = vmatprep.subr.mxu0 %v531
        %630 = vmatpush2.msra.mxu0 %v530
        %631 = vmatprep.subr.mxu0 %v522
        %632 = vmatpush2.msra.mxu0 %v521
        %633 = vmatprep.subr.mxu0 %v513
        %634 = vmatpush2.msra.mxu0 %v512
        %635 = vmatprep.subr.mxu0 %v504
        %636 = vmatpush2.msra.mxu0 %v503
        %637 = vmatprep.subr.mxu0 %v495
        %638 = vmatpush2.msra.mxu0 %v494
        %639 = vmatprep.subr.mxu0 %v486
        %640 = vmatpush2.msra.mxu0 %v485
        %641 = vmatprep.subr.mxu0 %v477
        %642 = vmatpush2.msra.mxu0 %v476
        %643 = vmatprep.subr.mxu0 %v468
        %644 = vmatpush2.msra.mxu0 %v467
        %645 = vmatprep.subr.mxu0 %v459
        %646 = vmatpush2.msra.mxu0 %v458
        %647 = vmatprep.subr.mxu0 %v450
        %648 = vmatpush2.msra.mxu0 %v449
        %649 = vmatprep.subr.mxu0 %v441
        %650 = vmatpush2.msra.mxu0 %v440
        %651 = vmatprep.mubr.f32.mxu0 %v585
        %652 = vmatmul.mubr.f32.gmra.mxu0 %v295
        %v653 = vpop.f32.mrf.mxu0
        %v654 = vadd.f32 0.0, %v653
        %v655 = vpop.f32.mrf.mxu0
        %v656 = vadd.f32 0.0, %v655
        %657 = vdwg.mxu0
        %658 = vmatprep.subr.mxu0 %v434
        %659 = vmatpush1.msra.mxu0 %v433
        %660 = vmatprep.subr.mxu0 %v425
        %661 = vmatpush1.msra.mxu0 %v424
        %662 = vmatprep.subr.mxu0 %v416
        %663 = vmatpush1.msra.mxu0 %v415
        %664 = vmatprep.subr.mxu0 %v407
        %665 = vmatpush1.msra.mxu0 %v406
        %666 = vmatprep.subr.mxu0 %v398
        %667 = vmatpush1.msra.mxu0 %v397
        %668 = vmatprep.subr.mxu0 %v389
        %669 = vmatpush1.msra.mxu0 %v388
        %670 = vmatprep.subr.mxu0 %v380
        %671 = vmatpush1.msra.mxu0 %v379
        %672 = vmatprep.subr.mxu0 %v371
        %673 = vmatpush1.msra.mxu0 %v370
        %674 = vmatprep.subr.mxu0 %v362
        %675 = vmatpush1.msra.mxu0 %v361
        %676 = vmatprep.subr.mxu0 %v353
        %677 = vmatpush1.msra.mxu0 %v352
        %678 = vmatprep.subr.mxu0 %v344
        %679 = vmatpush1.msra.mxu0 %v343
        %680 = vmatprep.subr.mxu0 %v335
        %681 = vmatpush1.msra.mxu0 %v334
        %682 = vmatprep.subr.mxu0 %v326
        %683 = vmatpush1.msra.mxu0 %v325
        %684 = vmatprep.subr.mxu0 %v317
        %685 = vmatpush1.msra.mxu0 %v316
        %686 = vmatprep.subr.mxu0 %v308
        %687 = vmatpush1.msra.mxu0 %v307
        %688 = vmatprep.subr.mxu0 %v299
        %689 = vmatpush1.msra.mxu0 %v298
        %690 = vmatprep.subr.mxu0 %v578
        %691 = vmatpush2.msra.mxu0 %v577
        %692 = vmatprep.subr.mxu0 %v569
        %693 = vmatpush2.msra.mxu0 %v568
        %694 = vmatprep.subr.mxu0 %v560
        %695 = vmatpush2.msra.mxu0 %v559
        %696 = vmatprep.subr.mxu0 %v551
        %697 = vmatpush2.msra.mxu0 %v550
        %698 = vmatprep.subr.mxu0 %v542
        %699 = vmatpush2.msra.mxu0 %v541
        %700 = vmatprep.subr.mxu0 %v533
        %701 = vmatpush2.msra.mxu0 %v532
        %702 = vmatprep.subr.mxu0 %v524
        %703 = vmatpush2.msra.mxu0 %v523
        %704 = vmatprep.subr.mxu0 %v515
        %705 = vmatpush2.msra.mxu0 %v514
        %706 = vmatprep.subr.mxu0 %v506
        %707 = vmatpush2.msra.mxu0 %v505
        %708 = vmatprep.subr.mxu0 %v497
        %709 = vmatpush2.msra.mxu0 %v496
        %710 = vmatprep.subr.mxu0 %v488
        %711 = vmatpush2.msra.mxu0 %v487
        %712 = vmatprep.subr.mxu0 %v479
        %713 = vmatpush2.msra.mxu0 %v478
        %714 = vmatprep.subr.mxu0 %v470
        %715 = vmatpush2.msra.mxu0 %v469
        %716 = vmatprep.subr.mxu0 %v461
        %717 = vmatpush2.msra.mxu0 %v460
        %718 = vmatprep.subr.mxu0 %v452
        %719 = vmatpush2.msra.mxu0 %v451
        %720 = vmatprep.subr.mxu0 %v443
        %721 = vmatpush2.msra.mxu0 %v442
        %722 = vmatprep.mubr.f32.mxu0 %v585
        %723 = vmatmul.mubr.f32.gmra.mxu0 %v295
        %v724 = vpop.f32.mrf.mxu0
        %v725 = vadd.f32 0.0, %v724
        %v726 = vpop.f32.mrf.mxu0
        %v727 = vadd.f32 0.0, %v726
        %728 = vdwg.mxu0
        %729 = vmatprep.subr.mxu0 %v436
        %730 = vmatpush1.msra.mxu0 %v435
        %731 = vmatprep.subr.mxu0 %v427
        %732 = vmatpush1.msra.mxu0 %v426
        %733 = vmatprep.subr.mxu0 %v418
        %734 = vmatpush1.msra.mxu0 %v417
        %735 = vmatprep.subr.mxu0 %v409
        %736 = vmatpush1.msra.mxu0 %v408
        %737 = vmatprep.subr.mxu0 %v400
        %738 = vmatpush1.msra.mxu0 %v399
        %739 = vmatprep.subr.mxu0 %v391
        %740 = vmatpush1.msra.mxu0 %v390
        %741 = vmatprep.subr.mxu0 %v382
        %742 = vmatpush1.msra.mxu0 %v381
        %743 = vmatprep.subr.mxu0 %v373
        %744 = vmatpush1.msra.mxu0 %v372
        %745 = vmatprep.subr.mxu0 %v364
        %746 = vmatpush1.msra.mxu0 %v363
        %747 = vmatprep.subr.mxu0 %v355
        %748 = vmatpush1.msra.mxu0 %v354
        %749 = vmatprep.subr.mxu0 %v346
        %750 = vmatpush1.msra.mxu0 %v345
        %751 = vmatprep.subr.mxu0 %v337
        %752 = vmatpush1.msra.mxu0 %v336
        %753 = vmatprep.subr.mxu0 %v328
        %754 = vmatpush1.msra.mxu0 %v327
        %755 = vmatprep.subr.mxu0 %v319
        %756 = vmatpush1.msra.mxu0 %v318
        %757 = vmatprep.subr.mxu0 %v310
        %758 = vmatpush1.msra.mxu0 %v309
        %759 = vmatprep.subr.mxu0 %v301
        %760 = vmatpush1.msra.mxu0 %v300
        %761 = vmatprep.subr.mxu0 %v580
        %762 = vmatpush2.msra.mxu0 %v579
        %763 = vmatprep.subr.mxu0 %v571
        %764 = vmatpush2.msra.mxu0 %v570
        %765 = vmatprep.subr.mxu0 %v562
        %766 = vmatpush2.msra.mxu0 %v561
        %767 = vmatprep.subr.mxu0 %v553
        %768 = vmatpush2.msra.mxu0 %v552
        %769 = vmatprep.subr.mxu0 %v544
        %770 = vmatpush2.msra.mxu0 %v543
        %771 = vmatprep.subr.mxu0 %v535
        %772 = vmatpush2.msra.mxu0 %v534
        %773 = vmatprep.subr.mxu0 %v526
        %774 = vmatpush2.msra.mxu0 %v525
        %775 = vmatprep.subr.mxu0 %v517
        %776 = vmatpush2.msra.mxu0 %v516
        %777 = vmatprep.subr.mxu0 %v508
        %778 = vmatpush2.msra.mxu0 %v507
        %779 = vmatprep.subr.mxu0 %v499
        %780 = vmatpush2.msra.mxu0 %v498
        %781 = vmatprep.subr.mxu0 %v490
        %782 = vmatpush2.msra.mxu0 %v489
        %783 = vmatprep.subr.mxu0 %v481
        %784 = vmatpush2.msra.mxu0 %v480
        %785 = vmatprep.subr.mxu0 %v472
        %786 = vmatpush2.msra.mxu0 %v471
        %787 = vmatprep.subr.mxu0 %v463
        %788 = vmatpush2.msra.mxu0 %v462
        %789 = vmatprep.subr.mxu0 %v454
        %790 = vmatpush2.msra.mxu0 %v453
        %791 = vmatprep.subr.mxu0 %v445
        %792 = vmatpush2.msra.mxu0 %v444
        %793 = vmatprep.mubr.f32.mxu0 %v585
        %794 = vmatmul.mubr.f32.gmra.mxu0 %v295
        %v795 = vpop.f32.mrf.mxu0
        %v796 = vadd.f32 0.0, %v795
        %v797 = vpop.f32.mrf.mxu0
        %v798 = vadd.f32 0.0, %v797
        %799 = vdwg.mxu0
        %800 = vmatprep.subr.mxu0 %v438
        %801 = vmatpush1.msra.mxu0 %v437
        %802 = vmatprep.subr.mxu0 %v429
        %803 = vmatpush1.msra.mxu0 %v428
        %804 = vmatprep.subr.mxu0 %v420
        %805 = vmatpush1.msra.mxu0 %v419
        %806 = vmatprep.subr.mxu0 %v411
        %807 = vmatpush1.msra.mxu0 %v410
        %808 = vmatprep.subr.mxu0 %v402
        %809 = vmatpush1.msra.mxu0 %v401
        %810 = vmatprep.subr.mxu0 %v393
        %811 = vmatpush1.msra.mxu0 %v392
        %812 = vmatprep.subr.mxu0 %v384
        %813 = vmatpush1.msra.mxu0 %v383
        %814 = vmatprep.subr.mxu0 %v375
        %815 = vmatpush1.msra.mxu0 %v374
        %816 = vmatprep.subr.mxu0 %v366
        %817 = vmatpush1.msra.mxu0 %v365
        %818 = vmatprep.subr.mxu0 %v357
        %819 = vmatpush1.msra.mxu0 %v356
        %820 = vmatprep.subr.mxu0 %v348
        %821 = vmatpush1.msra.mxu0 %v347
        %822 = vmatprep.subr.mxu0 %v339
        %823 = vmatpush1.msra.mxu0 %v338
        %824 = vmatprep.subr.mxu0 %v330
        %825 = vmatpush1.msra.mxu0 %v329
        %826 = vmatprep.subr.mxu0 %v321
        %827 = vmatpush1.msra.mxu0 %v320
        %828 = vmatprep.subr.mxu0 %v312
        %829 = vmatpush1.msra.mxu0 %v311
        %830 = vmatprep.subr.mxu0 %v303
        %831 = vmatpush1.msra.mxu0 %v302
        %832 = vmatprep.subr.mxu0 %v582
        %833 = vmatpush2.msra.mxu0 %v581
        %834 = vmatprep.subr.mxu0 %v573
        %835 = vmatpush2.msra.mxu0 %v572
        %836 = vmatprep.subr.mxu0 %v564
        %837 = vmatpush2.msra.mxu0 %v563
        %838 = vmatprep.subr.mxu0 %v555
        %839 = vmatpush2.msra.mxu0 %v554
        %840 = vmatprep.subr.mxu0 %v546
        %841 = vmatpush2.msra.mxu0 %v545
        %842 = vmatprep.subr.mxu0 %v537
        %843 = vmatpush2.msra.mxu0 %v536
        %844 = vmatprep.subr.mxu0 %v528
        %845 = vmatpush2.msra.mxu0 %v527
        %846 = vmatprep.subr.mxu0 %v519
        %847 = vmatpush2.msra.mxu0 %v518
        %848 = vmatprep.subr.mxu0 %v510
        %849 = vmatpush2.msra.mxu0 %v509
        %850 = vmatprep.subr.mxu0 %v501
        %851 = vmatpush2.msra.mxu0 %v500
        %852 = vmatprep.subr.mxu0 %v492
        %853 = vmatpush2.msra.mxu0 %v491
        %854 = vmatprep.subr.mxu0 %v483
        %855 = vmatpush2.msra.mxu0 %v482
        %856 = vmatprep.subr.mxu0 %v474
        %857 = vmatpush2.msra.mxu0 %v473
        %858 = vmatprep.subr.mxu0 %v465
        %859 = vmatpush2.msra.mxu0 %v464
        %860 = vmatprep.subr.mxu0 %v456
        %861 = vmatpush2.msra.mxu0 %v455
        %862 = vmatprep.subr.mxu0 %v447
        %863 = vmatpush2.msra.mxu0 %v446
        %864 = vmatprep.mubr.f32.mxu0 %v585
        %865 = vmatmul.mubr.f32.gmra.mxu0 %v295
        %v866 = vpop.f32.mrf.mxu0
        %v867 = vadd.f32 0.0, %v866
        %v868 = vpop.f32.mrf.mxu0
        %v869 = vadd.f32 0.0, %v868
        %870 = vdwg.mxu0
        %871 = vmatprep.subr.mxu0 0.0
        %872 = vmatpush1.msra.mxu0 %v439
        %873 = vmatprep.subr.mxu0 0.0
        %874 = vmatpush1.msra.mxu0 %v430
        %875 = vmatprep.subr.mxu0 0.0
        %876 = vmatpush1.msra.mxu0 %v421
        %877 = vmatprep.subr.mxu0 0.0
        %878 = vmatpush1.msra.mxu0 %v412
        %879 = vmatprep.subr.mxu0 0.0
        %880 = vmatpush1.msra.mxu0 %v403
        %881 = vmatprep.subr.mxu0 0.0
        %882 = vmatpush1.msra.mxu0 %v394
        %883 = vmatprep.subr.mxu0 0.0
        %884 = vmatpush1.msra.mxu0 %v385
        %885 = vmatprep.subr.mxu0 0.0
        %886 = vmatpush1.msra.mxu0 %v376
        %887 = vmatprep.subr.mxu0 0.0
        %888 = vmatpush1.msra.mxu0 %v367
        %889 = vmatprep.subr.mxu0 0.0
        %890 = vmatpush1.msra.mxu0 %v358
        %891 = vmatprep.subr.mxu0 0.0
        %892 = vmatpush1.msra.mxu0 %v349
        %893 = vmatprep.subr.mxu0 0.0
        %894 = vmatpush1.msra.mxu0 %v340
        %895 = vmatprep.subr.mxu0 0.0
        %896 = vmatpush1.msra.mxu0 %v331
        %897 = vmatprep.subr.mxu0 0.0
        %898 = vmatpush1.msra.mxu0 %v322
        %899 = vmatprep.subr.mxu0 0.0
        %900 = vmatpush1.msra.mxu0 %v313
        %901 = vmatprep.subr.mxu0 0.0
        %902 = vmatpush1.msra.mxu0 %v304
        %903 = vmatprep.subr.mxu0 0.0
        %904 = vmatpush2.msra.mxu0 %v583
        %905 = vmatprep.subr.mxu0 0.0
        %906 = vmatpush2.msra.mxu0 %v574
        %907 = vmatprep.subr.mxu0 0.0
        %908 = vmatpush2.msra.mxu0 %v565
        %909 = vmatprep.subr.mxu0 0.0
        %910 = vmatpush2.msra.mxu0 %v556
        %911 = vmatprep.subr.mxu0 0.0
        %912 = vmatpush2.msra.mxu0 %v547
        %913 = vmatprep.subr.mxu0 0.0
        %914 = vmatpush2.msra.mxu0 %v538
        %915 = vmatprep.subr.mxu0 0.0
        %916 = vmatpush2.msra.mxu0 %v529
        %917 = vmatprep.subr.mxu0 0.0
        %918 = vmatpush2.msra.mxu0 %v520
        %919 = vmatprep.subr.mxu0 0.0
        %920 = vmatpush2.msra.mxu0 %v511
        %921 = vmatprep.subr.mxu0 0.0
        %922 = vmatpush2.msra.mxu0 %v502
        %923 = vmatprep.subr.mxu0 0.0
        %924 = vmatpush2.msra.mxu0 %v493
        %925 = vmatprep.subr.mxu0 0.0
        %926 = vmatpush2.msra.mxu0 %v484
        %927 = vmatprep.subr.mxu0 0.0
        %928 = vmatpush2.msra.mxu0 %v475
        %929 = vmatprep.subr.mxu0 0.0
        %930 = vmatpush2.msra.mxu0 %v466
        %931 = vmatprep.subr.mxu0 0.0
        %932 = vmatpush2.msra.mxu0 %v457
        %933 = vmatprep.subr.mxu0 0.0
        %934 = vmatpush2.msra.mxu0 %v448
        %935 = vmatprep.mubr.f32.mxu0 %v585
        %936 = vmatmul.mubr.f32.gmra.mxu0 %v295
        %v937 = vpop.f32.mrf.mxu0
        %v938 = vadd.f32 0.0, %v937
        %v939 = vpop.f32.mrf.mxu0
        %940 = vdwg.mxu0
        %v941 = vld [vmem:[#allocation7] ss:$2 sm:$0xff]
        %v943 = vlaneseq
        %v944 = vshrl.u32 %v943, 7
        %v945 = vsub.s32 0, %v944
        %v946 = vrot.slane %v941, %v945
        %v947 = vlaneseq
        %v948 = vshrl.u32 %v947, 7
        %v949 = vsub.s32 1, %v948
        %v950 = vrot.slane %v941, %v949
        %v951 = vlaneseq
        %v952 = vshrl.u32 %v951, 7
        %v953 = vsub.s32 2, %v952
        %v954 = vrot.slane %v941, %v953
        %v955 = vlaneseq
        %v956 = vshrl.u32 %v955, 7
        %v957 = vsub.s32 3, %v956
        %v958 = vrot.slane %v941, %v957
        %v959 = vlaneseq
        %v960 = vshrl.u32 %v959, 7
        %v961 = vsub.s32 4, %v960
        %v962 = vrot.slane %v941, %v961
        %v963 = vlaneseq
        %v964 = vshrl.u32 %v963, 7
        %v965 = vsub.s32 5, %v964
        %v966 = vrot.slane %v941, %v965
        %v967 = vlaneseq
        %v968 = vshrl.u32 %v967, 7
        %v969 = vsub.s32 6, %v968
        %v970 = vrot.slane %v941, %v969
        %v971 = vlaneseq
        %v972 = vshrl.u32 %v971, 7
        %v973 = vsub.s32 7, %v972
        %v974 = vrot.slane %v941, %v973
        %v983 = vmul.f32 %v654, %v946
        %v984 = vmul.f32 %v656, %v950
        %v985 = vmul.f32 %v725, %v954
        %v986 = vmul.f32 %v727, %v958
        %v987 = vmul.f32 %v796, %v962
        %v988 = vmul.f32 %v798, %v966
        %v989 = vmul.f32 %v867, %v970
        %v990 = vmul.f32 %v869, %v974
        %v991 = vld [vmem:[%s2] sm:$0xff]
        %s992 = scalar_lea.vmem %s2, 8
        %v993 = vld [vmem:[%s992] sm:$0xff]
        %1003 = vrot.lane.b32.xlu0 %v654, 127
        %v1004 = vpop.permute.xlu0 %1003
        %1005 = vrot.lane.b32.xlu0 %v656, 127
        %v1006 = vpop.permute.xlu0 %1005
        %1007 = vrot.lane.b32.xlu0 %v725, 127
        %v1008 = vpop.permute.xlu0 %1007
        %1009 = vrot.lane.b32.xlu0 %v727, 127
        %v1010 = vpop.permute.xlu0 %1009
        %1011 = vrot.lane.b32.xlu0 %v796, 127
        %v1012 = vpop.permute.xlu0 %1011
        %1013 = vrot.lane.b32.xlu0 %v798, 127
        %v1014 = vpop.permute.xlu0 %1013
        %1015 = vrot.lane.b32.xlu0 %v867, 127
        %v1016 = vpop.permute.xlu0 %1015
        %1017 = vrot.lane.b32.xlu0 %v869, 127
        %v1018 = vpop.permute.xlu0 %1017
        %1019 = vrot.lane.b32.xlu0 %v938, 127
        %v1020 = vpop.permute.xlu0 %1019
        %vm1021 = vcmask 1039360
        %v1022 = vsel %vm1021, %v1004, %v1006
        %v1023 = vsel %vm1021, %v1006, %v1008
        %v1024 = vsel %vm1021, %v1008, %v1010
        %v1025 = vsel %vm1021, %v1010, %v1012
        %v1026 = vsel %vm1021, %v1012, %v1014
        %v1027 = vsel %vm1021, %v1014, %v1016
        %v1028 = vsel %vm1021, %v1016, %v1018
        %v1029 = vsel %vm1021, %v1018, %v1020
        %vm1030 = vcmask 31744
        %v1032 = vsel %vm1030, %v993, 0
        %vm1034 = vcmask 1043456
        %v1035 = vsel %vm1034, %v1022, 0
        %v1037 = vsel %vm1034, %v1023, 0
        %v1039 = vsel %vm1034, %v1024, 0
        %v1041 = vsel %vm1034, %v1025, 0
        %v1043 = vsel %vm1034, %v1026, 0
        %v1045 = vsel %vm1034, %v1027, 0
        %v1047 = vsel %vm1034, %v1028, 0
        %v1049 = vsel %vm1034, %v1029, 0
        %1051 = vmatprep.subr.mxu0 0.0
        %1052 = vmatpush1.msra.mxu0 0.0
        %1053 = vmatprep.subr.mxu0 0.0
        %1054 = vmatpush1.msra.mxu0 0.0
        %1055 = vmatprep.subr.mxu0 0.0
        %1056 = vmatpush1.msra.mxu0 0.0
        %1057 = vmatprep.subr.mxu0 0.0
        %1058 = vmatpush1.msra.mxu0 0.0
        %1059 = vmatprep.subr.mxu0 0.0
        %1060 = vmatpush1.msra.mxu0 0.0
        %1061 = vmatprep.subr.mxu0 0.0
        %1062 = vmatpush1.msra.mxu0 0.0
        %1063 = vmatprep.subr.mxu0 0.0
        %1064 = vmatpush1.msra.mxu0 0.0
        %1065 = vmatprep.subr.mxu0 0.0
        %1066 = vmatpush1.msra.mxu0 0.0
        %1067 = vmatprep.subr.mxu0 0.0
        %1068 = vmatpush1.msra.mxu0 0.0
        %1069 = vmatprep.subr.mxu0 0.0
        %1070 = vmatpush1.msra.mxu0 0.0
        %1071 = vmatprep.subr.mxu0 0.0
        %1072 = vmatpush1.msra.mxu0 0.0
        %1073 = vmatprep.subr.mxu0 0.0
        %1074 = vmatpush1.msra.mxu0 0.0
        %1075 = vmatprep.subr.mxu0 0.0
        %1076 = vmatpush1.msra.mxu0 0.0
        %1077 = vmatprep.subr.mxu0 0.0
        %1078 = vmatpush1.msra.mxu0 0.0
        %1079 = vmatprep.subr.mxu0 0.0
        %1080 = vmatpush1.msra.mxu0 0.0
        %1081 = vmatprep.subr.mxu0 %v1037
        %1082 = vmatpush1.msra.mxu0 %v1035
        %1083 = vmatprep.subr.mxu0 0.0
        %1084 = vmatpush2.msra.mxu0 0.0
        %1085 = vmatprep.subr.mxu0 0.0
        %1086 = vmatpush2.msra.mxu0 0.0
        %1087 = vmatprep.subr.mxu0 0.0
        %1088 = vmatpush2.msra.mxu0 0.0
        %1089 = vmatprep.subr.mxu0 0.0
        %1090 = vmatpush2.msra.mxu0 0.0
        %1091 = vmatprep.subr.mxu0 0.0
        %1092 = vmatpush2.msra.mxu0 0.0
        %1093 = vmatprep.subr.mxu0 0.0
        %1094 = vmatpush2.msra.mxu0 0.0
        %1095 = vmatprep.subr.mxu0 0.0
        %1096 = vmatpush2.msra.mxu0 0.0
        %1097 = vmatprep.subr.mxu0 0.0
        %1098 = vmatpush2.msra.mxu0 0.0
        %1099 = vmatprep.subr.mxu0 0.0
        %1100 = vmatpush2.msra.mxu0 0.0
        %1101 = vmatprep.subr.mxu0 0.0
        %1102 = vmatpush2.msra.mxu0 0.0
        %1103 = vmatprep.subr.mxu0 0.0
        %1104 = vmatpush2.msra.mxu0 0.0
        %1105 = vmatprep.subr.mxu0 0.0
        %1106 = vmatpush2.msra.mxu0 0.0
        %1107 = vmatprep.subr.mxu0 0.0
        %1108 = vmatpush2.msra.mxu0 0.0
        %1109 = vmatprep.subr.mxu0 0.0
        %1110 = vmatpush2.msra.mxu0 0.0
        %1111 = vmatprep.subr.mxu0 0.0
        %1112 = vmatpush2.msra.mxu0 0.0
        %1113 = vmatprep.subr.mxu0 0.0
        %1114 = vmatpush2.msra.mxu0 0.0
        %1115 = vmatprep.mubr.f32.mxu0 0.0
        %1116 = vmatmul.mubr.f32.gmra.mxu0 %v1032
        %v1117 = vpop.f32.mrf.mxu0
        %v1118 = vadd.f32 0.0, %v1117
        %v1119 = vpop.f32.mrf.mxu0
        %v1120 = vadd.f32 0.0, %v1119
        %1121 = vdwg.mxu0
        %1122 = vmatprep.subr.mxu0 0.0
        %1123 = vmatpush1.msra.mxu0 0.0
        %1124 = vmatprep.subr.mxu0 0.0
        %1125 = vmatpush1.msra.mxu0 0.0
        %1126 = vmatprep.subr.mxu0 0.0
        %1127 = vmatpush1.msra.mxu0 0.0
        %1128 = vmatprep.subr.mxu0 0.0
        %1129 = vmatpush1.msra.mxu0 0.0
        %1130 = vmatprep.subr.mxu0 0.0
        %1131 = vmatpush1.msra.mxu0 0.0
        %1132 = vmatprep.subr.mxu0 0.0
        %1133 = vmatpush1.msra.mxu0 0.0
        %1134 = vmatprep.subr.mxu0 0.0
        %1135 = vmatpush1.msra.mxu0 0.0
        %1136 = vmatprep.subr.mxu0 0.0
        %1137 = vmatpush1.msra.mxu0 0.0
        %1138 = vmatprep.subr.mxu0 0.0
        %1139 = vmatpush1.msra.mxu0 0.0
        %1140 = vmatprep.subr.mxu0 0.0
        %1141 = vmatpush1.msra.mxu0 0.0
        %1142 = vmatprep.subr.mxu0 0.0
        %1143 = vmatpush1.msra.mxu0 0.0
        %1144 = vmatprep.subr.mxu0 0.0
        %1145 = vmatpush1.msra.mxu0 0.0
        %1146 = vmatprep.subr.mxu0 0.0
        %1147 = vmatpush1.msra.mxu0 0.0
        %1148 = vmatprep.subr.mxu0 0.0
        %1149 = vmatpush1.msra.mxu0 0.0
        %1150 = vmatprep.subr.mxu0 0.0
        %1151 = vmatpush1.msra.mxu0 0.0
        %1152 = vmatprep.subr.mxu0 %v1041
        %1153 = vmatpush1.msra.mxu0 %v1039
        %1154 = vmatprep.subr.mxu0 0.0
        %1155 = vmatpush2.msra.mxu0 0.0
        %1156 = vmatprep.subr.mxu0 0.0
        %1157 = vmatpush2.msra.mxu0 0.0
        %1158 = vmatprep.subr.mxu0 0.0
        %1159 = vmatpush2.msra.mxu0 0.0
        %1160 = vmatprep.subr.mxu0 0.0
        %1161 = vmatpush2.msra.mxu0 0.0
        %1162 = vmatprep.subr.mxu0 0.0
        %1163 = vmatpush2.msra.mxu0 0.0
        %1164 = vmatprep.subr.mxu0 0.0
        %1165 = vmatpush2.msra.mxu0 0.0
        %1166 = vmatprep.subr.mxu0 0.0
        %1167 = vmatpush2.msra.mxu0 0.0
        %1168 = vmatprep.subr.mxu0 0.0
        %1169 = vmatpush2.msra.mxu0 0.0
        %1170 = vmatprep.subr.mxu0 0.0
        %1171 = vmatpush2.msra.mxu0 0.0
        %1172 = vmatprep.subr.mxu0 0.0
        %1173 = vmatpush2.msra.mxu0 0.0
        %1174 = vmatprep.subr.mxu0 0.0
        %1175 = vmatpush2.msra.mxu0 0.0
        %1176 = vmatprep.subr.mxu0 0.0
        %1177 = vmatpush2.msra.mxu0 0.0
        %1178 = vmatprep.subr.mxu0 0.0
        %1179 = vmatpush2.msra.mxu0 0.0
        %1180 = vmatprep.subr.mxu0 0.0
        %1181 = vmatpush2.msra.mxu0 0.0
        %1182 = vmatprep.subr.mxu0 0.0
        %1183 = vmatpush2.msra.mxu0 0.0
        %1184 = vmatprep.subr.mxu0 0.0
        %1185 = vmatpush2.msra.mxu0 0.0
        %1186 = vmatprep.mubr.f32.mxu0 0.0
        %1187 = vmatmul.mubr.f32.gmra.mxu0 %v1032
        %v1188 = vpop.f32.mrf.mxu0
        %v1189 = vadd.f32 0.0, %v1188
        %v1190 = vpop.f32.mrf.mxu0
        %v1191 = vadd.f32 0.0, %v1190
        %1192 = vdwg.mxu0
        %1193 = vmatprep.subr.mxu0 0.0
        %1194 = vmatpush1.msra.mxu0 0.0
        %1195 = vmatprep.subr.mxu0 0.0
        %1196 = vmatpush1.msra.mxu0 0.0
        %1197 = vmatprep.subr.mxu0 0.0
        %1198 = vmatpush1.msra.mxu0 0.0
        %1199 = vmatprep.subr.mxu0 0.0
        %1200 = vmatpush1.msra.mxu0 0.0
        %1201 = vmatprep.subr.mxu0 0.0
        %1202 = vmatpush1.msra.mxu0 0.0
        %1203 = vmatprep.subr.mxu0 0.0
        %1204 = vmatpush1.msra.mxu0 0.0
        %1205 = vmatprep.subr.mxu0 0.0
        %1206 = vmatpush1.msra.mxu0 0.0
        %1207 = vmatprep.subr.mxu0 0.0
        %1208 = vmatpush1.msra.mxu0 0.0
        %1209 = vmatprep.subr.mxu0 0.0
        %1210 = vmatpush1.msra.mxu0 0.0
        %1211 = vmatprep.subr.mxu0 0.0
        %1212 = vmatpush1.msra.mxu0 0.0
        %1213 = vmatprep.subr.mxu0 0.0
        %1214 = vmatpush1.msra.mxu0 0.0
        %1215 = vmatprep.subr.mxu0 0.0
        %1216 = vmatpush1.msra.mxu0 0.0
        %1217 = vmatprep.subr.mxu0 0.0
        %1218 = vmatpush1.msra.mxu0 0.0
        %1219 = vmatprep.subr.mxu0 0.0
        %1220 = vmatpush1.msra.mxu0 0.0
        %1221 = vmatprep.subr.mxu0 0.0
        %1222 = vmatpush1.msra.mxu0 0.0
        %1223 = vmatprep.subr.mxu0 %v1045
        %1224 = vmatpush1.msra.mxu0 %v1043
        %1225 = vmatprep.subr.mxu0 0.0
        %1226 = vmatpush2.msra.mxu0 0.0
        %1227 = vmatprep.subr.mxu0 0.0
        %1228 = vmatpush2.msra.mxu0 0.0
        %1229 = vmatprep.subr.mxu0 0.0
        %1230 = vmatpush2.msra.mxu0 0.0
        %1231 = vmatprep.subr.mxu0 0.0
        %1232 = vmatpush2.msra.mxu0 0.0
        %1233 = vmatprep.subr.mxu0 0.0
        %1234 = vmatpush2.msra.mxu0 0.0
        %1235 = vmatprep.subr.mxu0 0.0
        %1236 = vmatpush2.msra.mxu0 0.0
        %1237 = vmatprep.subr.mxu0 0.0
        %1238 = vmatpush2.msra.mxu0 0.0
        %1239 = vmatprep.subr.mxu0 0.0
        %1240 = vmatpush2.msra.mxu0 0.0
        %1241 = vmatprep.subr.mxu0 0.0
        %1242 = vmatpush2.msra.mxu0 0.0
        %1243 = vmatprep.subr.mxu0 0.0
        %1244 = vmatpush2.msra.mxu0 0.0
        %1245 = vmatprep.subr.mxu0 0.0
        %1246 = vmatpush2.msra.mxu0 0.0
        %1247 = vmatprep.subr.mxu0 0.0
        %1248 = vmatpush2.msra.mxu0 0.0
        %1249 = vmatprep.subr.mxu0 0.0
        %1250 = vmatpush2.msra.mxu0 0.0
        %1251 = vmatprep.subr.mxu0 0.0
        %1252 = vmatpush2.msra.mxu0 0.0
        %1253 = vmatprep.subr.mxu0 0.0
        %1254 = vmatpush2.msra.mxu0 0.0
        %1255 = vmatprep.subr.mxu0 0.0
        %1256 = vmatpush2.msra.mxu0 0.0
        %1257 = vmatprep.mubr.f32.mxu0 0.0
        %1258 = vmatmul.mubr.f32.gmra.mxu0 %v1032
        %v1259 = vpop.f32.mrf.mxu0
        %v1260 = vadd.f32 0.0, %v1259
        %v1261 = vpop.f32.mrf.mxu0
        %v1262 = vadd.f32 0.0, %v1261
        %1263 = vdwg.mxu0
        %1264 = vmatprep.subr.mxu0 0.0
        %1265 = vmatpush1.msra.mxu0 0.0
        %1266 = vmatprep.subr.mxu0 0.0
        %1267 = vmatpush1.msra.mxu0 0.0
        %1268 = vmatprep.subr.mxu0 0.0
        %1269 = vmatpush1.msra.mxu0 0.0
        %1270 = vmatprep.subr.mxu0 0.0
        %1271 = vmatpush1.msra.mxu0 0.0
        %1272 = vmatprep.subr.mxu0 0.0
        %1273 = vmatpush1.msra.mxu0 0.0
        %1274 = vmatprep.subr.mxu0 0.0
        %1275 = vmatpush1.msra.mxu0 0.0
        %1276 = vmatprep.subr.mxu0 0.0
        %1277 = vmatpush1.msra.mxu0 0.0
        %1278 = vmatprep.subr.mxu0 0.0
        %1279 = vmatpush1.msra.mxu0 0.0
        %1280 = vmatprep.subr.mxu0 0.0
        %1281 = vmatpush1.msra.mxu0 0.0
        %1282 = vmatprep.subr.mxu0 0.0
        %1283 = vmatpush1.msra.mxu0 0.0
        %1284 = vmatprep.subr.mxu0 0.0
        %1285 = vmatpush1.msra.mxu0 0.0
        %1286 = vmatprep.subr.mxu0 0.0
        %1287 = vmatpush1.msra.mxu0 0.0
        %1288 = vmatprep.subr.mxu0 0.0
        %1289 = vmatpush1.msra.mxu0 0.0
        %1290 = vmatprep.subr.mxu0 0.0
        %1291 = vmatpush1.msra.mxu0 0.0
        %1292 = vmatprep.subr.mxu0 0.0
        %1293 = vmatpush1.msra.mxu0 0.0
        %1294 = vmatprep.subr.mxu0 %v1049
        %1295 = vmatpush1.msra.mxu0 %v1047
        %1296 = vmatprep.subr.mxu0 0.0
        %1297 = vmatpush2.msra.mxu0 0.0
        %1298 = vmatprep.subr.mxu0 0.0
        %1299 = vmatpush2.msra.mxu0 0.0
        %1300 = vmatprep.subr.mxu0 0.0
        %1301 = vmatpush2.msra.mxu0 0.0
        %1302 = vmatprep.subr.mxu0 0.0
        %1303 = vmatpush2.msra.mxu0 0.0
        %1304 = vmatprep.subr.mxu0 0.0
        %1305 = vmatpush2.msra.mxu0 0.0
        %1306 = vmatprep.subr.mxu0 0.0
        %1307 = vmatpush2.msra.mxu0 0.0
        %1308 = vmatprep.subr.mxu0 0.0
        %1309 = vmatpush2.msra.mxu0 0.0
        %1310 = vmatprep.subr.mxu0 0.0
        %1311 = vmatpush2.msra.mxu0 0.0
        %1312 = vmatprep.subr.mxu0 0.0
        %1313 = vmatpush2.msra.mxu0 0.0
        %1314 = vmatprep.subr.mxu0 0.0
        %1315 = vmatpush2.msra.mxu0 0.0
        %1316 = vmatprep.subr.mxu0 0.0
        %1317 = vmatpush2.msra.mxu0 0.0
        %1318 = vmatprep.subr.mxu0 0.0
        %1319 = vmatpush2.msra.mxu0 0.0
        %1320 = vmatprep.subr.mxu0 0.0
        %1321 = vmatpush2.msra.mxu0 0.0
        %1322 = vmatprep.subr.mxu0 0.0
        %1323 = vmatpush2.msra.mxu0 0.0
        %1324 = vmatprep.subr.mxu0 0.0
        %1325 = vmatpush2.msra.mxu0 0.0
        %1326 = vmatprep.subr.mxu0 0.0
        %1327 = vmatpush2.msra.mxu0 0.0
        %1328 = vmatprep.mubr.f32.mxu0 0.0
        %1329 = vmatmul.mubr.f32.gmra.mxu0 %v1032
        %v1330 = vpop.f32.mrf.mxu0
        %v1331 = vadd.f32 0.0, %v1330
        %v1332 = vpop.f32.mrf.mxu0
        %v1333 = vadd.f32 0.0, %v1332
        %1334 = vdwg.mxu0
        %v1336 = vsel %vm1030, %v991, 0
        %v1339 = vsel %vm1034, %v983, 0
        %v1342 = vsel %vm1034, %v984, 0
        %v1345 = vsel %vm1034, %v985, 0
        %v1348 = vsel %vm1034, %v986, 0
        %v1351 = vsel %vm1034, %v987, 0
        %v1354 = vsel %vm1034, %v988, 0
        %v1357 = vsel %vm1034, %v989, 0
        %v1360 = vsel %vm1034, %v990, 0
        %1362 = vmatprep.subr.mxu0 0.0
        %1363 = vmatpush1.msra.mxu0 0.0
        %1364 = vmatprep.subr.mxu0 0.0
        %1365 = vmatpush1.msra.mxu0 0.0
        %1366 = vmatprep.subr.mxu0 0.0
        %1367 = vmatpush1.msra.mxu0 0.0
        %1368 = vmatprep.subr.mxu0 0.0
        %1369 = vmatpush1.msra.mxu0 0.0
        %1370 = vmatprep.subr.mxu0 0.0
        %1371 = vmatpush1.msra.mxu0 0.0
        %1372 = vmatprep.subr.mxu0 0.0
        %1373 = vmatpush1.msra.mxu0 0.0
        %1374 = vmatprep.subr.mxu0 0.0
        %1375 = vmatpush1.msra.mxu0 0.0
        %1376 = vmatprep.subr.mxu0 0.0
        %1377 = vmatpush1.msra.mxu0 0.0
        %1378 = vmatprep.subr.mxu0 0.0
        %1379 = vmatpush1.msra.mxu0 0.0
        %1380 = vmatprep.subr.mxu0 0.0
        %1381 = vmatpush1.msra.mxu0 0.0
        %1382 = vmatprep.subr.mxu0 0.0
        %1383 = vmatpush1.msra.mxu0 0.0
        %1384 = vmatprep.subr.mxu0 0.0
        %1385 = vmatpush1.msra.mxu0 0.0
        %1386 = vmatprep.subr.mxu0 0.0
        %1387 = vmatpush1.msra.mxu0 0.0
        %1388 = vmatprep.subr.mxu0 0.0
        %1389 = vmatpush1.msra.mxu0 0.0
        %1390 = vmatprep.subr.mxu0 0.0
        %1391 = vmatpush1.msra.mxu0 0.0
        %1392 = vmatprep.subr.mxu0 %v1342
        %1393 = vmatpush1.msra.mxu0 %v1339
        %1394 = vmatprep.subr.mxu0 0.0
        %1395 = vmatpush2.msra.mxu0 0.0
        %1396 = vmatprep.subr.mxu0 0.0
        %1397 = vmatpush2.msra.mxu0 0.0
        %1398 = vmatprep.subr.mxu0 0.0
        %1399 = vmatpush2.msra.mxu0 0.0
        %1400 = vmatprep.subr.mxu0 0.0
        %1401 = vmatpush2.msra.mxu0 0.0
        %1402 = vmatprep.subr.mxu0 0.0
        %1403 = vmatpush2.msra.mxu0 0.0
        %1404 = vmatprep.subr.mxu0 0.0
        %1405 = vmatpush2.msra.mxu0 0.0
        %1406 = vmatprep.subr.mxu0 0.0
        %1407 = vmatpush2.msra.mxu0 0.0
        %1408 = vmatprep.subr.mxu0 0.0
        %1409 = vmatpush2.msra.mxu0 0.0
        %1410 = vmatprep.subr.mxu0 0.0
        %1411 = vmatpush2.msra.mxu0 0.0
        %1412 = vmatprep.subr.mxu0 0.0
        %1413 = vmatpush2.msra.mxu0 0.0
        %1414 = vmatprep.subr.mxu0 0.0
        %1415 = vmatpush2.msra.mxu0 0.0
        %1416 = vmatprep.subr.mxu0 0.0
        %1417 = vmatpush2.msra.mxu0 0.0
        %1418 = vmatprep.subr.mxu0 0.0
        %1419 = vmatpush2.msra.mxu0 0.0
        %1420 = vmatprep.subr.mxu0 0.0
        %1421 = vmatpush2.msra.mxu0 0.0
        %1422 = vmatprep.subr.mxu0 0.0
        %1423 = vmatpush2.msra.mxu0 0.0
        %1424 = vmatprep.subr.mxu0 0.0
        %1425 = vmatpush2.msra.mxu0 0.0
        %1426 = vmatprep.mubr.f32.mxu0 0.0
        %1427 = vmatmul.mubr.f32.gmra.mxu0 %v1336
        %v1428 = vpop.f32.mrf.mxu0
        %v1429 = vadd.f32 %v1118, %v1428
        %v1430 = vpop.f32.mrf.mxu0
        %v1431 = vadd.f32 %v1120, %v1430
        %1432 = vdwg.mxu0
        %1433 = vmatprep.subr.mxu0 0.0
        %1434 = vmatpush1.msra.mxu0 0.0
        %1435 = vmatprep.subr.mxu0 0.0
        %1436 = vmatpush1.msra.mxu0 0.0
        %1437 = vmatprep.subr.mxu0 0.0
        %1438 = vmatpush1.msra.mxu0 0.0
        %1439 = vmatprep.subr.mxu0 0.0
        %1440 = vmatpush1.msra.mxu0 0.0
        %1441 = vmatprep.subr.mxu0 0.0
        %1442 = vmatpush1.msra.mxu0 0.0
        %1443 = vmatprep.subr.mxu0 0.0
        %1444 = vmatpush1.msra.mxu0 0.0
        %1445 = vmatprep.subr.mxu0 0.0
        %1446 = vmatpush1.msra.mxu0 0.0
        %1447 = vmatprep.subr.mxu0 0.0
        %1448 = vmatpush1.msra.mxu0 0.0
        %1449 = vmatprep.subr.mxu0 0.0
        %1450 = vmatpush1.msra.mxu0 0.0
        %1451 = vmatprep.subr.mxu0 0.0
        %1452 = vmatpush1.msra.mxu0 0.0
        %1453 = vmatprep.subr.mxu0 0.0
        %1454 = vmatpush1.msra.mxu0 0.0
        %1455 = vmatprep.subr.mxu0 0.0
        %1456 = vmatpush1.msra.mxu0 0.0
        %1457 = vmatprep.subr.mxu0 0.0
        %1458 = vmatpush1.msra.mxu0 0.0
        %1459 = vmatprep.subr.mxu0 0.0
        %1460 = vmatpush1.msra.mxu0 0.0
        %1461 = vmatprep.subr.mxu0 0.0
        %1462 = vmatpush1.msra.mxu0 0.0
        %1463 = vmatprep.subr.mxu0 %v1348
        %1464 = vmatpush1.msra.mxu0 %v1345
        %1465 = vmatprep.subr.mxu0 0.0
        %1466 = vmatpush2.msra.mxu0 0.0
        %1467 = vmatprep.subr.mxu0 0.0
        %1468 = vmatpush2.msra.mxu0 0.0
        %1469 = vmatprep.subr.mxu0 0.0
        %1470 = vmatpush2.msra.mxu0 0.0
        %1471 = vmatprep.subr.mxu0 0.0
        %1472 = vmatpush2.msra.mxu0 0.0
        %1473 = vmatprep.subr.mxu0 0.0
        %1474 = vmatpush2.msra.mxu0 0.0
        %1475 = vmatprep.subr.mxu0 0.0
        %1476 = vmatpush2.msra.mxu0 0.0
        %1477 = vmatprep.subr.mxu0 0.0
        %1478 = vmatpush2.msra.mxu0 0.0
        %1479 = vmatprep.subr.mxu0 0.0
        %1480 = vmatpush2.msra.mxu0 0.0
        %1481 = vmatprep.subr.mxu0 0.0
        %1482 = vmatpush2.msra.mxu0 0.0
        %1483 = vmatprep.subr.mxu0 0.0
        %1484 = vmatpush2.msra.mxu0 0.0
        %1485 = vmatprep.subr.mxu0 0.0
        %1486 = vmatpush2.msra.mxu0 0.0
        %1487 = vmatprep.subr.mxu0 0.0
        %1488 = vmatpush2.msra.mxu0 0.0
        %1489 = vmatprep.subr.mxu0 0.0
        %1490 = vmatpush2.msra.mxu0 0.0
        %1491 = vmatprep.subr.mxu0 0.0
        %1492 = vmatpush2.msra.mxu0 0.0
        %1493 = vmatprep.subr.mxu0 0.0
        %1494 = vmatpush2.msra.mxu0 0.0
        %1495 = vmatprep.subr.mxu0 0.0
        %1496 = vmatpush2.msra.mxu0 0.0
        %1497 = vmatprep.mubr.f32.mxu0 0.0
        %1498 = vmatmul.mubr.f32.gmra.mxu0 %v1336
        %v1499 = vpop.f32.mrf.mxu0
        %v1500 = vadd.f32 %v1189, %v1499
        %v1501 = vpop.f32.mrf.mxu0
        %v1502 = vadd.f32 %v1191, %v1501
        %1503 = vdwg.mxu0
        %1504 = vmatprep.subr.mxu0 0.0
        %1505 = vmatpush1.msra.mxu0 0.0
        %1506 = vmatprep.subr.mxu0 0.0
        %1507 = vmatpush1.msra.mxu0 0.0
        %1508 = vmatprep.subr.mxu0 0.0
        %1509 = vmatpush1.msra.mxu0 0.0
        %1510 = vmatprep.subr.mxu0 0.0
        %1511 = vmatpush1.msra.mxu0 0.0
        %1512 = vmatprep.subr.mxu0 0.0
        %1513 = vmatpush1.msra.mxu0 0.0
        %1514 = vmatprep.subr.mxu0 0.0
        %1515 = vmatpush1.msra.mxu0 0.0
        %1516 = vmatprep.subr.mxu0 0.0
        %1517 = vmatpush1.msra.mxu0 0.0
        %1518 = vmatprep.subr.mxu0 0.0
        %1519 = vmatpush1.msra.mxu0 0.0
        %1520 = vmatprep.subr.mxu0 0.0
        %1521 = vmatpush1.msra.mxu0 0.0
        %1522 = vmatprep.subr.mxu0 0.0
        %1523 = vmatpush1.msra.mxu0 0.0
        %1524 = vmatprep.subr.mxu0 0.0
        %1525 = vmatpush1.msra.mxu0 0.0
        %1526 = vmatprep.subr.mxu0 0.0
        %1527 = vmatpush1.msra.mxu0 0.0
        %1528 = vmatprep.subr.mxu0 0.0
        %1529 = vmatpush1.msra.mxu0 0.0
        %1530 = vmatprep.subr.mxu0 0.0
        %1531 = vmatpush1.msra.mxu0 0.0
        %1532 = vmatprep.subr.mxu0 0.0
        %1533 = vmatpush1.msra.mxu0 0.0
        %1534 = vmatprep.subr.mxu0 %v1354
        %1535 = vmatpush1.msra.mxu0 %v1351
        %1536 = vmatprep.subr.mxu0 0.0
        %1537 = vmatpush2.msra.mxu0 0.0
        %1538 = vmatprep.subr.mxu0 0.0
        %1539 = vmatpush2.msra.mxu0 0.0
        %1540 = vmatprep.subr.mxu0 0.0
        %1541 = vmatpush2.msra.mxu0 0.0
        %1542 = vmatprep.subr.mxu0 0.0
        %1543 = vmatpush2.msra.mxu0 0.0
        %1544 = vmatprep.subr.mxu0 0.0
        %1545 = vmatpush2.msra.mxu0 0.0
        %1546 = vmatprep.subr.mxu0 0.0
        %1547 = vmatpush2.msra.mxu0 0.0
        %1548 = vmatprep.subr.mxu0 0.0
        %1549 = vmatpush2.msra.mxu0 0.0
        %1550 = vmatprep.subr.mxu0 0.0
        %1551 = vmatpush2.msra.mxu0 0.0
        %1552 = vmatprep.subr.mxu0 0.0
        %1553 = vmatpush2.msra.mxu0 0.0
        %1554 = vmatprep.subr.mxu0 0.0
        %1555 = vmatpush2.msra.mxu0 0.0
        %1556 = vmatprep.subr.mxu0 0.0
        %1557 = vmatpush2.msra.mxu0 0.0
        %1558 = vmatprep.subr.mxu0 0.0
        %1559 = vmatpush2.msra.mxu0 0.0
        %1560 = vmatprep.subr.mxu0 0.0
        %1561 = vmatpush2.msra.mxu0 0.0
        %1562 = vmatprep.subr.mxu0 0.0
        %1563 = vmatpush2.msra.mxu0 0.0
        %1564 = vmatprep.subr.mxu0 0.0
        %1565 = vmatpush2.msra.mxu0 0.0
        %1566 = vmatprep.subr.mxu0 0.0
        %1567 = vmatpush2.msra.mxu0 0.0
        %1568 = vmatprep.mubr.f32.mxu0 0.0
        %1569 = vmatmul.mubr.f32.gmra.mxu0 %v1336
        %v1570 = vpop.f32.mrf.mxu0
        %v1571 = vadd.f32 %v1260, %v1570
        %v1572 = vpop.f32.mrf.mxu0
        %v1573 = vadd.f32 %v1262, %v1572
        %1574 = vdwg.mxu0
        %1575 = vmatprep.subr.mxu0 0.0
        %1576 = vmatpush1.msra.mxu0 0.0
        %1577 = vmatprep.subr.mxu0 0.0
        %1578 = vmatpush1.msra.mxu0 0.0
        %1579 = vmatprep.subr.mxu0 0.0
        %1580 = vmatpush1.msra.mxu0 0.0
        %1581 = vmatprep.subr.mxu0 0.0
        %1582 = vmatpush1.msra.mxu0 0.0
        %1583 = vmatprep.subr.mxu0 0.0
        %1584 = vmatpush1.msra.mxu0 0.0
        %1585 = vmatprep.subr.mxu0 0.0
        %1586 = vmatpush1.msra.mxu0 0.0
        %1587 = vmatprep.subr.mxu0 0.0
        %1588 = vmatpush1.msra.mxu0 0.0
        %1589 = vmatprep.subr.mxu0 0.0
        %1590 = vmatpush1.msra.mxu0 0.0
        %1591 = vmatprep.subr.mxu0 0.0
        %1592 = vmatpush1.msra.mxu0 0.0
        %1593 = vmatprep.subr.mxu0 0.0
        %1594 = vmatpush1.msra.mxu0 0.0
        %1595 = vmatprep.subr.mxu0 0.0
        %1596 = vmatpush1.msra.mxu0 0.0
        %1597 = vmatprep.subr.mxu0 0.0
        %1598 = vmatpush1.msra.mxu0 0.0
        %1599 = vmatprep.subr.mxu0 0.0
        %1600 = vmatpush1.msra.mxu0 0.0
        %1601 = vmatprep.subr.mxu0 0.0
        %1602 = vmatpush1.msra.mxu0 0.0
        %1603 = vmatprep.subr.mxu0 0.0
        %1604 = vmatpush1.msra.mxu0 0.0
        %1605 = vmatprep.subr.mxu0 %v1360
        %1606 = vmatpush1.msra.mxu0 %v1357
        %1607 = vmatprep.subr.mxu0 0.0
        %1608 = vmatpush2.msra.mxu0 0.0
        %1609 = vmatprep.subr.mxu0 0.0
        %1610 = vmatpush2.msra.mxu0 0.0
        %1611 = vmatprep.subr.mxu0 0.0
        %1612 = vmatpush2.msra.mxu0 0.0
        %1613 = vmatprep.subr.mxu0 0.0
        %1614 = vmatpush2.msra.mxu0 0.0
        %1615 = vmatprep.subr.mxu0 0.0
        %1616 = vmatpush2.msra.mxu0 0.0
        %1617 = vmatprep.subr.mxu0 0.0
        %1618 = vmatpush2.msra.mxu0 0.0
        %1619 = vmatprep.subr.mxu0 0.0
        %1620 = vmatpush2.msra.mxu0 0.0
        %1621 = vmatprep.subr.mxu0 0.0
        %1622 = vmatpush2.msra.mxu0 0.0
        %1623 = vmatprep.subr.mxu0 0.0
        %1624 = vmatpush2.msra.mxu0 0.0
        %1625 = vmatprep.subr.mxu0 0.0
        %1626 = vmatpush2.msra.mxu0 0.0
        %1627 = vmatprep.subr.mxu0 0.0
        %1628 = vmatpush2.msra.mxu0 0.0
        %1629 = vmatprep.subr.mxu0 0.0
        %1630 = vmatpush2.msra.mxu0 0.0
        %1631 = vmatprep.subr.mxu0 0.0
        %1632 = vmatpush2.msra.mxu0 0.0
        %1633 = vmatprep.subr.mxu0 0.0
        %1634 = vmatpush2.msra.mxu0 0.0
        %1635 = vmatprep.subr.mxu0 0.0
        %1636 = vmatpush2.msra.mxu0 0.0
        %1637 = vmatprep.subr.mxu0 0.0
        %1638 = vmatpush2.msra.mxu0 0.0
        %1639 = vmatprep.mubr.f32.mxu0 0.0
        %1640 = vmatmul.mubr.f32.gmra.mxu0 %v1336
        %v1641 = vpop.f32.mrf.mxu0
        %v1642 = vadd.f32 %v1331, %v1641
        %v1643 = vpop.f32.mrf.mxu0
        %v1644 = vadd.f32 %v1333, %v1643
        %1645 = vdwg.mxu0
        %s1646 = scalar_lea.vmem [#allocation7], 1
        %v1647 = vld [vmem:[%s1646] ss:$2 sm:$0xff]
        %v1649 = vlaneseq
        %v1650 = vshrl.u32 %v1649, 7
        %v1651 = vsub.s32 0, %v1650
        %v1652 = vrot.slane %v1647, %v1651
        %v1653 = vlaneseq
        %v1654 = vshrl.u32 %v1653, 7
        %v1655 = vsub.s32 1, %v1654
        %v1656 = vrot.slane %v1647, %v1655
        %v1657 = vlaneseq
        %v1658 = vshrl.u32 %v1657, 7
        %v1659 = vsub.s32 2, %v1658
        %v1660 = vrot.slane %v1647, %v1659
        %v1661 = vlaneseq
        %v1662 = vshrl.u32 %v1661, 7
        %v1663 = vsub.s32 3, %v1662
        %v1664 = vrot.slane %v1647, %v1663
        %v1665 = vlaneseq
        %v1666 = vshrl.u32 %v1665, 7
        %v1667 = vsub.s32 4, %v1666
        %v1668 = vrot.slane %v1647, %v1667
        %v1669 = vlaneseq
        %v1670 = vshrl.u32 %v1669, 7
        %v1671 = vsub.s32 5, %v1670
        %v1672 = vrot.slane %v1647, %v1671
        %v1673 = vlaneseq
        %v1674 = vshrl.u32 %v1673, 7
        %v1675 = vsub.s32 6, %v1674
        %v1676 = vrot.slane %v1647, %v1675
        %v1677 = vlaneseq
        %v1678 = vshrl.u32 %v1677, 7
        %v1679 = vsub.s32 7, %v1678
        %v1680 = vrot.slane %v1647, %v1679
        %1681 = vrot.lane.b32.xlu0 %v1652, 2
        %v1682 = vpop.permute.xlu0 %1681
        %1683 = vrot.lane.b32.xlu0 %v1656, 2
        %v1684 = vpop.permute.xlu0 %1683
        %1685 = vrot.lane.b32.xlu0 %v1660, 2
        %v1686 = vpop.permute.xlu0 %1685
        %1687 = vrot.lane.b32.xlu0 %v1664, 2
        %v1688 = vpop.permute.xlu0 %1687
        %1689 = vrot.lane.b32.xlu0 %v1668, 2
        %v1690 = vpop.permute.xlu0 %1689
        %1691 = vrot.lane.b32.xlu0 %v1672, 2
        %v1692 = vpop.permute.xlu0 %1691
        %1693 = vrot.lane.b32.xlu0 %v1676, 2
        %v1694 = vpop.permute.xlu0 %1693
        %1695 = vrot.lane.b32.xlu0 %v1680, 2
        %v1696 = vpop.permute.xlu0 %1695
        %vm1697 = vcmask 15360
        %v1698 = vsel %vm1697, %v1682, %v1684
        %v1699 = vsel %vm1697, %v1684, %v1686
        %v1700 = vsel %vm1697, %v1686, %v1688
        %v1701 = vsel %vm1697, %v1688, %v1690
        %v1702 = vsel %vm1697, %v1690, %v1692
        %v1703 = vsel %vm1697, %v1692, %v1694
        %v1704 = vsel %vm1697, %v1694, %v1696
        %v1714 = vmul.f32 %v654, %v1682
        %v1715 = vmul.f32 %v656, %v1698
        %v1716 = vmul.f32 %v725, %v1699
        %v1717 = vmul.f32 %v727, %v1700
        %v1718 = vmul.f32 %v796, %v1701
        %v1719 = vmul.f32 %v798, %v1702
        %v1720 = vmul.f32 %v867, %v1703
        %v1721 = vmul.f32 %v869, %v1704
        %v1722 = vmul.f32 %v938, %v1696
        %s1723 = scalar_lea.vmem %s2, 16
        %v1724 = vld [vmem:[%s1723] sm:$0xff]
        %1734 = vrot.lane.b32.xlu0 %v1714, 126
        %v1735 = vpop.permute.xlu0 %1734
        %1736 = vrot.lane.b32.xlu0 %v1715, 126
        %v1737 = vpop.permute.xlu0 %1736
        %1738 = vrot.lane.b32.xlu0 %v1716, 126
        %v1739 = vpop.permute.xlu0 %1738
        %1740 = vrot.lane.b32.xlu0 %v1717, 126
        %v1741 = vpop.permute.xlu0 %1740
        %1742 = vrot.lane.b32.xlu0 %v1718, 126
        %v1743 = vpop.permute.xlu0 %1742
        %1744 = vrot.lane.b32.xlu0 %v1719, 126
        %v1745 = vpop.permute.xlu0 %1744
        %1746 = vrot.lane.b32.xlu0 %v1720, 126
        %v1747 = vpop.permute.xlu0 %1746
        %1748 = vrot.lane.b32.xlu0 %v1721, 126
        %v1749 = vpop.permute.xlu0 %1748
        %1750 = vrot.lane.b32.xlu0 %v1722, 126
        %v1751 = vpop.permute.xlu0 %1750
        %vm1752 = vcmask 1031168
        %v1753 = vsel %vm1752, %v1735, %v1737
        %v1754 = vsel %vm1752, %v1737, %v1739
        %v1755 = vsel %vm1752, %v1739, %v1741
        %v1756 = vsel %vm1752, %v1741, %v1743
        %v1757 = vsel %vm1752, %v1743, %v1745
        %v1758 = vsel %vm1752, %v1745, %v1747
        %v1759 = vsel %vm1752, %v1747, %v1749
        %v1760 = vsel %vm1752, %v1749, %v1751
        %v1762 = vsel %vm1030, %v1724, 0
        %v1764 = vsel %vm1034, %v1753, 0
        %v1766 = vsel %vm1034, %v1754, 0
        %v1768 = vsel %vm1034, %v1755, 0
        %v1770 = vsel %vm1034, %v1756, 0
        %v1772 = vsel %vm1034, %v1757, 0
        %v1774 = vsel %vm1034, %v1758, 0
        %v1776 = vsel %vm1034, %v1759, 0
        %v1778 = vsel %vm1034, %v1760, 0
        %1780 = vmatprep.subr.mxu0 0.0
        %1781 = vmatpush1.msra.mxu0 0.0
        %1782 = vmatprep.subr.mxu0 0.0
        %1783 = vmatpush1.msra.mxu0 0.0
        %1784 = vmatprep.subr.mxu0 0.0
        %1785 = vmatpush1.msra.mxu0 0.0
        %1786 = vmatprep.subr.mxu0 0.0
        %1787 = vmatpush1.msra.mxu0 0.0
        %1788 = vmatprep.subr.mxu0 0.0
        %1789 = vmatpush1.msra.mxu0 0.0
        %1790 = vmatprep.subr.mxu0 0.0
        %1791 = vmatpush1.msra.mxu0 0.0
        %1792 = vmatprep.subr.mxu0 0.0
        %1793 = vmatpush1.msra.mxu0 0.0
        %1794 = vmatprep.subr.mxu0 0.0
        %1795 = vmatpush1.msra.mxu0 0.0
        %1796 = vmatprep.subr.mxu0 0.0
        %1797 = vmatpush1.msra.mxu0 0.0
        %1798 = vmatprep.subr.mxu0 0.0
        %1799 = vmatpush1.msra.mxu0 0.0
        %1800 = vmatprep.subr.mxu0 0.0
        %1801 = vmatpush1.msra.mxu0 0.0
        %1802 = vmatprep.subr.mxu0 0.0
        %1803 = vmatpush1.msra.mxu0 0.0
        %1804 = vmatprep.subr.mxu0 0.0
        %1805 = vmatpush1.msra.mxu0 0.0
        %1806 = vmatprep.subr.mxu0 0.0
        %1807 = vmatpush1.msra.mxu0 0.0
        %1808 = vmatprep.subr.mxu0 0.0
        %1809 = vmatpush1.msra.mxu0 0.0
        %1810 = vmatprep.subr.mxu0 %v1766
        %1811 = vmatpush1.msra.mxu0 %v1764
        %1812 = vmatprep.subr.mxu0 0.0
        %1813 = vmatpush2.msra.mxu0 0.0
        %1814 = vmatprep.subr.mxu0 0.0
        %1815 = vmatpush2.msra.mxu0 0.0
        %1816 = vmatprep.subr.mxu0 0.0
        %1817 = vmatpush2.msra.mxu0 0.0
        %1818 = vmatprep.subr.mxu0 0.0
        %1819 = vmatpush2.msra.mxu0 0.0
        %1820 = vmatprep.subr.mxu0 0.0
        %1821 = vmatpush2.msra.mxu0 0.0
        %1822 = vmatprep.subr.mxu0 0.0
        %1823 = vmatpush2.msra.mxu0 0.0
        %1824 = vmatprep.subr.mxu0 0.0
        %1825 = vmatpush2.msra.mxu0 0.0
        %1826 = vmatprep.subr.mxu0 0.0
        %1827 = vmatpush2.msra.mxu0 0.0
        %1828 = vmatprep.subr.mxu0 0.0
        %1829 = vmatpush2.msra.mxu0 0.0
        %1830 = vmatprep.subr.mxu0 0.0
        %1831 = vmatpush2.msra.mxu0 0.0
        %1832 = vmatprep.subr.mxu0 0.0
        %1833 = vmatpush2.msra.mxu0 0.0
        %1834 = vmatprep.subr.mxu0 0.0
        %1835 = vmatpush2.msra.mxu0 0.0
        %1836 = vmatprep.subr.mxu0 0.0
        %1837 = vmatpush2.msra.mxu0 0.0
        %1838 = vmatprep.subr.mxu0 0.0
        %1839 = vmatpush2.msra.mxu0 0.0
        %1840 = vmatprep.subr.mxu0 0.0
        %1841 = vmatpush2.msra.mxu0 0.0
        %1842 = vmatprep.subr.mxu0 0.0
        %1843 = vmatpush2.msra.mxu0 0.0
        %1844 = vmatprep.mubr.f32.mxu0 0.0
        %1845 = vmatmul.mubr.f32.gmra.mxu0 %v1762
        %v1846 = vpop.f32.mrf.mxu0
        %v1847 = vadd.f32 0.0, %v1846
        %v1848 = vpop.f32.mrf.mxu0
        %v1849 = vadd.f32 0.0, %v1848
        %1850 = vdwg.mxu0
        %1851 = vmatprep.subr.mxu0 0.0
        %1852 = vmatpush1.msra.mxu0 0.0
        %1853 = vmatprep.subr.mxu0 0.0
        %1854 = vmatpush1.msra.mxu0 0.0
        %1855 = vmatprep.subr.mxu0 0.0
        %1856 = vmatpush1.msra.mxu0 0.0
        %1857 = vmatprep.subr.mxu0 0.0
        %1858 = vmatpush1.msra.mxu0 0.0
        %1859 = vmatprep.subr.mxu0 0.0
        %1860 = vmatpush1.msra.mxu0 0.0
        %1861 = vmatprep.subr.mxu0 0.0
        %1862 = vmatpush1.msra.mxu0 0.0
        %1863 = vmatprep.subr.mxu0 0.0
        %1864 = vmatpush1.msra.mxu0 0.0
        %1865 = vmatprep.subr.mxu0 0.0
        %1866 = vmatpush1.msra.mxu0 0.0
        %1867 = vmatprep.subr.mxu0 0.0
        %1868 = vmatpush1.msra.mxu0 0.0
        %1869 = vmatprep.subr.mxu0 0.0
        %1870 = vmatpush1.msra.mxu0 0.0
        %1871 = vmatprep.subr.mxu0 0.0
        %1872 = vmatpush1.msra.mxu0 0.0
        %1873 = vmatprep.subr.mxu0 0.0
        %1874 = vmatpush1.msra.mxu0 0.0
        %1875 = vmatprep.subr.mxu0 0.0
        %1876 = vmatpush1.msra.mxu0 0.0
        %1877 = vmatprep.subr.mxu0 0.0
        %1878 = vmatpush1.msra.mxu0 0.0
        %1879 = vmatprep.subr.mxu0 0.0
        %1880 = vmatpush1.msra.mxu0 0.0
        %1881 = vmatprep.subr.mxu0 %v1770
        %1882 = vmatpush1.msra.mxu0 %v1768
        %1883 = vmatprep.subr.mxu0 0.0
        %1884 = vmatpush2.msra.mxu0 0.0
        %1885 = vmatprep.subr.mxu0 0.0
        %1886 = vmatpush2.msra.mxu0 0.0
        %1887 = vmatprep.subr.mxu0 0.0
        %1888 = vmatpush2.msra.mxu0 0.0
        %1889 = vmatprep.subr.mxu0 0.0
        %1890 = vmatpush2.msra.mxu0 0.0
        %1891 = vmatprep.subr.mxu0 0.0
        %1892 = vmatpush2.msra.mxu0 0.0
        %1893 = vmatprep.subr.mxu0 0.0
        %1894 = vmatpush2.msra.mxu0 0.0
        %1895 = vmatprep.subr.mxu0 0.0
        %1896 = vmatpush2.msra.mxu0 0.0
        %1897 = vmatprep.subr.mxu0 0.0
        %1898 = vmatpush2.msra.mxu0 0.0
        %1899 = vmatprep.subr.mxu0 0.0
        %1900 = vmatpush2.msra.mxu0 0.0
        %1901 = vmatprep.subr.mxu0 0.0
        %1902 = vmatpush2.msra.mxu0 0.0
        %1903 = vmatprep.subr.mxu0 0.0
        %1904 = vmatpush2.msra.mxu0 0.0
        %1905 = vmatprep.subr.mxu0 0.0
        %1906 = vmatpush2.msra.mxu0 0.0
        %1907 = vmatprep.subr.mxu0 0.0
        %1908 = vmatpush2.msra.mxu0 0.0
        %1909 = vmatprep.subr.mxu0 0.0
        %1910 = vmatpush2.msra.mxu0 0.0
        %1911 = vmatprep.subr.mxu0 0.0
        %1912 = vmatpush2.msra.mxu0 0.0
        %1913 = vmatprep.subr.mxu0 0.0
        %1914 = vmatpush2.msra.mxu0 0.0
        %1915 = vmatprep.mubr.f32.mxu0 0.0
        %1916 = vmatmul.mubr.f32.gmra.mxu0 %v1762
        %v1917 = vpop.f32.mrf.mxu0
        %v1918 = vadd.f32 0.0, %v1917
        %v1919 = vpop.f32.mrf.mxu0
        %v1920 = vadd.f32 0.0, %v1919
        %1921 = vdwg.mxu0
        %1922 = vmatprep.subr.mxu0 0.0
        %1923 = vmatpush1.msra.mxu0 0.0
        %1924 = vmatprep.subr.mxu0 0.0
        %1925 = vmatpush1.msra.mxu0 0.0
        %1926 = vmatprep.subr.mxu0 0.0
        %1927 = vmatpush1.msra.mxu0 0.0
        %1928 = vmatprep.subr.mxu0 0.0
        %1929 = vmatpush1.msra.mxu0 0.0
        %1930 = vmatprep.subr.mxu0 0.0
        %1931 = vmatpush1.msra.mxu0 0.0
        %1932 = vmatprep.subr.mxu0 0.0
        %1933 = vmatpush1.msra.mxu0 0.0
        %1934 = vmatprep.subr.mxu0 0.0
        %1935 = vmatpush1.msra.mxu0 0.0
        %1936 = vmatprep.subr.mxu0 0.0
        %1937 = vmatpush1.msra.mxu0 0.0
        %1938 = vmatprep.subr.mxu0 0.0
        %1939 = vmatpush1.msra.mxu0 0.0
        %1940 = vmatprep.subr.mxu0 0.0
        %1941 = vmatpush1.msra.mxu0 0.0
        %1942 = vmatprep.subr.mxu0 0.0
        %1943 = vmatpush1.msra.mxu0 0.0
        %1944 = vmatprep.subr.mxu0 0.0
        %1945 = vmatpush1.msra.mxu0 0.0
        %1946 = vmatprep.subr.mxu0 0.0
        %1947 = vmatpush1.msra.mxu0 0.0
        %1948 = vmatprep.subr.mxu0 0.0
        %1949 = vmatpush1.msra.mxu0 0.0
        %1950 = vmatprep.subr.mxu0 0.0
        %1951 = vmatpush1.msra.mxu0 0.0
        %1952 = vmatprep.subr.mxu0 %v1774
        %1953 = vmatpush1.msra.mxu0 %v1772
        %1954 = vmatprep.subr.mxu0 0.0
        %1955 = vmatpush2.msra.mxu0 0.0
        %1956 = vmatprep.subr.mxu0 0.0
        %1957 = vmatpush2.msra.mxu0 0.0
        %1958 = vmatprep.subr.mxu0 0.0
        %1959 = vmatpush2.msra.mxu0 0.0
        %1960 = vmatprep.subr.mxu0 0.0
        %1961 = vmatpush2.msra.mxu0 0.0
        %1962 = vmatprep.subr.mxu0 0.0
        %1963 = vmatpush2.msra.mxu0 0.0
        %1964 = vmatprep.subr.mxu0 0.0
        %1965 = vmatpush2.msra.mxu0 0.0
        %1966 = vmatprep.subr.mxu0 0.0
        %1967 = vmatpush2.msra.mxu0 0.0
        %1968 = vmatprep.subr.mxu0 0.0
        %1969 = vmatpush2.msra.mxu0 0.0
        %1970 = vmatprep.subr.mxu0 0.0
        %1971 = vmatpush2.msra.mxu0 0.0
        %1972 = vmatprep.subr.mxu0 0.0
        %1973 = vmatpush2.msra.mxu0 0.0
        %1974 = vmatprep.subr.mxu0 0.0
        %1975 = vmatpush2.msra.mxu0 0.0
        %1976 = vmatprep.subr.mxu0 0.0
        %1977 = vmatpush2.msra.mxu0 0.0
        %1978 = vmatprep.subr.mxu0 0.0
        %1979 = vmatpush2.msra.mxu0 0.0
        %1980 = vmatprep.subr.mxu0 0.0
        %1981 = vmatpush2.msra.mxu0 0.0
        %1982 = vmatprep.subr.mxu0 0.0
        %1983 = vmatpush2.msra.mxu0 0.0
        %1984 = vmatprep.subr.mxu0 0.0
        %1985 = vmatpush2.msra.mxu0 0.0
        %1986 = vmatprep.mubr.f32.mxu0 0.0
        %1987 = vmatmul.mubr.f32.gmra.mxu0 %v1762
        %v1988 = vpop.f32.mrf.mxu0
        %v1989 = vadd.f32 0.0, %v1988
        %v1990 = vpop.f32.mrf.mxu0
        %v1991 = vadd.f32 0.0, %v1990
        %1992 = vdwg.mxu0
        %1993 = vmatprep.subr.mxu0 0.0
        %1994 = vmatpush1.msra.mxu0 0.0
        %1995 = vmatprep.subr.mxu0 0.0
        %1996 = vmatpush1.msra.mxu0 0.0
        %1997 = vmatprep.subr.mxu0 0.0
        %1998 = vmatpush1.msra.mxu0 0.0
        %1999 = vmatprep.subr.mxu0 0.0
        %2000 = vmatpush1.msra.mxu0 0.0
        %2001 = vmatprep.subr.mxu0 0.0
        %2002 = vmatpush1.msra.mxu0 0.0
        %2003 = vmatprep.subr.mxu0 0.0
        %2004 = vmatpush1.msra.mxu0 0.0
        %2005 = vmatprep.subr.mxu0 0.0
        %2006 = vmatpush1.msra.mxu0 0.0
        %2007 = vmatprep.subr.mxu0 0.0
        %2008 = vmatpush1.msra.mxu0 0.0
        %2009 = vmatprep.subr.mxu0 0.0
        %2010 = vmatpush1.msra.mxu0 0.0
        %2011 = vmatprep.subr.mxu0 0.0
        %2012 = vmatpush1.msra.mxu0 0.0
        %2013 = vmatprep.subr.mxu0 0.0
        %2014 = vmatpush1.msra.mxu0 0.0
        %2015 = vmatprep.subr.mxu0 0.0
        %2016 = vmatpush1.msra.mxu0 0.0
        %2017 = vmatprep.subr.mxu0 0.0
        %2018 = vmatpush1.msra.mxu0 0.0
        %2019 = vmatprep.subr.mxu0 0.0
        %2020 = vmatpush1.msra.mxu0 0.0
        %2021 = vmatprep.subr.mxu0 0.0
        %2022 = vmatpush1.msra.mxu0 0.0
        %2023 = vmatprep.subr.mxu0 %v1778
        %2024 = vmatpush1.msra.mxu0 %v1776
        %2025 = vmatprep.subr.mxu0 0.0
        %2026 = vmatpush2.msra.mxu0 0.0
        %2027 = vmatprep.subr.mxu0 0.0
        %2028 = vmatpush2.msra.mxu0 0.0
        %2029 = vmatprep.subr.mxu0 0.0
        %2030 = vmatpush2.msra.mxu0 0.0
        %2031 = vmatprep.subr.mxu0 0.0
        %2032 = vmatpush2.msra.mxu0 0.0
        %2033 = vmatprep.subr.mxu0 0.0
        %2034 = vmatpush2.msra.mxu0 0.0
        %2035 = vmatprep.subr.mxu0 0.0
        %2036 = vmatpush2.msra.mxu0 0.0
        %2037 = vmatprep.subr.mxu0 0.0
        %2038 = vmatpush2.msra.mxu0 0.0
        %2039 = vmatprep.subr.mxu0 0.0
        %2040 = vmatpush2.msra.mxu0 0.0
        %2041 = vmatprep.subr.mxu0 0.0
        %2042 = vmatpush2.msra.mxu0 0.0
        %2043 = vmatprep.subr.mxu0 0.0
        %2044 = vmatpush2.msra.mxu0 0.0
        %2045 = vmatprep.subr.mxu0 0.0
        %2046 = vmatpush2.msra.mxu0 0.0
        %2047 = vmatprep.subr.mxu0 0.0
        %2048 = vmatpush2.msra.mxu0 0.0
        %2049 = vmatprep.subr.mxu0 0.0
        %2050 = vmatpush2.msra.mxu0 0.0
        %2051 = vmatprep.subr.mxu0 0.0
        %2052 = vmatpush2.msra.mxu0 0.0
        %2053 = vmatprep.subr.mxu0 0.0
        %2054 = vmatpush2.msra.mxu0 0.0
        %2055 = vmatprep.subr.mxu0 0.0
        %2056 = vmatpush2.msra.mxu0 0.0
        %2057 = vmatprep.mubr.f32.mxu0 0.0
        %2058 = vmatmul.mubr.f32.gmra.mxu0 %v1762
        %v2059 = vpop.f32.mrf.mxu0
        %v2060 = vadd.f32 0.0, %v2059
        %v2061 = vpop.f32.mrf.mxu0
        %v2062 = vadd.f32 0.0, %v2061
        %2063 = vdwg.mxu0
        %v2064 = vadd.f32 %v1429, %v1847
        %v2065 = vadd.f32 %v1431, %v1849
        %v2066 = vadd.f32 %v1500, %v1918
        %v2067 = vadd.f32 %v1502, %v1920
        %v2068 = vadd.f32 %v1571, %v1989
        %v2069 = vadd.f32 %v1573, %v1991
        %v2070 = vadd.f32 %v1642, %v2060
        %v2071 = vadd.f32 %v1644, %v2062
        %2072 = vrot.lane.b32.xlu0 %v946, 32
        %v2073 = vpop.permute.xlu0 %2072
        %2074 = vrot.lane.b32.xlu0 %v950, 32
        %v2075 = vpop.permute.xlu0 %2074
        %2076 = vrot.lane.b32.xlu0 %v954, 32
        %v2077 = vpop.permute.xlu0 %2076
        %2078 = vrot.lane.b32.xlu0 %v958, 32
        %v2079 = vpop.permute.xlu0 %2078
        %2080 = vrot.lane.b32.xlu0 %v962, 32
        %v2081 = vpop.permute.xlu0 %2080
        %2082 = vrot.lane.b32.xlu0 %v966, 32
        %v2083 = vpop.permute.xlu0 %2082
        %2084 = vrot.lane.b32.xlu0 %v970, 32
        %v2085 = vpop.permute.xlu0 %2084
        %2086 = vrot.lane.b32.xlu0 %v974, 32
        %v2087 = vpop.permute.xlu0 %2086
        %vm2088 = vcmask 261120
        %v2089 = vsel %vm2088, %v2073, %v2075
        %v2090 = vsel %vm2088, %v2075, %v2077
        %v2091 = vsel %vm2088, %v2077, %v2079
        %v2092 = vsel %vm2088, %v2079, %v2081
        %v2093 = vsel %vm2088, %v2081, %v2083
        %v2094 = vsel %vm2088, %v2083, %v2085
        %v2095 = vsel %vm2088, %v2085, %v2087
        %v2105 = vmul.f32 %v654, %v2073
        %v2106 = vmul.f32 %v656, %v2089
        %v2107 = vmul.f32 %v725, %v2090
        %v2108 = vmul.f32 %v727, %v2091
        %v2109 = vmul.f32 %v796, %v2092
        %v2110 = vmul.f32 %v798, %v2093
        %v2111 = vmul.f32 %v867, %v2094
        %v2112 = vmul.f32 %v869, %v2095
        %v2113 = vmul.f32 %v938, %v2087
        %s2114 = scalar_lea.vmem %s2, 24
        %v2115 = vld [vmem:[%s2114] sm:$0xff]
        %2125 = vrot.lane.b32.xlu0 %v2105, 96
        %v2126 = vpop.permute.xlu0 %2125
        %2127 = vrot.lane.b32.xlu0 %v2106, 96
        %v2128 = vpop.permute.xlu0 %2127
        %2129 = vrot.lane.b32.xlu0 %v2107, 96
        %v2130 = vpop.permute.xlu0 %2129
        %2131 = vrot.lane.b32.xlu0 %v2108, 96
        %v2132 = vpop.permute.xlu0 %2131
        %2133 = vrot.lane.b32.xlu0 %v2109, 96
        %v2134 = vpop.permute.xlu0 %2133
        %2135 = vrot.lane.b32.xlu0 %v2110, 96
        %v2136 = vpop.permute.xlu0 %2135
        %2137 = vrot.lane.b32.xlu0 %v2111, 96
        %v2138 = vpop.permute.xlu0 %2137
        %2139 = vrot.lane.b32.xlu0 %v2112, 96
        %v2140 = vpop.permute.xlu0 %2139
        %2141 = vrot.lane.b32.xlu0 %v2113, 96
        %v2142 = vpop.permute.xlu0 %2141
        %vm2143 = vcmask 785408
        %v2144 = vsel %vm2143, %v2126, %v2128
        %v2145 = vsel %vm2143, %v2128, %v2130
        %v2146 = vsel %vm2143, %v2130, %v2132
        %v2147 = vsel %vm2143, %v2132, %v2134
        %v2148 = vsel %vm2143, %v2134, %v2136
        %v2149 = vsel %vm2143, %v2136, %v2138
        %v2150 = vsel %vm2143, %v2138, %v2140
        %v2151 = vsel %vm2143, %v2140, %v2142
        %v2153 = vsel %vm1030, %v2115, 0
        %v2155 = vsel %vm1034, %v2144, 0
        %v2157 = vsel %vm1034, %v2145, 0
        %v2159 = vsel %vm1034, %v2146, 0
        %v2161 = vsel %vm1034, %v2147, 0
        %v2163 = vsel %vm1034, %v2148, 0
        %v2165 = vsel %vm1034, %v2149, 0
        %v2167 = vsel %vm1034, %v2150, 0
        %v2169 = vsel %vm1034, %v2151, 0
        %2171 = vmatprep.subr.mxu0 0.0
        %2172 = vmatpush1.msra.mxu0 0.0
        %2173 = vmatprep.subr.mxu0 0.0
        %2174 = vmatpush1.msra.mxu0 0.0
        %2175 = vmatprep.subr.mxu0 0.0
        %2176 = vmatpush1.msra.mxu0 0.0
        %2177 = vmatprep.subr.mxu0 0.0
        %2178 = vmatpush1.msra.mxu0 0.0
        %2179 = vmatprep.subr.mxu0 0.0
        %2180 = vmatpush1.msra.mxu0 0.0
        %2181 = vmatprep.subr.mxu0 0.0
        %2182 = vmatpush1.msra.mxu0 0.0
        %2183 = vmatprep.subr.mxu0 0.0
        %2184 = vmatpush1.msra.mxu0 0.0
        %2185 = vmatprep.subr.mxu0 0.0
        %2186 = vmatpush1.msra.mxu0 0.0
        %2187 = vmatprep.subr.mxu0 0.0
        %2188 = vmatpush1.msra.mxu0 0.0
        %2189 = vmatprep.subr.mxu0 0.0
        %2190 = vmatpush1.msra.mxu0 0.0
        %2191 = vmatprep.subr.mxu0 0.0
        %2192 = vmatpush1.msra.mxu0 0.0
        %2193 = vmatprep.subr.mxu0 0.0
        %2194 = vmatpush1.msra.mxu0 0.0
        %2195 = vmatprep.subr.mxu0 0.0
        %2196 = vmatpush1.msra.mxu0 0.0
        %2197 = vmatprep.subr.mxu0 0.0
        %2198 = vmatpush1.msra.mxu0 0.0
        %2199 = vmatprep.subr.mxu0 0.0
        %2200 = vmatpush1.msra.mxu0 0.0
        %2201 = vmatprep.subr.mxu0 %v2157
        %2202 = vmatpush1.msra.mxu0 %v2155
        %2203 = vmatprep.subr.mxu0 0.0
        %2204 = vmatpush2.msra.mxu0 0.0
        %2205 = vmatprep.subr.mxu0 0.0
        %2206 = vmatpush2.msra.mxu0 0.0
        %2207 = vmatprep.subr.mxu0 0.0
        %2208 = vmatpush2.msra.mxu0 0.0
        %2209 = vmatprep.subr.mxu0 0.0
        %2210 = vmatpush2.msra.mxu0 0.0
        %2211 = vmatprep.subr.mxu0 0.0
        %2212 = vmatpush2.msra.mxu0 0.0
        %2213 = vmatprep.subr.mxu0 0.0
        %2214 = vmatpush2.msra.mxu0 0.0
        %2215 = vmatprep.subr.mxu0 0.0
        %2216 = vmatpush2.msra.mxu0 0.0
        %2217 = vmatprep.subr.mxu0 0.0
        %2218 = vmatpush2.msra.mxu0 0.0
        %2219 = vmatprep.subr.mxu0 0.0
        %2220 = vmatpush2.msra.mxu0 0.0
        %2221 = vmatprep.subr.mxu0 0.0
        %2222 = vmatpush2.msra.mxu0 0.0
        %2223 = vmatprep.subr.mxu0 0.0
        %2224 = vmatpush2.msra.mxu0 0.0
        %2225 = vmatprep.subr.mxu0 0.0
        %2226 = vmatpush2.msra.mxu0 0.0
        %2227 = vmatprep.subr.mxu0 0.0
        %2228 = vmatpush2.msra.mxu0 0.0
        %2229 = vmatprep.subr.mxu0 0.0
        %2230 = vmatpush2.msra.mxu0 0.0
        %2231 = vmatprep.subr.mxu0 0.0
        %2232 = vmatpush2.msra.mxu0 0.0
        %2233 = vmatprep.subr.mxu0 0.0
        %2234 = vmatpush2.msra.mxu0 0.0
        %2235 = vmatprep.mubr.f32.mxu0 0.0
        %2236 = vmatmul.mubr.f32.gmra.mxu0 %v2153
        %v2237 = vpop.f32.mrf.mxu0
        %v2238 = vadd.f32 0.0, %v2237
        %v2239 = vpop.f32.mrf.mxu0
        %v2240 = vadd.f32 0.0, %v2239
        %2241 = vdwg.mxu0
        %2242 = vmatprep.subr.mxu0 0.0
        %2243 = vmatpush1.msra.mxu0 0.0
        %2244 = vmatprep.subr.mxu0 0.0
        %2245 = vmatpush1.msra.mxu0 0.0
        %2246 = vmatprep.subr.mxu0 0.0
        %2247 = vmatpush1.msra.mxu0 0.0
        %2248 = vmatprep.subr.mxu0 0.0
        %2249 = vmatpush1.msra.mxu0 0.0
        %2250 = vmatprep.subr.mxu0 0.0
        %2251 = vmatpush1.msra.mxu0 0.0
        %2252 = vmatprep.subr.mxu0 0.0
        %2253 = vmatpush1.msra.mxu0 0.0
        %2254 = vmatprep.subr.mxu0 0.0
        %2255 = vmatpush1.msra.mxu0 0.0
        %2256 = vmatprep.subr.mxu0 0.0
        %2257 = vmatpush1.msra.mxu0 0.0
        %2258 = vmatprep.subr.mxu0 0.0
        %2259 = vmatpush1.msra.mxu0 0.0
        %2260 = vmatprep.subr.mxu0 0.0
        %2261 = vmatpush1.msra.mxu0 0.0
        %2262 = vmatprep.subr.mxu0 0.0
        %2263 = vmatpush1.msra.mxu0 0.0
        %2264 = vmatprep.subr.mxu0 0.0
        %2265 = vmatpush1.msra.mxu0 0.0
        %2266 = vmatprep.subr.mxu0 0.0
        %2267 = vmatpush1.msra.mxu0 0.0
        %2268 = vmatprep.subr.mxu0 0.0
        %2269 = vmatpush1.msra.mxu0 0.0
        %2270 = vmatprep.subr.mxu0 0.0
        %2271 = vmatpush1.msra.mxu0 0.0
        %2272 = vmatprep.subr.mxu0 %v2161
        %2273 = vmatpush1.msra.mxu0 %v2159
        %2274 = vmatprep.subr.mxu0 0.0
        %2275 = vmatpush2.msra.mxu0 0.0
        %2276 = vmatprep.subr.mxu0 0.0
        %2277 = vmatpush2.msra.mxu0 0.0
        %2278 = vmatprep.subr.mxu0 0.0
        %2279 = vmatpush2.msra.mxu0 0.0
        %2280 = vmatprep.subr.mxu0 0.0
        %2281 = vmatpush2.msra.mxu0 0.0
        %2282 = vmatprep.subr.mxu0 0.0
        %2283 = vmatpush2.msra.mxu0 0.0
        %2284 = vmatprep.subr.mxu0 0.0
        %2285 = vmatpush2.msra.mxu0 0.0
        %2286 = vmatprep.subr.mxu0 0.0
        %2287 = vmatpush2.msra.mxu0 0.0
        %2288 = vmatprep.subr.mxu0 0.0
        %2289 = vmatpush2.msra.mxu0 0.0
        %2290 = vmatprep.subr.mxu0 0.0
        %2291 = vmatpush2.msra.mxu0 0.0
        %2292 = vmatprep.subr.mxu0 0.0
        %2293 = vmatpush2.msra.mxu0 0.0
        %2294 = vmatprep.subr.mxu0 0.0
        %2295 = vmatpush2.msra.mxu0 0.0
        %2296 = vmatprep.subr.mxu0 0.0
        %2297 = vmatpush2.msra.mxu0 0.0
        %2298 = vmatprep.subr.mxu0 0.0
        %2299 = vmatpush2.msra.mxu0 0.0
        %2300 = vmatprep.subr.mxu0 0.0
        %2301 = vmatpush2.msra.mxu0 0.0
        %2302 = vmatprep.subr.mxu0 0.0
        %2303 = vmatpush2.msra.mxu0 0.0
        %2304 = vmatprep.subr.mxu0 0.0
        %2305 = vmatpush2.msra.mxu0 0.0
        %2306 = vmatprep.mubr.f32.mxu0 0.0
        %2307 = vmatmul.mubr.f32.gmra.mxu0 %v2153
        %v2308 = vpop.f32.mrf.mxu0
        %v2309 = vadd.f32 0.0, %v2308
        %v2310 = vpop.f32.mrf.mxu0
        %v2311 = vadd.f32 0.0, %v2310
        %2312 = vdwg.mxu0
        %2313 = vmatprep.subr.mxu0 0.0
        %2314 = vmatpush1.msra.mxu0 0.0
        %2315 = vmatprep.subr.mxu0 0.0
        %2316 = vmatpush1.msra.mxu0 0.0
        %2317 = vmatprep.subr.mxu0 0.0
        %2318 = vmatpush1.msra.mxu0 0.0
        %2319 = vmatprep.subr.mxu0 0.0
        %2320 = vmatpush1.msra.mxu0 0.0
        %2321 = vmatprep.subr.mxu0 0.0
        %2322 = vmatpush1.msra.mxu0 0.0
        %2323 = vmatprep.subr.mxu0 0.0
        %2324 = vmatpush1.msra.mxu0 0.0
        %2325 = vmatprep.subr.mxu0 0.0
        %2326 = vmatpush1.msra.mxu0 0.0
        %2327 = vmatprep.subr.mxu0 0.0
        %2328 = vmatpush1.msra.mxu0 0.0
        %2329 = vmatprep.subr.mxu0 0.0
        %2330 = vmatpush1.msra.mxu0 0.0
        %2331 = vmatprep.subr.mxu0 0.0
        %2332 = vmatpush1.msra.mxu0 0.0
        %2333 = vmatprep.subr.mxu0 0.0
        %2334 = vmatpush1.msra.mxu0 0.0
        %2335 = vmatprep.subr.mxu0 0.0
        %2336 = vmatpush1.msra.mxu0 0.0
        %2337 = vmatprep.subr.mxu0 0.0
        %2338 = vmatpush1.msra.mxu0 0.0
        %2339 = vmatprep.subr.mxu0 0.0
        %2340 = vmatpush1.msra.mxu0 0.0
        %2341 = vmatprep.subr.mxu0 0.0
        %2342 = vmatpush1.msra.mxu0 0.0
        %2343 = vmatprep.subr.mxu0 %v2165
        %2344 = vmatpush1.msra.mxu0 %v2163
        %2345 = vmatprep.subr.mxu0 0.0
        %2346 = vmatpush2.msra.mxu0 0.0
        %2347 = vmatprep.subr.mxu0 0.0
        %2348 = vmatpush2.msra.mxu0 0.0
        %2349 = vmatprep.subr.mxu0 0.0
        %2350 = vmatpush2.msra.mxu0 0.0
        %2351 = vmatprep.subr.mxu0 0.0
        %2352 = vmatpush2.msra.mxu0 0.0
        %2353 = vmatprep.subr.mxu0 0.0
        %2354 = vmatpush2.msra.mxu0 0.0
        %2355 = vmatprep.subr.mxu0 0.0
        %2356 = vmatpush2.msra.mxu0 0.0
        %2357 = vmatprep.subr.mxu0 0.0
        %2358 = vmatpush2.msra.mxu0 0.0
        %2359 = vmatprep.subr.mxu0 0.0
        %2360 = vmatpush2.msra.mxu0 0.0
        %2361 = vmatprep.subr.mxu0 0.0
        %2362 = vmatpush2.msra.mxu0 0.0
        %2363 = vmatprep.subr.mxu0 0.0
        %2364 = vmatpush2.msra.mxu0 0.0
        %2365 = vmatprep.subr.mxu0 0.0
        %2366 = vmatpush2.msra.mxu0 0.0
        %2367 = vmatprep.subr.mxu0 0.0
        %2368 = vmatpush2.msra.mxu0 0.0
        %2369 = vmatprep.subr.mxu0 0.0
        %2370 = vmatpush2.msra.mxu0 0.0
        %2371 = vmatprep.subr.mxu0 0.0
        %2372 = vmatpush2.msra.mxu0 0.0
        %2373 = vmatprep.subr.mxu0 0.0
        %2374 = vmatpush2.msra.mxu0 0.0
        %2375 = vmatprep.subr.mxu0 0.0
        %2376 = vmatpush2.msra.mxu0 0.0
        %2377 = vmatprep.mubr.f32.mxu0 0.0
        %2378 = vmatmul.mubr.f32.gmra.mxu0 %v2153
        %v2379 = vpop.f32.mrf.mxu0
        %v2380 = vadd.f32 0.0, %v2379
        %v2381 = vpop.f32.mrf.mxu0
        %v2382 = vadd.f32 0.0, %v2381
        %2383 = vdwg.mxu0
        %2384 = vmatprep.subr.mxu0 0.0
        %2385 = vmatpush1.msra.mxu0 0.0
        %2386 = vmatprep.subr.mxu0 0.0
        %2387 = vmatpush1.msra.mxu0 0.0
        %2388 = vmatprep.subr.mxu0 0.0
        %2389 = vmatpush1.msra.mxu0 0.0
        %2390 = vmatprep.subr.mxu0 0.0
        %2391 = vmatpush1.msra.mxu0 0.0
        %2392 = vmatprep.subr.mxu0 0.0
        %2393 = vmatpush1.msra.mxu0 0.0
        %2394 = vmatprep.subr.mxu0 0.0
        %2395 = vmatpush1.msra.mxu0 0.0
        %2396 = vmatprep.subr.mxu0 0.0
        %2397 = vmatpush1.msra.mxu0 0.0
        %2398 = vmatprep.subr.mxu0 0.0
        %2399 = vmatpush1.msra.mxu0 0.0
        %2400 = vmatprep.subr.mxu0 0.0
        %2401 = vmatpush1.msra.mxu0 0.0
        %2402 = vmatprep.subr.mxu0 0.0
        %2403 = vmatpush1.msra.mxu0 0.0
        %2404 = vmatprep.subr.mxu0 0.0
        %2405 = vmatpush1.msra.mxu0 0.0
        %2406 = vmatprep.subr.mxu0 0.0
        %2407 = vmatpush1.msra.mxu0 0.0
        %2408 = vmatprep.subr.mxu0 0.0
        %2409 = vmatpush1.msra.mxu0 0.0
        %2410 = vmatprep.subr.mxu0 0.0
        %2411 = vmatpush1.msra.mxu0 0.0
        %2412 = vmatprep.subr.mxu0 0.0
        %2413 = vmatpush1.msra.mxu0 0.0
        %2414 = vmatprep.subr.mxu0 %v2169
        %2415 = vmatpush1.msra.mxu0 %v2167
        %2416 = vmatprep.subr.mxu0 0.0
        %2417 = vmatpush2.msra.mxu0 0.0
        %2418 = vmatprep.subr.mxu0 0.0
        %2419 = vmatpush2.msra.mxu0 0.0
        %2420 = vmatprep.subr.mxu0 0.0
        %2421 = vmatpush2.msra.mxu0 0.0
        %2422 = vmatprep.subr.mxu0 0.0
        %2423 = vmatpush2.msra.mxu0 0.0
        %2424 = vmatprep.subr.mxu0 0.0
        %2425 = vmatpush2.msra.mxu0 0.0
        %2426 = vmatprep.subr.mxu0 0.0
        %2427 = vmatpush2.msra.mxu0 0.0
        %2428 = vmatprep.subr.mxu0 0.0
        %2429 = vmatpush2.msra.mxu0 0.0
        %2430 = vmatprep.subr.mxu0 0.0
        %2431 = vmatpush2.msra.mxu0 0.0
        %2432 = vmatprep.subr.mxu0 0.0
        %2433 = vmatpush2.msra.mxu0 0.0
        %2434 = vmatprep.subr.mxu0 0.0
        %2435 = vmatpush2.msra.mxu0 0.0
        %2436 = vmatprep.subr.mxu0 0.0
        %2437 = vmatpush2.msra.mxu0 0.0
        %2438 = vmatprep.subr.mxu0 0.0
        %2439 = vmatpush2.msra.mxu0 0.0
        %2440 = vmatprep.subr.mxu0 0.0
        %2441 = vmatpush2.msra.mxu0 0.0
        %2442 = vmatprep.subr.mxu0 0.0
        %2443 = vmatpush2.msra.mxu0 0.0
        %2444 = vmatprep.subr.mxu0 0.0
        %2445 = vmatpush2.msra.mxu0 0.0
        %2446 = vmatprep.subr.mxu0 0.0
        %2447 = vmatpush2.msra.mxu0 0.0
        %2448 = vmatprep.mubr.f32.mxu0 0.0
        %2449 = vmatmul.mubr.f32.gmra.mxu0 %v2153
        %v2450 = vpop.f32.mrf.mxu0
        %v2451 = vadd.f32 0.0, %v2450
        %v2452 = vpop.f32.mrf.mxu0
        %v2453 = vadd.f32 0.0, %v2452
        %2454 = vdwg.mxu0
        %v2455 = vadd.f32 %v2064, %v2238
        %v2456 = vadd.f32 %v2065, %v2240
        %v2457 = vadd.f32 %v2066, %v2309
        %v2458 = vadd.f32 %v2067, %v2311
        %v2459 = vadd.f32 %v2068, %v2380
        %v2460 = vadd.f32 %v2069, %v2382
        %v2461 = vadd.f32 %v2070, %v2451
        %v2462 = vadd.f32 %v2071, %v2453
        %s2463 = scalar_lea.vmem %s2, 32
        %v2464 = vld [vmem:[%s2463] sm:$0xff]
        %2465 = vrot.lane.b32.xlu0 %v654, 95
        %v2466 = vpop.permute.xlu0 %2465
        %2467 = vrot.lane.b32.xlu0 %v656, 95
        %v2468 = vpop.permute.xlu0 %2467
        %2469 = vrot.lane.b32.xlu0 %v725, 95
        %v2470 = vpop.permute.xlu0 %2469
        %2471 = vrot.lane.b32.xlu0 %v727, 95
        %v2472 = vpop.permute.xlu0 %2471
        %2473 = vrot.lane.b32.xlu0 %v796, 95
        %v2474 = vpop.permute.xlu0 %2473
        %2475 = vrot.lane.b32.xlu0 %v798, 95
        %v2476 = vpop.permute.xlu0 %2475
        %2477 = vrot.lane.b32.xlu0 %v867, 95
        %v2478 = vpop.permute.xlu0 %2477
        %2479 = vrot.lane.b32.xlu0 %v869, 95
        %v2480 = vpop.permute.xlu0 %2479
        %2481 = vrot.lane.b32.xlu0 %v938, 95
        %v2482 = vpop.permute.xlu0 %2481
        %vm2483 = vcmask 777216
        %v2484 = vsel %vm2483, %v2466, %v2468
        %v2485 = vsel %vm2483, %v2468, %v2470
        %v2486 = vsel %vm2483, %v2470, %v2472
        %v2487 = vsel %vm2483, %v2472, %v2474
        %v2488 = vsel %vm2483, %v2474, %v2476
        %v2489 = vsel %vm2483, %v2476, %v2478
        %v2490 = vsel %vm2483, %v2478, %v2480
        %v2491 = vsel %vm2483, %v2480, %v2482
        %v2493 = vsel %vm1030, %v2464, 0
        %v2495 = vsel %vm1034, %v2484, 0
        %v2497 = vsel %vm1034, %v2485, 0
        %v2499 = vsel %vm1034, %v2486, 0
        %v2501 = vsel %vm1034, %v2487, 0
        %v2503 = vsel %vm1034, %v2488, 0
        %v2505 = vsel %vm1034, %v2489, 0
        %v2507 = vsel %vm1034, %v2490, 0
        %v2509 = vsel %vm1034, %v2491, 0
        %2511 = vmatprep.subr.mxu0 0.0
        %2512 = vmatpush1.msra.mxu0 0.0
        %2513 = vmatprep.subr.mxu0 0.0
        %2514 = vmatpush1.msra.mxu0 0.0
        %2515 = vmatprep.subr.mxu0 0.0
        %2516 = vmatpush1.msra.mxu0 0.0
        %2517 = vmatprep.subr.mxu0 0.0
        %2518 = vmatpush1.msra.mxu0 0.0
        %2519 = vmatprep.subr.mxu0 0.0
        %2520 = vmatpush1.msra.mxu0 0.0
        %2521 = vmatprep.subr.mxu0 0.0
        %2522 = vmatpush1.msra.mxu0 0.0
        %2523 = vmatprep.subr.mxu0 0.0
        %2524 = vmatpush1.msra.mxu0 0.0
        %2525 = vmatprep.subr.mxu0 0.0
        %2526 = vmatpush1.msra.mxu0 0.0
        %2527 = vmatprep.subr.mxu0 0.0
        %2528 = vmatpush1.msra.mxu0 0.0
        %2529 = vmatprep.subr.mxu0 0.0
        %2530 = vmatpush1.msra.mxu0 0.0
        %2531 = vmatprep.subr.mxu0 0.0
        %2532 = vmatpush1.msra.mxu0 0.0
        %2533 = vmatprep.subr.mxu0 0.0
        %2534 = vmatpush1.msra.mxu0 0.0
        %2535 = vmatprep.subr.mxu0 0.0
        %2536 = vmatpush1.msra.mxu0 0.0
        %2537 = vmatprep.subr.mxu0 0.0
        %2538 = vmatpush1.msra.mxu0 0.0
        %2539 = vmatprep.subr.mxu0 0.0
        %2540 = vmatpush1.msra.mxu0 0.0
        %2541 = vmatprep.subr.mxu0 %v2497
        %2542 = vmatpush1.msra.mxu0 %v2495
        %2543 = vmatprep.subr.mxu0 0.0
        %2544 = vmatpush2.msra.mxu0 0.0
        %2545 = vmatprep.subr.mxu0 0.0
        %2546 = vmatpush2.msra.mxu0 0.0
        %2547 = vmatprep.subr.mxu0 0.0
        %2548 = vmatpush2.msra.mxu0 0.0
        %2549 = vmatprep.subr.mxu0 0.0
        %2550 = vmatpush2.msra.mxu0 0.0
        %2551 = vmatprep.subr.mxu0 0.0
        %2552 = vmatpush2.msra.mxu0 0.0
        %2553 = vmatprep.subr.mxu0 0.0
        %2554 = vmatpush2.msra.mxu0 0.0
        %2555 = vmatprep.subr.mxu0 0.0
        %2556 = vmatpush2.msra.mxu0 0.0
        %2557 = vmatprep.subr.mxu0 0.0
        %2558 = vmatpush2.msra.mxu0 0.0
        %2559 = vmatprep.subr.mxu0 0.0
        %2560 = vmatpush2.msra.mxu0 0.0
        %2561 = vmatprep.subr.mxu0 0.0
        %2562 = vmatpush2.msra.mxu0 0.0
        %2563 = vmatprep.subr.mxu0 0.0
        %2564 = vmatpush2.msra.mxu0 0.0
        %2565 = vmatprep.subr.mxu0 0.0
        %2566 = vmatpush2.msra.mxu0 0.0
        %2567 = vmatprep.subr.mxu0 0.0
        %2568 = vmatpush2.msra.mxu0 0.0
        %2569 = vmatprep.subr.mxu0 0.0
        %2570 = vmatpush2.msra.mxu0 0.0
        %2571 = vmatprep.subr.mxu0 0.0
        %2572 = vmatpush2.msra.mxu0 0.0
        %2573 = vmatprep.subr.mxu0 0.0
        %2574 = vmatpush2.msra.mxu0 0.0
        %2575 = vmatprep.mubr.f32.mxu0 0.0
        %2576 = vmatmul.mubr.f32.gmra.mxu0 %v2493
        %v2577 = vpop.f32.mrf.mxu0
        %v2578 = vadd.f32 0.0, %v2577
        %v2579 = vpop.f32.mrf.mxu0
        %v2580 = vadd.f32 0.0, %v2579
        %2581 = vdwg.mxu0
        %2582 = vmatprep.subr.mxu0 0.0
        %2583 = vmatpush1.msra.mxu0 0.0
        %2584 = vmatprep.subr.mxu0 0.0
        %2585 = vmatpush1.msra.mxu0 0.0
        %2586 = vmatprep.subr.mxu0 0.0
        %2587 = vmatpush1.msra.mxu0 0.0
        %2588 = vmatprep.subr.mxu0 0.0
        %2589 = vmatpush1.msra.mxu0 0.0
        %2590 = vmatprep.subr.mxu0 0.0
        %2591 = vmatpush1.msra.mxu0 0.0
        %2592 = vmatprep.subr.mxu0 0.0
        %2593 = vmatpush1.msra.mxu0 0.0
        %2594 = vmatprep.subr.mxu0 0.0
        %2595 = vmatpush1.msra.mxu0 0.0
        %2596 = vmatprep.subr.mxu0 0.0
        %2597 = vmatpush1.msra.mxu0 0.0
        %2598 = vmatprep.subr.mxu0 0.0
        %2599 = vmatpush1.msra.mxu0 0.0
        %2600 = vmatprep.subr.mxu0 0.0
        %2601 = vmatpush1.msra.mxu0 0.0
        %2602 = vmatprep.subr.mxu0 0.0
        %2603 = vmatpush1.msra.mxu0 0.0
        %2604 = vmatprep.subr.mxu0 0.0
        %2605 = vmatpush1.msra.mxu0 0.0
        %2606 = vmatprep.subr.mxu0 0.0
        %2607 = vmatpush1.msra.mxu0 0.0
        %2608 = vmatprep.subr.mxu0 0.0
        %2609 = vmatpush1.msra.mxu0 0.0
        %2610 = vmatprep.subr.mxu0 0.0
        %2611 = vmatpush1.msra.mxu0 0.0
        %2612 = vmatprep.subr.mxu0 %v2501
        %2613 = vmatpush1.msra.mxu0 %v2499
        %2614 = vmatprep.subr.mxu0 0.0
        %2615 = vmatpush2.msra.mxu0 0.0
        %2616 = vmatprep.subr.mxu0 0.0
        %2617 = vmatpush2.msra.mxu0 0.0
        %2618 = vmatprep.subr.mxu0 0.0
        %2619 = vmatpush2.msra.mxu0 0.0
        %2620 = vmatprep.subr.mxu0 0.0
        %2621 = vmatpush2.msra.mxu0 0.0
        %2622 = vmatprep.subr.mxu0 0.0
        %2623 = vmatpush2.msra.mxu0 0.0
        %2624 = vmatprep.subr.mxu0 0.0
        %2625 = vmatpush2.msra.mxu0 0.0
        %2626 = vmatprep.subr.mxu0 0.0
        %2627 = vmatpush2.msra.mxu0 0.0
        %2628 = vmatprep.subr.mxu0 0.0
        %2629 = vmatpush2.msra.mxu0 0.0
        %2630 = vmatprep.subr.mxu0 0.0
        %2631 = vmatpush2.msra.mxu0 0.0
        %2632 = vmatprep.subr.mxu0 0.0
        %2633 = vmatpush2.msra.mxu0 0.0
        %2634 = vmatprep.subr.mxu0 0.0
        %2635 = vmatpush2.msra.mxu0 0.0
        %2636 = vmatprep.subr.mxu0 0.0
        %2637 = vmatpush2.msra.mxu0 0.0
        %2638 = vmatprep.subr.mxu0 0.0
        %2639 = vmatpush2.msra.mxu0 0.0
        %2640 = vmatprep.subr.mxu0 0.0
        %2641 = vmatpush2.msra.mxu0 0.0
        %2642 = vmatprep.subr.mxu0 0.0
        %2643 = vmatpush2.msra.mxu0 0.0
        %2644 = vmatprep.subr.mxu0 0.0
        %2645 = vmatpush2.msra.mxu0 0.0
        %2646 = vmatprep.mubr.f32.mxu0 0.0
        %2647 = vmatmul.mubr.f32.gmra.mxu0 %v2493
        %v2648 = vpop.f32.mrf.mxu0
        %v2649 = vadd.f32 0.0, %v2648
        %v2650 = vpop.f32.mrf.mxu0
        %v2651 = vadd.f32 0.0, %v2650
        %2652 = vdwg.mxu0
        %2653 = vmatprep.subr.mxu0 0.0
        %2654 = vmatpush1.msra.mxu0 0.0
        %2655 = vmatprep.subr.mxu0 0.0
        %2656 = vmatpush1.msra.mxu0 0.0
        %2657 = vmatprep.subr.mxu0 0.0
        %2658 = vmatpush1.msra.mxu0 0.0
        %2659 = vmatprep.subr.mxu0 0.0
        %2660 = vmatpush1.msra.mxu0 0.0
        %2661 = vmatprep.subr.mxu0 0.0
        %2662 = vmatpush1.msra.mxu0 0.0
        %2663 = vmatprep.subr.mxu0 0.0
        %2664 = vmatpush1.msra.mxu0 0.0
        %2665 = vmatprep.subr.mxu0 0.0
        %2666 = vmatpush1.msra.mxu0 0.0
        %2667 = vmatprep.subr.mxu0 0.0
        %2668 = vmatpush1.msra.mxu0 0.0
        %2669 = vmatprep.subr.mxu0 0.0
        %2670 = vmatpush1.msra.mxu0 0.0
        %2671 = vmatprep.subr.mxu0 0.0
        %2672 = vmatpush1.msra.mxu0 0.0
        %2673 = vmatprep.subr.mxu0 0.0
        %2674 = vmatpush1.msra.mxu0 0.0
        %2675 = vmatprep.subr.mxu0 0.0
        %2676 = vmatpush1.msra.mxu0 0.0
        %2677 = vmatprep.subr.mxu0 0.0
        %2678 = vmatpush1.msra.mxu0 0.0
        %2679 = vmatprep.subr.mxu0 0.0
        %2680 = vmatpush1.msra.mxu0 0.0
        %2681 = vmatprep.subr.mxu0 0.0
        %2682 = vmatpush1.msra.mxu0 0.0
        %2683 = vmatprep.subr.mxu0 %v2505
        %2684 = vmatpush1.msra.mxu0 %v2503
        %2685 = vmatprep.subr.mxu0 0.0
        %2686 = vmatpush2.msra.mxu0 0.0
        %2687 = vmatprep.subr.mxu0 0.0
        %2688 = vmatpush2.msra.mxu0 0.0
        %2689 = vmatprep.subr.mxu0 0.0
        %2690 = vmatpush2.msra.mxu0 0.0
        %2691 = vmatprep.subr.mxu0 0.0
        %2692 = vmatpush2.msra.mxu0 0.0
        %2693 = vmatprep.subr.mxu0 0.0
        %2694 = vmatpush2.msra.mxu0 0.0
        %2695 = vmatprep.subr.mxu0 0.0
        %2696 = vmatpush2.msra.mxu0 0.0
        %2697 = vmatprep.subr.mxu0 0.0
        %2698 = vmatpush2.msra.mxu0 0.0
        %2699 = vmatprep.subr.mxu0 0.0
        %2700 = vmatpush2.msra.mxu0 0.0
        %2701 = vmatprep.subr.mxu0 0.0
        %2702 = vmatpush2.msra.mxu0 0.0
        %2703 = vmatprep.subr.mxu0 0.0
        %2704 = vmatpush2.msra.mxu0 0.0
        %2705 = vmatprep.subr.mxu0 0.0
        %2706 = vmatpush2.msra.mxu0 0.0
        %2707 = vmatprep.subr.mxu0 0.0
        %2708 = vmatpush2.msra.mxu0 0.0
        %2709 = vmatprep.subr.mxu0 0.0
        %2710 = vmatpush2.msra.mxu0 0.0
        %2711 = vmatprep.subr.mxu0 0.0
        %2712 = vmatpush2.msra.mxu0 0.0
        %2713 = vmatprep.subr.mxu0 0.0
        %2714 = vmatpush2.msra.mxu0 0.0
        %2715 = vmatprep.subr.mxu0 0.0
        %2716 = vmatpush2.msra.mxu0 0.0
        %2717 = vmatprep.mubr.f32.mxu0 0.0
        %2718 = vmatmul.mubr.f32.gmra.mxu0 %v2493
        %v2719 = vpop.f32.mrf.mxu0
        %v2720 = vadd.f32 0.0, %v2719
        %v2721 = vpop.f32.mrf.mxu0
        %v2722 = vadd.f32 0.0, %v2721
        %2723 = vdwg.mxu0
        %2724 = vmatprep.subr.mxu0 0.0
        %2725 = vmatpush1.msra.mxu0 0.0
        %2726 = vmatprep.subr.mxu0 0.0
        %2727 = vmatpush1.msra.mxu0 0.0
        %2728 = vmatprep.subr.mxu0 0.0
        %2729 = vmatpush1.msra.mxu0 0.0
        %2730 = vmatprep.subr.mxu0 0.0
        %2731 = vmatpush1.msra.mxu0 0.0
        %2732 = vmatprep.subr.mxu0 0.0
        %2733 = vmatpush1.msra.mxu0 0.0
        %2734 = vmatprep.subr.mxu0 0.0
        %2735 = vmatpush1.msra.mxu0 0.0
        %2736 = vmatprep.subr.mxu0 0.0
        %2737 = vmatpush1.msra.mxu0 0.0
        %2738 = vmatprep.subr.mxu0 0.0
        %2739 = vmatpush1.msra.mxu0 0.0
        %2740 = vmatprep.subr.mxu0 0.0
        %2741 = vmatpush1.msra.mxu0 0.0
        %2742 = vmatprep.subr.mxu0 0.0
        %2743 = vmatpush1.msra.mxu0 0.0
        %2744 = vmatprep.subr.mxu0 0.0
        %2745 = vmatpush1.msra.mxu0 0.0
        %2746 = vmatprep.subr.mxu0 0.0
        %2747 = vmatpush1.msra.mxu0 0.0
        %2748 = vmatprep.subr.mxu0 0.0
        %2749 = vmatpush1.msra.mxu0 0.0
        %2750 = vmatprep.subr.mxu0 0.0
        %2751 = vmatpush1.msra.mxu0 0.0
        %2752 = vmatprep.subr.mxu0 0.0
        %2753 = vmatpush1.msra.mxu0 0.0
        %2754 = vmatprep.subr.mxu0 %v2509
        %2755 = vmatpush1.msra.mxu0 %v2507
        %2756 = vmatprep.subr.mxu0 0.0
        %2757 = vmatpush2.msra.mxu0 0.0
        %2758 = vmatprep.subr.mxu0 0.0
        %2759 = vmatpush2.msra.mxu0 0.0
        %2760 = vmatprep.subr.mxu0 0.0
        %2761 = vmatpush2.msra.mxu0 0.0
        %2762 = vmatprep.subr.mxu0 0.0
        %2763 = vmatpush2.msra.mxu0 0.0
        %2764 = vmatprep.subr.mxu0 0.0
        %2765 = vmatpush2.msra.mxu0 0.0
        %2766 = vmatprep.subr.mxu0 0.0
        %2767 = vmatpush2.msra.mxu0 0.0
        %2768 = vmatprep.subr.mxu0 0.0
        %2769 = vmatpush2.msra.mxu0 0.0
        %2770 = vmatprep.subr.mxu0 0.0
        %2771 = vmatpush2.msra.mxu0 0.0
        %2772 = vmatprep.subr.mxu0 0.0
        %2773 = vmatpush2.msra.mxu0 0.0
        %2774 = vmatprep.subr.mxu0 0.0
        %2775 = vmatpush2.msra.mxu0 0.0
        %2776 = vmatprep.subr.mxu0 0.0
        %2777 = vmatpush2.msra.mxu0 0.0
        %2778 = vmatprep.subr.mxu0 0.0
        %2779 = vmatpush2.msra.mxu0 0.0
        %2780 = vmatprep.subr.mxu0 0.0
        %2781 = vmatpush2.msra.mxu0 0.0
        %2782 = vmatprep.subr.mxu0 0.0
        %2783 = vmatpush2.msra.mxu0 0.0
        %2784 = vmatprep.subr.mxu0 0.0
        %2785 = vmatpush2.msra.mxu0 0.0
        %2786 = vmatprep.subr.mxu0 0.0
        %2787 = vmatpush2.msra.mxu0 0.0
        %2788 = vmatprep.mubr.f32.mxu0 0.0
        %2789 = vmatmul.mubr.f32.gmra.mxu0 %v2493
        %v2790 = vpop.f32.mrf.mxu0
        %v2791 = vadd.f32 0.0, %v2790
        %v2792 = vpop.f32.mrf.mxu0
        %v2793 = vadd.f32 0.0, %v2792
        %2794 = vdwg.mxu0
        %v2795 = vadd.f32 %v2455, %v2578
        %v2796 = vadd.f32 %v2456, %v2580
        %v2797 = vadd.f32 %v2457, %v2649
        %v2798 = vadd.f32 %v2458, %v2651
        %v2799 = vadd.f32 %v2459, %v2720
        %v2800 = vadd.f32 %v2460, %v2722
        %v2801 = vadd.f32 %v2461, %v2791
        %v2802 = vadd.f32 %v2462, %v2793
        %2803 = vrot.lane.b32.xlu0 %v1652, 34
        %v2804 = vpop.permute.xlu0 %2803
        %2805 = vrot.lane.b32.xlu0 %v1656, 34
        %v2806 = vpop.permute.xlu0 %2805
        %2807 = vrot.lane.b32.xlu0 %v1660, 34
        %v2808 = vpop.permute.xlu0 %2807
        %2809 = vrot.lane.b32.xlu0 %v1664, 34
        %v2810 = vpop.permute.xlu0 %2809
        %2811 = vrot.lane.b32.xlu0 %v1668, 34
        %v2812 = vpop.permute.xlu0 %2811
        %2813 = vrot.lane.b32.xlu0 %v1672, 34
        %v2814 = vpop.permute.xlu0 %2813
        %2815 = vrot.lane.b32.xlu0 %v1676, 34
        %v2816 = vpop.permute.xlu0 %2815
        %2817 = vrot.lane.b32.xlu0 %v1680, 34
        %v2818 = vpop.permute.xlu0 %2817
        %vm2819 = vcmask 277504
        %v2820 = vsel %vm2819, %v2804, %v2806
        %v2821 = vsel %vm2819, %v2806, %v2808
        %v2822 = vsel %vm2819, %v2808, %v2810
        %v2823 = vsel %vm2819, %v2810, %v2812
        %v2824 = vsel %vm2819, %v2812, %v2814
        %v2825 = vsel %vm2819, %v2814, %v2816
        %v2826 = vsel %vm2819, %v2816, %v2818
        %v2836 = vmul.f32 %v654, %v2804
        %v2837 = vmul.f32 %v656, %v2820
        %v2838 = vmul.f32 %v725, %v2821
        %v2839 = vmul.f32 %v727, %v2822
        %v2840 = vmul.f32 %v796, %v2823
        %v2841 = vmul.f32 %v798, %v2824
        %v2842 = vmul.f32 %v867, %v2825
        %v2843 = vmul.f32 %v869, %v2826
        %v2844 = vmul.f32 %v938, %v2818
        %s2845 = scalar_lea.vmem %s2, 40
        %v2846 = vld [vmem:[%s2845] sm:$0xff]
        %2856 = vrot.lane.b32.xlu0 %v2836, 94
        %v2857 = vpop.permute.xlu0 %2856
        %2858 = vrot.lane.b32.xlu0 %v2837, 94
        %v2859 = vpop.permute.xlu0 %2858
        %2860 = vrot.lane.b32.xlu0 %v2838, 94
        %v2861 = vpop.permute.xlu0 %2860
        %2862 = vrot.lane.b32.xlu0 %v2839, 94
        %v2863 = vpop.permute.xlu0 %2862
        %2864 = vrot.lane.b32.xlu0 %v2840, 94
        %v2865 = vpop.permute.xlu0 %2864
        %2866 = vrot.lane.b32.xlu0 %v2841, 94
        %v2867 = vpop.permute.xlu0 %2866
        %2868 = vrot.lane.b32.xlu0 %v2842, 94
        %v2869 = vpop.permute.xlu0 %2868
        %2870 = vrot.lane.b32.xlu0 %v2843, 94
        %v2871 = vpop.permute.xlu0 %2870
        %2872 = vrot.lane.b32.xlu0 %v2844, 94
        %v2873 = vpop.permute.xlu0 %2872
        %vm2874 = vcmask 769024
        %v2875 = vsel %vm2874, %v2857, %v2859
        %v2876 = vsel %vm2874, %v2859, %v2861
        %v2877 = vsel %vm2874, %v2861, %v2863
        %v2878 = vsel %vm2874, %v2863, %v2865
        %v2879 = vsel %vm2874, %v2865, %v2867
        %v2880 = vsel %vm2874, %v2867, %v2869
        %v2881 = vsel %vm2874, %v2869, %v2871
        %v2882 = vsel %vm2874, %v2871, %v2873
        %v2884 = vsel %vm1030, %v2846, 0
        %v2886 = vsel %vm1034, %v2875, 0
        %v2888 = vsel %vm1034, %v2876, 0
        %v2890 = vsel %vm1034, %v2877, 0
        %v2892 = vsel %vm1034, %v2878, 0
        %v2894 = vsel %vm1034, %v2879, 0
        %v2896 = vsel %vm1034, %v2880, 0
        %v2898 = vsel %vm1034, %v2881, 0
        %v2900 = vsel %vm1034, %v2882, 0
        %2902 = vmatprep.subr.mxu0 0.0
        %2903 = vmatpush1.msra.mxu0 0.0
        %2904 = vmatprep.subr.mxu0 0.0
        %2905 = vmatpush1.msra.mxu0 0.0
        %2906 = vmatprep.subr.mxu0 0.0
        %2907 = vmatpush1.msra.mxu0 0.0
        %2908 = vmatprep.subr.mxu0 0.0
        %2909 = vmatpush1.msra.mxu0 0.0
        %2910 = vmatprep.subr.mxu0 0.0
        %2911 = vmatpush1.msra.mxu0 0.0
        %2912 = vmatprep.subr.mxu0 0.0
        %2913 = vmatpush1.msra.mxu0 0.0
        %2914 = vmatprep.subr.mxu0 0.0
        %2915 = vmatpush1.msra.mxu0 0.0
        %2916 = vmatprep.subr.mxu0 0.0
        %2917 = vmatpush1.msra.mxu0 0.0
        %2918 = vmatprep.subr.mxu0 0.0
        %2919 = vmatpush1.msra.mxu0 0.0
        %2920 = vmatprep.subr.mxu0 0.0
        %2921 = vmatpush1.msra.mxu0 0.0
        %2922 = vmatprep.subr.mxu0 0.0
        %2923 = vmatpush1.msra.mxu0 0.0
        %2924 = vmatprep.subr.mxu0 0.0
        %2925 = vmatpush1.msra.mxu0 0.0
        %2926 = vmatprep.subr.mxu0 0.0
        %2927 = vmatpush1.msra.mxu0 0.0
        %2928 = vmatprep.subr.mxu0 0.0
        %2929 = vmatpush1.msra.mxu0 0.0
        %2930 = vmatprep.subr.mxu0 0.0
        %2931 = vmatpush1.msra.mxu0 0.0
        %2932 = vmatprep.subr.mxu0 %v2888
        %2933 = vmatpush1.msra.mxu0 %v2886
        %2934 = vmatprep.subr.mxu0 0.0
        %2935 = vmatpush2.msra.mxu0 0.0
        %2936 = vmatprep.subr.mxu0 0.0
        %2937 = vmatpush2.msra.mxu0 0.0
        %2938 = vmatprep.subr.mxu0 0.0
        %2939 = vmatpush2.msra.mxu0 0.0
        %2940 = vmatprep.subr.mxu0 0.0
        %2941 = vmatpush2.msra.mxu0 0.0
        %2942 = vmatprep.subr.mxu0 0.0
        %2943 = vmatpush2.msra.mxu0 0.0
        %2944 = vmatprep.subr.mxu0 0.0
        %2945 = vmatpush2.msra.mxu0 0.0
        %2946 = vmatprep.subr.mxu0 0.0
        %2947 = vmatpush2.msra.mxu0 0.0
        %2948 = vmatprep.subr.mxu0 0.0
        %2949 = vmatpush2.msra.mxu0 0.0
        %2950 = vmatprep.subr.mxu0 0.0
        %2951 = vmatpush2.msra.mxu0 0.0
        %2952 = vmatprep.subr.mxu0 0.0
        %2953 = vmatpush2.msra.mxu0 0.0
        %2954 = vmatprep.subr.mxu0 0.0
        %2955 = vmatpush2.msra.mxu0 0.0
        %2956 = vmatprep.subr.mxu0 0.0
        %2957 = vmatpush2.msra.mxu0 0.0
        %2958 = vmatprep.subr.mxu0 0.0
        %2959 = vmatpush2.msra.mxu0 0.0
        %2960 = vmatprep.subr.mxu0 0.0
        %2961 = vmatpush2.msra.mxu0 0.0
        %2962 = vmatprep.subr.mxu0 0.0
        %2963 = vmatpush2.msra.mxu0 0.0
        %2964 = vmatprep.subr.mxu0 0.0
        %2965 = vmatpush2.msra.mxu0 0.0
        %2966 = vmatprep.mubr.f32.mxu0 0.0
        %2967 = vmatmul.mubr.f32.gmra.mxu0 %v2884
        %v2968 = vpop.f32.mrf.mxu0
        %v2969 = vadd.f32 0.0, %v2968
        %v2970 = vpop.f32.mrf.mxu0
        %v2971 = vadd.f32 0.0, %v2970
        %2972 = vdwg.mxu0
        %2973 = vmatprep.subr.mxu0 0.0
        %2974 = vmatpush1.msra.mxu0 0.0
        %2975 = vmatprep.subr.mxu0 0.0
        %2976 = vmatpush1.msra.mxu0 0.0
        %2977 = vmatprep.subr.mxu0 0.0
        %2978 = vmatpush1.msra.mxu0 0.0
        %2979 = vmatprep.subr.mxu0 0.0
        %2980 = vmatpush1.msra.mxu0 0.0
        %2981 = vmatprep.subr.mxu0 0.0
        %2982 = vmatpush1.msra.mxu0 0.0
        %2983 = vmatprep.subr.mxu0 0.0
        %2984 = vmatpush1.msra.mxu0 0.0
        %2985 = vmatprep.subr.mxu0 0.0
        %2986 = vmatpush1.msra.mxu0 0.0
        %2987 = vmatprep.subr.mxu0 0.0
        %2988 = vmatpush1.msra.mxu0 0.0
        %2989 = vmatprep.subr.mxu0 0.0
        %2990 = vmatpush1.msra.mxu0 0.0
        %2991 = vmatprep.subr.mxu0 0.0
        %2992 = vmatpush1.msra.mxu0 0.0
        %2993 = vmatprep.subr.mxu0 0.0
        %2994 = vmatpush1.msra.mxu0 0.0
        %2995 = vmatprep.subr.mxu0 0.0
        %2996 = vmatpush1.msra.mxu0 0.0
        %2997 = vmatprep.subr.mxu0 0.0
        %2998 = vmatpush1.msra.mxu0 0.0
        %2999 = vmatprep.subr.mxu0 0.0
        %3000 = vmatpush1.msra.mxu0 0.0
        %3001 = vmatprep.subr.mxu0 0.0
        %3002 = vmatpush1.msra.mxu0 0.0
        %3003 = vmatprep.subr.mxu0 %v2892
        %3004 = vmatpush1.msra.mxu0 %v2890
        %3005 = vmatprep.subr.mxu0 0.0
        %3006 = vmatpush2.msra.mxu0 0.0
        %3007 = vmatprep.subr.mxu0 0.0
        %3008 = vmatpush2.msra.mxu0 0.0
        %3009 = vmatprep.subr.mxu0 0.0
        %3010 = vmatpush2.msra.mxu0 0.0
        %3011 = vmatprep.subr.mxu0 0.0
        %3012 = vmatpush2.msra.mxu0 0.0
        %3013 = vmatprep.subr.mxu0 0.0
        %3014 = vmatpush2.msra.mxu0 0.0
        %3015 = vmatprep.subr.mxu0 0.0
        %3016 = vmatpush2.msra.mxu0 0.0
        %3017 = vmatprep.subr.mxu0 0.0
        %3018 = vmatpush2.msra.mxu0 0.0
        %3019 = vmatprep.subr.mxu0 0.0
        %3020 = vmatpush2.msra.mxu0 0.0
        %3021 = vmatprep.subr.mxu0 0.0
        %3022 = vmatpush2.msra.mxu0 0.0
        %3023 = vmatprep.subr.mxu0 0.0
        %3024 = vmatpush2.msra.mxu0 0.0
        %3025 = vmatprep.subr.mxu0 0.0
        %3026 = vmatpush2.msra.mxu0 0.0
        %3027 = vmatprep.subr.mxu0 0.0
        %3028 = vmatpush2.msra.mxu0 0.0
        %3029 = vmatprep.subr.mxu0 0.0
        %3030 = vmatpush2.msra.mxu0 0.0
        %3031 = vmatprep.subr.mxu0 0.0
        %3032 = vmatpush2.msra.mxu0 0.0
        %3033 = vmatprep.subr.mxu0 0.0
        %3034 = vmatpush2.msra.mxu0 0.0
        %3035 = vmatprep.subr.mxu0 0.0
        %3036 = vmatpush2.msra.mxu0 0.0
        %3037 = vmatprep.mubr.f32.mxu0 0.0
        %3038 = vmatmul.mubr.f32.gmra.mxu0 %v2884
        %v3039 = vpop.f32.mrf.mxu0
        %v3040 = vadd.f32 0.0, %v3039
        %v3041 = vpop.f32.mrf.mxu0
        %v3042 = vadd.f32 0.0, %v3041
        %3043 = vdwg.mxu0
        %3044 = vmatprep.subr.mxu0 0.0
        %3045 = vmatpush1.msra.mxu0 0.0
        %3046 = vmatprep.subr.mxu0 0.0
        %3047 = vmatpush1.msra.mxu0 0.0
        %3048 = vmatprep.subr.mxu0 0.0
        %3049 = vmatpush1.msra.mxu0 0.0
        %3050 = vmatprep.subr.mxu0 0.0
        %3051 = vmatpush1.msra.mxu0 0.0
        %3052 = vmatprep.subr.mxu0 0.0
        %3053 = vmatpush1.msra.mxu0 0.0
        %3054 = vmatprep.subr.mxu0 0.0
        %3055 = vmatpush1.msra.mxu0 0.0
        %3056 = vmatprep.subr.mxu0 0.0
        %3057 = vmatpush1.msra.mxu0 0.0
        %3058 = vmatprep.subr.mxu0 0.0
        %3059 = vmatpush1.msra.mxu0 0.0
        %3060 = vmatprep.subr.mxu0 0.0
        %3061 = vmatpush1.msra.mxu0 0.0
        %3062 = vmatprep.subr.mxu0 0.0
        %3063 = vmatpush1.msra.mxu0 0.0
        %3064 = vmatprep.subr.mxu0 0.0
        %3065 = vmatpush1.msra.mxu0 0.0
        %3066 = vmatprep.subr.mxu0 0.0
        %3067 = vmatpush1.msra.mxu0 0.0
        %3068 = vmatprep.subr.mxu0 0.0
        %3069 = vmatpush1.msra.mxu0 0.0
        %3070 = vmatprep.subr.mxu0 0.0
        %3071 = vmatpush1.msra.mxu0 0.0
        %3072 = vmatprep.subr.mxu0 0.0
        %3073 = vmatpush1.msra.mxu0 0.0
        %3074 = vmatprep.subr.mxu0 %v2896
        %3075 = vmatpush1.msra.mxu0 %v2894
        %3076 = vmatprep.subr.mxu0 0.0
        %3077 = vmatpush2.msra.mxu0 0.0
        %3078 = vmatprep.subr.mxu0 0.0
        %3079 = vmatpush2.msra.mxu0 0.0
        %3080 = vmatprep.subr.mxu0 0.0
        %3081 = vmatpush2.msra.mxu0 0.0
        %3082 = vmatprep.subr.mxu0 0.0
        %3083 = vmatpush2.msra.mxu0 0.0
        %3084 = vmatprep.subr.mxu0 0.0
        %3085 = vmatpush2.msra.mxu0 0.0
        %3086 = vmatprep.subr.mxu0 0.0
        %3087 = vmatpush2.msra.mxu0 0.0
        %3088 = vmatprep.subr.mxu0 0.0
        %3089 = vmatpush2.msra.mxu0 0.0
        %3090 = vmatprep.subr.mxu0 0.0
        %3091 = vmatpush2.msra.mxu0 0.0
        %3092 = vmatprep.subr.mxu0 0.0
        %3093 = vmatpush2.msra.mxu0 0.0
        %3094 = vmatprep.subr.mxu0 0.0
        %3095 = vmatpush2.msra.mxu0 0.0
        %3096 = vmatprep.subr.mxu0 0.0
        %3097 = vmatpush2.msra.mxu0 0.0
        %3098 = vmatprep.subr.mxu0 0.0
        %3099 = vmatpush2.msra.mxu0 0.0
        %3100 = vmatprep.subr.mxu0 0.0
        %3101 = vmatpush2.msra.mxu0 0.0
        %3102 = vmatprep.subr.mxu0 0.0
        %3103 = vmatpush2.msra.mxu0 0.0
        %3104 = vmatprep.subr.mxu0 0.0
        %3105 = vmatpush2.msra.mxu0 0.0
        %3106 = vmatprep.subr.mxu0 0.0
        %3107 = vmatpush2.msra.mxu0 0.0
        %3108 = vmatprep.mubr.f32.mxu0 0.0
        %3109 = vmatmul.mubr.f32.gmra.mxu0 %v2884
        %v3110 = vpop.f32.mrf.mxu0
        %v3111 = vadd.f32 0.0, %v3110
        %v3112 = vpop.f32.mrf.mxu0
        %v3113 = vadd.f32 0.0, %v3112
        %3114 = vdwg.mxu0
        %3115 = vmatprep.subr.mxu0 0.0
        %3116 = vmatpush1.msra.mxu0 0.0
        %3117 = vmatprep.subr.mxu0 0.0
        %3118 = vmatpush1.msra.mxu0 0.0
        %3119 = vmatprep.subr.mxu0 0.0
        %3120 = vmatpush1.msra.mxu0 0.0
        %3121 = vmatprep.subr.mxu0 0.0
        %3122 = vmatpush1.msra.mxu0 0.0
        %3123 = vmatprep.subr.mxu0 0.0
        %3124 = vmatpush1.msra.mxu0 0.0
        %3125 = vmatprep.subr.mxu0 0.0
        %3126 = vmatpush1.msra.mxu0 0.0
        %3127 = vmatprep.subr.mxu0 0.0
        %3128 = vmatpush1.msra.mxu0 0.0
        %3129 = vmatprep.subr.mxu0 0.0
        %3130 = vmatpush1.msra.mxu0 0.0
        %3131 = vmatprep.subr.mxu0 0.0
        %3132 = vmatpush1.msra.mxu0 0.0
        %3133 = vmatprep.subr.mxu0 0.0
        %3134 = vmatpush1.msra.mxu0 0.0
        %3135 = vmatprep.subr.mxu0 0.0
        %3136 = vmatpush1.msra.mxu0 0.0
        %3137 = vmatprep.subr.mxu0 0.0
        %3138 = vmatpush1.msra.mxu0 0.0
        %3139 = vmatprep.subr.mxu0 0.0
        %3140 = vmatpush1.msra.mxu0 0.0
        %3141 = vmatprep.subr.mxu0 0.0
        %3142 = vmatpush1.msra.mxu0 0.0
        %3143 = vmatprep.subr.mxu0 0.0
        %3144 = vmatpush1.msra.mxu0 0.0
        %3145 = vmatprep.subr.mxu0 %v2900
        %3146 = vmatpush1.msra.mxu0 %v2898
        %3147 = vmatprep.subr.mxu0 0.0
        %3148 = vmatpush2.msra.mxu0 0.0
        %3149 = vmatprep.subr.mxu0 0.0
        %3150 = vmatpush2.msra.mxu0 0.0
        %3151 = vmatprep.subr.mxu0 0.0
        %3152 = vmatpush2.msra.mxu0 0.0
        %3153 = vmatprep.subr.mxu0 0.0
        %3154 = vmatpush2.msra.mxu0 0.0
        %3155 = vmatprep.subr.mxu0 0.0
        %3156 = vmatpush2.msra.mxu0 0.0
        %3157 = vmatprep.subr.mxu0 0.0
        %3158 = vmatpush2.msra.mxu0 0.0
        %3159 = vmatprep.subr.mxu0 0.0
        %3160 = vmatpush2.msra.mxu0 0.0
        %3161 = vmatprep.subr.mxu0 0.0
        %3162 = vmatpush2.msra.mxu0 0.0
        %3163 = vmatprep.subr.mxu0 0.0
        %3164 = vmatpush2.msra.mxu0 0.0
        %3165 = vmatprep.subr.mxu0 0.0
        %3166 = vmatpush2.msra.mxu0 0.0
        %3167 = vmatprep.subr.mxu0 0.0
        %3168 = vmatpush2.msra.mxu0 0.0
        %3169 = vmatprep.subr.mxu0 0.0
        %3170 = vmatpush2.msra.mxu0 0.0
        %3171 = vmatprep.subr.mxu0 0.0
        %3172 = vmatpush2.msra.mxu0 0.0
        %3173 = vmatprep.subr.mxu0 0.0
        %3174 = vmatpush2.msra.mxu0 0.0
        %3175 = vmatprep.subr.mxu0 0.0
        %3176 = vmatpush2.msra.mxu0 0.0
        %3177 = vmatprep.subr.mxu0 0.0
        %3178 = vmatpush2.msra.mxu0 0.0
        %3179 = vmatprep.mubr.f32.mxu0 0.0
        %3180 = vmatmul.mubr.f32.gmra.mxu0 %v2884
        %v3181 = vpop.f32.mrf.mxu0
        %v3182 = vadd.f32 0.0, %v3181
        %v3183 = vpop.f32.mrf.mxu0
        %v3184 = vadd.f32 0.0, %v3183
        %3185 = vdwg.mxu0
        %v3186 = vadd.f32 %v2795, %v2969
        %v3187 = vadd.f32 %v2796, %v2971
        %v3188 = vadd.f32 %v2797, %v3040
        %v3189 = vadd.f32 %v2798, %v3042
        %v3190 = vadd.f32 %v2799, %v3111
        %v3191 = vadd.f32 %v2800, %v3113
        %v3192 = vadd.f32 %v2801, %v3182
        %v3193 = vadd.f32 %v2802, %v3184
        %3194 = vrot.lane.b32.xlu0 %v946, 64
        %v3195 = vpop.permute.xlu0 %3194
        %3196 = vrot.lane.b32.xlu0 %v950, 64
        %v3197 = vpop.permute.xlu0 %3196
        %3198 = vrot.lane.b32.xlu0 %v954, 64
        %v3199 = vpop.permute.xlu0 %3198
        %3200 = vrot.lane.b32.xlu0 %v958, 64
        %v3201 = vpop.permute.xlu0 %3200
        %3202 = vrot.lane.b32.xlu0 %v962, 64
        %v3203 = vpop.permute.xlu0 %3202
        %3204 = vrot.lane.b32.xlu0 %v966, 64
        %v3205 = vpop.permute.xlu0 %3204
        %3206 = vrot.lane.b32.xlu0 %v970, 64
        %v3207 = vpop.permute.xlu0 %3206
        %3208 = vrot.lane.b32.xlu0 %v974, 64
        %v3209 = vpop.permute.xlu0 %3208
        %vm3210 = vcmask 523264
        %v3211 = vsel %vm3210, %v3195, %v3197
        %v3212 = vsel %vm3210, %v3197, %v3199
        %v3213 = vsel %vm3210, %v3199, %v3201
        %v3214 = vsel %vm3210, %v3201, %v3203
        %v3215 = vsel %vm3210, %v3203, %v3205
        %v3216 = vsel %vm3210, %v3205, %v3207
        %v3217 = vsel %vm3210, %v3207, %v3209
        %v3227 = vmul.f32 %v654, %v3195
        %v3228 = vmul.f32 %v656, %v3211
        %v3229 = vmul.f32 %v725, %v3212
        %v3230 = vmul.f32 %v727, %v3213
        %v3231 = vmul.f32 %v796, %v3214
        %v3232 = vmul.f32 %v798, %v3215
        %v3233 = vmul.f32 %v867, %v3216
        %v3234 = vmul.f32 %v869, %v3217
        %v3235 = vmul.f32 %v938, %v3209
        %s3236 = scalar_lea.vmem %s2, 48
        %v3237 = vld [vmem:[%s3236] sm:$0xff]
        %3247 = vrot.lane.b32.xlu0 %v3227, 64
        %v3248 = vpop.permute.xlu0 %3247
        %3249 = vrot.lane.b32.xlu0 %v3228, 64
        %v3250 = vpop.permute.xlu0 %3249
        %3251 = vrot.lane.b32.xlu0 %v3229, 64
        %v3252 = vpop.permute.xlu0 %3251
        %3253 = vrot.lane.b32.xlu0 %v3230, 64
        %v3254 = vpop.permute.xlu0 %3253
        %3255 = vrot.lane.b32.xlu0 %v3231, 64
        %v3256 = vpop.permute.xlu0 %3255
        %3257 = vrot.lane.b32.xlu0 %v3232, 64
        %v3258 = vpop.permute.xlu0 %3257
        %3259 = vrot.lane.b32.xlu0 %v3233, 64
        %v3260 = vpop.permute.xlu0 %3259
        %3261 = vrot.lane.b32.xlu0 %v3234, 64
        %v3262 = vpop.permute.xlu0 %3261
        %3263 = vrot.lane.b32.xlu0 %v3235, 64
        %v3264 = vpop.permute.xlu0 %3263
        %v3265 = vsel %vm3210, %v3248, %v3250
        %v3266 = vsel %vm3210, %v3250, %v3252
        %v3267 = vsel %vm3210, %v3252, %v3254
        %v3268 = vsel %vm3210, %v3254, %v3256
        %v3269 = vsel %vm3210, %v3256, %v3258
        %v3270 = vsel %vm3210, %v3258, %v3260
        %v3271 = vsel %vm3210, %v3260, %v3262
        %v3272 = vsel %vm3210, %v3262, %v3264
        %v3274 = vsel %vm1030, %v3237, 0
        %v3276 = vsel %vm1034, %v3265, 0
        %v3278 = vsel %vm1034, %v3266, 0
        %v3280 = vsel %vm1034, %v3267, 0
        %v3282 = vsel %vm1034, %v3268, 0
        %v3284 = vsel %vm1034, %v3269, 0
        %v3286 = vsel %vm1034, %v3270, 0
        %v3288 = vsel %vm1034, %v3271, 0
        %v3290 = vsel %vm1034, %v3272, 0
        %3292 = vmatprep.subr.mxu0 0.0
        %3293 = vmatpush1.msra.mxu0 0.0
        %3294 = vmatprep.subr.mxu0 0.0
        %3295 = vmatpush1.msra.mxu0 0.0
        %3296 = vmatprep.subr.mxu0 0.0
        %3297 = vmatpush1.msra.mxu0 0.0
        %3298 = vmatprep.subr.mxu0 0.0
        %3299 = vmatpush1.msra.mxu0 0.0
        %3300 = vmatprep.subr.mxu0 0.0
        %3301 = vmatpush1.msra.mxu0 0.0
        %3302 = vmatprep.subr.mxu0 0.0
        %3303 = vmatpush1.msra.mxu0 0.0
        %3304 = vmatprep.subr.mxu0 0.0
        %3305 = vmatpush1.msra.mxu0 0.0
        %3306 = vmatprep.subr.mxu0 0.0
        %3307 = vmatpush1.msra.mxu0 0.0
        %3308 = vmatprep.subr.mxu0 0.0
        %3309 = vmatpush1.msra.mxu0 0.0
        %3310 = vmatprep.subr.mxu0 0.0
        %3311 = vmatpush1.msra.mxu0 0.0
        %3312 = vmatprep.subr.mxu0 0.0
        %3313 = vmatpush1.msra.mxu0 0.0
        %3314 = vmatprep.subr.mxu0 0.0
        %3315 = vmatpush1.msra.mxu0 0.0
        %3316 = vmatprep.subr.mxu0 0.0
        %3317 = vmatpush1.msra.mxu0 0.0
        %3318 = vmatprep.subr.mxu0 0.0
        %3319 = vmatpush1.msra.mxu0 0.0
        %3320 = vmatprep.subr.mxu0 0.0
        %3321 = vmatpush1.msra.mxu0 0.0
        %3322 = vmatprep.subr.mxu0 %v3278
        %3323 = vmatpush1.msra.mxu0 %v3276
        %3324 = vmatprep.subr.mxu0 0.0
        %3325 = vmatpush2.msra.mxu0 0.0
        %3326 = vmatprep.subr.mxu0 0.0
        %3327 = vmatpush2.msra.mxu0 0.0
        %3328 = vmatprep.subr.mxu0 0.0
        %3329 = vmatpush2.msra.mxu0 0.0
        %3330 = vmatprep.subr.mxu0 0.0
        %3331 = vmatpush2.msra.mxu0 0.0
        %3332 = vmatprep.subr.mxu0 0.0
        %3333 = vmatpush2.msra.mxu0 0.0
        %3334 = vmatprep.subr.mxu0 0.0
        %3335 = vmatpush2.msra.mxu0 0.0
        %3336 = vmatprep.subr.mxu0 0.0
        %3337 = vmatpush2.msra.mxu0 0.0
        %3338 = vmatprep.subr.mxu0 0.0
        %3339 = vmatpush2.msra.mxu0 0.0
        %3340 = vmatprep.subr.mxu0 0.0
        %3341 = vmatpush2.msra.mxu0 0.0
        %3342 = vmatprep.subr.mxu0 0.0
        %3343 = vmatpush2.msra.mxu0 0.0
        %3344 = vmatprep.subr.mxu0 0.0
        %3345 = vmatpush2.msra.mxu0 0.0
        %3346 = vmatprep.subr.mxu0 0.0
        %3347 = vmatpush2.msra.mxu0 0.0
        %3348 = vmatprep.subr.mxu0 0.0
        %3349 = vmatpush2.msra.mxu0 0.0
        %3350 = vmatprep.subr.mxu0 0.0
        %3351 = vmatpush2.msra.mxu0 0.0
        %3352 = vmatprep.subr.mxu0 0.0
        %3353 = vmatpush2.msra.mxu0 0.0
        %3354 = vmatprep.subr.mxu0 0.0
        %3355 = vmatpush2.msra.mxu0 0.0
        %3356 = vmatprep.mubr.f32.mxu0 0.0
        %3357 = vmatmul.mubr.f32.gmra.mxu0 %v3274
        %v3358 = vpop.f32.mrf.mxu0
        %v3359 = vadd.f32 0.0, %v3358
        %v3360 = vpop.f32.mrf.mxu0
        %v3361 = vadd.f32 0.0, %v3360
        %3362 = vdwg.mxu0
        %3363 = vmatprep.subr.mxu0 0.0
        %3364 = vmatpush1.msra.mxu0 0.0
        %3365 = vmatprep.subr.mxu0 0.0
        %3366 = vmatpush1.msra.mxu0 0.0
        %3367 = vmatprep.subr.mxu0 0.0
        %3368 = vmatpush1.msra.mxu0 0.0
        %3369 = vmatprep.subr.mxu0 0.0
        %3370 = vmatpush1.msra.mxu0 0.0
        %3371 = vmatprep.subr.mxu0 0.0
        %3372 = vmatpush1.msra.mxu0 0.0
        %3373 = vmatprep.subr.mxu0 0.0
        %3374 = vmatpush1.msra.mxu0 0.0
        %3375 = vmatprep.subr.mxu0 0.0
        %3376 = vmatpush1.msra.mxu0 0.0
        %3377 = vmatprep.subr.mxu0 0.0
        %3378 = vmatpush1.msra.mxu0 0.0
        %3379 = vmatprep.subr.mxu0 0.0
        %3380 = vmatpush1.msra.mxu0 0.0
        %3381 = vmatprep.subr.mxu0 0.0
        %3382 = vmatpush1.msra.mxu0 0.0
        %3383 = vmatprep.subr.mxu0 0.0
        %3384 = vmatpush1.msra.mxu0 0.0
        %3385 = vmatprep.subr.mxu0 0.0
        %3386 = vmatpush1.msra.mxu0 0.0
        %3387 = vmatprep.subr.mxu0 0.0
        %3388 = vmatpush1.msra.mxu0 0.0
        %3389 = vmatprep.subr.mxu0 0.0
        %3390 = vmatpush1.msra.mxu0 0.0
        %3391 = vmatprep.subr.mxu0 0.0
        %3392 = vmatpush1.msra.mxu0 0.0
        %3393 = vmatprep.subr.mxu0 %v3282
        %3394 = vmatpush1.msra.mxu0 %v3280
        %3395 = vmatprep.subr.mxu0 0.0
        %3396 = vmatpush2.msra.mxu0 0.0
        %3397 = vmatprep.subr.mxu0 0.0
        %3398 = vmatpush2.msra.mxu0 0.0
        %3399 = vmatprep.subr.mxu0 0.0
        %3400 = vmatpush2.msra.mxu0 0.0
        %3401 = vmatprep.subr.mxu0 0.0
        %3402 = vmatpush2.msra.mxu0 0.0
        %3403 = vmatprep.subr.mxu0 0.0
        %3404 = vmatpush2.msra.mxu0 0.0
        %3405 = vmatprep.subr.mxu0 0.0
        %3406 = vmatpush2.msra.mxu0 0.0
        %3407 = vmatprep.subr.mxu0 0.0
        %3408 = vmatpush2.msra.mxu0 0.0
        %3409 = vmatprep.subr.mxu0 0.0
        %3410 = vmatpush2.msra.mxu0 0.0
        %3411 = vmatprep.subr.mxu0 0.0
        %3412 = vmatpush2.msra.mxu0 0.0
        %3413 = vmatprep.subr.mxu0 0.0
        %3414 = vmatpush2.msra.mxu0 0.0
        %3415 = vmatprep.subr.mxu0 0.0
        %3416 = vmatpush2.msra.mxu0 0.0
        %3417 = vmatprep.subr.mxu0 0.0
        %3418 = vmatpush2.msra.mxu0 0.0
        %3419 = vmatprep.subr.mxu0 0.0
        %3420 = vmatpush2.msra.mxu0 0.0
        %3421 = vmatprep.subr.mxu0 0.0
        %3422 = vmatpush2.msra.mxu0 0.0
        %3423 = vmatprep.subr.mxu0 0.0
        %3424 = vmatpush2.msra.mxu0 0.0
        %3425 = vmatprep.subr.mxu0 0.0
        %3426 = vmatpush2.msra.mxu0 0.0
        %3427 = vmatprep.mubr.f32.mxu0 0.0
        %3428 = vmatmul.mubr.f32.gmra.mxu0 %v3274
        %v3429 = vpop.f32.mrf.mxu0
        %v3430 = vadd.f32 0.0, %v3429
        %v3431 = vpop.f32.mrf.mxu0
        %v3432 = vadd.f32 0.0, %v3431
        %3433 = vdwg.mxu0
        %3434 = vmatprep.subr.mxu0 0.0
        %3435 = vmatpush1.msra.mxu0 0.0
        %3436 = vmatprep.subr.mxu0 0.0
        %3437 = vmatpush1.msra.mxu0 0.0
        %3438 = vmatprep.subr.mxu0 0.0
        %3439 = vmatpush1.msra.mxu0 0.0
        %3440 = vmatprep.subr.mxu0 0.0
        %3441 = vmatpush1.msra.mxu0 0.0
        %3442 = vmatprep.subr.mxu0 0.0
        %3443 = vmatpush1.msra.mxu0 0.0
        %3444 = vmatprep.subr.mxu0 0.0
        %3445 = vmatpush1.msra.mxu0 0.0
        %3446 = vmatprep.subr.mxu0 0.0
        %3447 = vmatpush1.msra.mxu0 0.0
        %3448 = vmatprep.subr.mxu0 0.0
        %3449 = vmatpush1.msra.mxu0 0.0
        %3450 = vmatprep.subr.mxu0 0.0
        %3451 = vmatpush1.msra.mxu0 0.0
        %3452 = vmatprep.subr.mxu0 0.0
        %3453 = vmatpush1.msra.mxu0 0.0
        %3454 = vmatprep.subr.mxu0 0.0
        %3455 = vmatpush1.msra.mxu0 0.0
        %3456 = vmatprep.subr.mxu0 0.0
        %3457 = vmatpush1.msra.mxu0 0.0
        %3458 = vmatprep.subr.mxu0 0.0
        %3459 = vmatpush1.msra.mxu0 0.0
        %3460 = vmatprep.subr.mxu0 0.0
        %3461 = vmatpush1.msra.mxu0 0.0
        %3462 = vmatprep.subr.mxu0 0.0
        %3463 = vmatpush1.msra.mxu0 0.0
        %3464 = vmatprep.subr.mxu0 %v3286
        %3465 = vmatpush1.msra.mxu0 %v3284
        %3466 = vmatprep.subr.mxu0 0.0
        %3467 = vmatpush2.msra.mxu0 0.0
        %3468 = vmatprep.subr.mxu0 0.0
        %3469 = vmatpush2.msra.mxu0 0.0
        %3470 = vmatprep.subr.mxu0 0.0
        %3471 = vmatpush2.msra.mxu0 0.0
        %3472 = vmatprep.subr.mxu0 0.0
        %3473 = vmatpush2.msra.mxu0 0.0
        %3474 = vmatprep.subr.mxu0 0.0
        %3475 = vmatpush2.msra.mxu0 0.0
        %3476 = vmatprep.subr.mxu0 0.0
        %3477 = vmatpush2.msra.mxu0 0.0
        %3478 = vmatprep.subr.mxu0 0.0
        %3479 = vmatpush2.msra.mxu0 0.0
        %3480 = vmatprep.subr.mxu0 0.0
        %3481 = vmatpush2.msra.mxu0 0.0
        %3482 = vmatprep.subr.mxu0 0.0
        %3483 = vmatpush2.msra.mxu0 0.0
        %3484 = vmatprep.subr.mxu0 0.0
        %3485 = vmatpush2.msra.mxu0 0.0
        %3486 = vmatprep.subr.mxu0 0.0
        %3487 = vmatpush2.msra.mxu0 0.0
        %3488 = vmatprep.subr.mxu0 0.0
        %3489 = vmatpush2.msra.mxu0 0.0
        %3490 = vmatprep.subr.mxu0 0.0
        %3491 = vmatpush2.msra.mxu0 0.0
        %3492 = vmatprep.subr.mxu0 0.0
        %3493 = vmatpush2.msra.mxu0 0.0
        %3494 = vmatprep.subr.mxu0 0.0
        %3495 = vmatpush2.msra.mxu0 0.0
        %3496 = vmatprep.subr.mxu0 0.0
        %3497 = vmatpush2.msra.mxu0 0.0
        %3498 = vmatprep.mubr.f32.mxu0 0.0
        %3499 = vmatmul.mubr.f32.gmra.mxu0 %v3274
        %v3500 = vpop.f32.mrf.mxu0
        %v3501 = vadd.f32 0.0, %v3500
        %v3502 = vpop.f32.mrf.mxu0
        %v3503 = vadd.f32 0.0, %v3502
        %3504 = vdwg.mxu0
        %3505 = vmatprep.subr.mxu0 0.0
        %3506 = vmatpush1.msra.mxu0 0.0
        %3507 = vmatprep.subr.mxu0 0.0
        %3508 = vmatpush1.msra.mxu0 0.0
        %3509 = vmatprep.subr.mxu0 0.0
        %3510 = vmatpush1.msra.mxu0 0.0
        %3511 = vmatprep.subr.mxu0 0.0
        %3512 = vmatpush1.msra.mxu0 0.0
        %3513 = vmatprep.subr.mxu0 0.0
        %3514 = vmatpush1.msra.mxu0 0.0
        %3515 = vmatprep.subr.mxu0 0.0
        %3516 = vmatpush1.msra.mxu0 0.0
        %3517 = vmatprep.subr.mxu0 0.0
        %3518 = vmatpush1.msra.mxu0 0.0
        %3519 = vmatprep.subr.mxu0 0.0
        %3520 = vmatpush1.msra.mxu0 0.0
        %3521 = vmatprep.subr.mxu0 0.0
        %3522 = vmatpush1.msra.mxu0 0.0
        %3523 = vmatprep.subr.mxu0 0.0
        %3524 = vmatpush1.msra.mxu0 0.0
        %3525 = vmatprep.subr.mxu0 0.0
        %3526 = vmatpush1.msra.mxu0 0.0
        %3527 = vmatprep.subr.mxu0 0.0
        %3528 = vmatpush1.msra.mxu0 0.0
        %3529 = vmatprep.subr.mxu0 0.0
        %3530 = vmatpush1.msra.mxu0 0.0
        %3531 = vmatprep.subr.mxu0 0.0
        %3532 = vmatpush1.msra.mxu0 0.0
        %3533 = vmatprep.subr.mxu0 0.0
        %3534 = vmatpush1.msra.mxu0 0.0
        %3535 = vmatprep.subr.mxu0 %v3290
        %3536 = vmatpush1.msra.mxu0 %v3288
        %3537 = vmatprep.subr.mxu0 0.0
        %3538 = vmatpush2.msra.mxu0 0.0
        %3539 = vmatprep.subr.mxu0 0.0
        %3540 = vmatpush2.msra.mxu0 0.0
        %3541 = vmatprep.subr.mxu0 0.0
        %3542 = vmatpush2.msra.mxu0 0.0
        %3543 = vmatprep.subr.mxu0 0.0
        %3544 = vmatpush2.msra.mxu0 0.0
        %3545 = vmatprep.subr.mxu0 0.0
        %3546 = vmatpush2.msra.mxu0 0.0
        %3547 = vmatprep.subr.mxu0 0.0
        %3548 = vmatpush2.msra.mxu0 0.0
        %3549 = vmatprep.subr.mxu0 0.0
        %3550 = vmatpush2.msra.mxu0 0.0
        %3551 = vmatprep.subr.mxu0 0.0
        %3552 = vmatpush2.msra.mxu0 0.0
        %3553 = vmatprep.subr.mxu0 0.0
        %3554 = vmatpush2.msra.mxu0 0.0
        %3555 = vmatprep.subr.mxu0 0.0
        %3556 = vmatpush2.msra.mxu0 0.0
        %3557 = vmatprep.subr.mxu0 0.0
        %3558 = vmatpush2.msra.mxu0 0.0
        %3559 = vmatprep.subr.mxu0 0.0
        %3560 = vmatpush2.msra.mxu0 0.0
        %3561 = vmatprep.subr.mxu0 0.0
        %3562 = vmatpush2.msra.mxu0 0.0
        %3563 = vmatprep.subr.mxu0 0.0
        %3564 = vmatpush2.msra.mxu0 0.0
        %3565 = vmatprep.subr.mxu0 0.0
        %3566 = vmatpush2.msra.mxu0 0.0
        %3567 = vmatprep.subr.mxu0 0.0
        %3568 = vmatpush2.msra.mxu0 0.0
        %3569 = vmatprep.mubr.f32.mxu0 0.0
        %3570 = vmatmul.mubr.f32.gmra.mxu0 %v3274
        %v3571 = vpop.f32.mrf.mxu0
        %v3572 = vadd.f32 0.0, %v3571
        %v3573 = vpop.f32.mrf.mxu0
        %v3574 = vadd.f32 0.0, %v3573
        %3575 = vdwg.mxu0
        %v3576 = vadd.f32 %v3186, %v3359
        %v3577 = vadd.f32 %v3187, %v3361
        %v3578 = vadd.f32 %v3188, %v3430
        %v3579 = vadd.f32 %v3189, %v3432
        %v3580 = vadd.f32 %v3190, %v3501
        %v3581 = vadd.f32 %v3191, %v3503
        %v3582 = vadd.f32 %v3192, %v3572
        %v3583 = vadd.f32 %v3193, %v3574
        %s3584 = scalar_lea.vmem %s2, 56
        %v3585 = vld [vmem:[%s3584] sm:$0xff]
        %3586 = vrot.lane.b32.xlu0 %v654, 63
        %v3587 = vpop.permute.xlu0 %3586
        %3588 = vrot.lane.b32.xlu0 %v656, 63
        %v3589 = vpop.permute.xlu0 %3588
        %3590 = vrot.lane.b32.xlu0 %v725, 63
        %v3591 = vpop.permute.xlu0 %3590
        %3592 = vrot.lane.b32.xlu0 %v727, 63
        %v3593 = vpop.permute.xlu0 %3592
        %3594 = vrot.lane.b32.xlu0 %v796, 63
        %v3595 = vpop.permute.xlu0 %3594
        %3596 = vrot.lane.b32.xlu0 %v798, 63
        %v3597 = vpop.permute.xlu0 %3596
        %3598 = vrot.lane.b32.xlu0 %v867, 63
        %v3599 = vpop.permute.xlu0 %3598
        %3600 = vrot.lane.b32.xlu0 %v869, 63
        %v3601 = vpop.permute.xlu0 %3600
        %3602 = vrot.lane.b32.xlu0 %v938, 63
        %v3603 = vpop.permute.xlu0 %3602
        %vm3604 = vcmask 515072
        %v3605 = vsel %vm3604, %v3587, %v3589
        %v3606 = vsel %vm3604, %v3589, %v3591
        %v3607 = vsel %vm3604, %v3591, %v3593
        %v3608 = vsel %vm3604, %v3593, %v3595
        %v3609 = vsel %vm3604, %v3595, %v3597
        %v3610 = vsel %vm3604, %v3597, %v3599
        %v3611 = vsel %vm3604, %v3599, %v3601
        %v3612 = vsel %vm3604, %v3601, %v3603
        %v3614 = vsel %vm1030, %v3585, 0
        %v3616 = vsel %vm1034, %v3605, 0
        %v3618 = vsel %vm1034, %v3606, 0
        %v3620 = vsel %vm1034, %v3607, 0
        %v3622 = vsel %vm1034, %v3608, 0
        %v3624 = vsel %vm1034, %v3609, 0
        %v3626 = vsel %vm1034, %v3610, 0
        %v3628 = vsel %vm1034, %v3611, 0
        %v3630 = vsel %vm1034, %v3612, 0
        %3632 = vmatprep.subr.mxu0 0.0
        %3633 = vmatpush1.msra.mxu0 0.0
        %3634 = vmatprep.subr.mxu0 0.0
        %3635 = vmatpush1.msra.mxu0 0.0
        %3636 = vmatprep.subr.mxu0 0.0
        %3637 = vmatpush1.msra.mxu0 0.0
        %3638 = vmatprep.subr.mxu0 0.0
        %3639 = vmatpush1.msra.mxu0 0.0
        %3640 = vmatprep.subr.mxu0 0.0
        %3641 = vmatpush1.msra.mxu0 0.0
        %3642 = vmatprep.subr.mxu0 0.0
        %3643 = vmatpush1.msra.mxu0 0.0
        %3644 = vmatprep.subr.mxu0 0.0
        %3645 = vmatpush1.msra.mxu0 0.0
        %3646 = vmatprep.subr.mxu0 0.0
        %3647 = vmatpush1.msra.mxu0 0.0
        %3648 = vmatprep.subr.mxu0 0.0
        %3649 = vmatpush1.msra.mxu0 0.0
        %3650 = vmatprep.subr.mxu0 0.0
        %3651 = vmatpush1.msra.mxu0 0.0
        %3652 = vmatprep.subr.mxu0 0.0
        %3653 = vmatpush1.msra.mxu0 0.0
        %3654 = vmatprep.subr.mxu0 0.0
        %3655 = vmatpush1.msra.mxu0 0.0
        %3656 = vmatprep.subr.mxu0 0.0
        %3657 = vmatpush1.msra.mxu0 0.0
        %3658 = vmatprep.subr.mxu0 0.0
        %3659 = vmatpush1.msra.mxu0 0.0
        %3660 = vmatprep.subr.mxu0 0.0
        %3661 = vmatpush1.msra.mxu0 0.0
        %3662 = vmatprep.subr.mxu0 %v3618
        %3663 = vmatpush1.msra.mxu0 %v3616
        %3664 = vmatprep.subr.mxu0 0.0
        %3665 = vmatpush2.msra.mxu0 0.0
        %3666 = vmatprep.subr.mxu0 0.0
        %3667 = vmatpush2.msra.mxu0 0.0
        %3668 = vmatprep.subr.mxu0 0.0
        %3669 = vmatpush2.msra.mxu0 0.0
        %3670 = vmatprep.subr.mxu0 0.0
        %3671 = vmatpush2.msra.mxu0 0.0
        %3672 = vmatprep.subr.mxu0 0.0
        %3673 = vmatpush2.msra.mxu0 0.0
        %3674 = vmatprep.subr.mxu0 0.0
        %3675 = vmatpush2.msra.mxu0 0.0
        %3676 = vmatprep.subr.mxu0 0.0
        %3677 = vmatpush2.msra.mxu0 0.0
        %3678 = vmatprep.subr.mxu0 0.0
        %3679 = vmatpush2.msra.mxu0 0.0
        %3680 = vmatprep.subr.mxu0 0.0
        %3681 = vmatpush2.msra.mxu0 0.0
        %3682 = vmatprep.subr.mxu0 0.0
        %3683 = vmatpush2.msra.mxu0 0.0
        %3684 = vmatprep.subr.mxu0 0.0
        %3685 = vmatpush2.msra.mxu0 0.0
        %3686 = vmatprep.subr.mxu0 0.0
        %3687 = vmatpush2.msra.mxu0 0.0
        %3688 = vmatprep.subr.mxu0 0.0
        %3689 = vmatpush2.msra.mxu0 0.0
        %3690 = vmatprep.subr.mxu0 0.0
        %3691 = vmatpush2.msra.mxu0 0.0
        %3692 = vmatprep.subr.mxu0 0.0
        %3693 = vmatpush2.msra.mxu0 0.0
        %3694 = vmatprep.subr.mxu0 0.0
        %3695 = vmatpush2.msra.mxu0 0.0
        %3696 = vmatprep.mubr.f32.mxu0 0.0
        %3697 = vmatmul.mubr.f32.gmra.mxu0 %v3614
        %v3698 = vpop.f32.mrf.mxu0
        %v3699 = vadd.f32 0.0, %v3698
        %v3700 = vpop.f32.mrf.mxu0
        %v3701 = vadd.f32 0.0, %v3700
        %3702 = vdwg.mxu0
        %3703 = vmatprep.subr.mxu0 0.0
        %3704 = vmatpush1.msra.mxu0 0.0
        %3705 = vmatprep.subr.mxu0 0.0
        %3706 = vmatpush1.msra.mxu0 0.0
        %3707 = vmatprep.subr.mxu0 0.0
        %3708 = vmatpush1.msra.mxu0 0.0
        %3709 = vmatprep.subr.mxu0 0.0
        %3710 = vmatpush1.msra.mxu0 0.0
        %3711 = vmatprep.subr.mxu0 0.0
        %3712 = vmatpush1.msra.mxu0 0.0
        %3713 = vmatprep.subr.mxu0 0.0
        %3714 = vmatpush1.msra.mxu0 0.0
        %3715 = vmatprep.subr.mxu0 0.0
        %3716 = vmatpush1.msra.mxu0 0.0
        %3717 = vmatprep.subr.mxu0 0.0
        %3718 = vmatpush1.msra.mxu0 0.0
        %3719 = vmatprep.subr.mxu0 0.0
        %3720 = vmatpush1.msra.mxu0 0.0
        %3721 = vmatprep.subr.mxu0 0.0
        %3722 = vmatpush1.msra.mxu0 0.0
        %3723 = vmatprep.subr.mxu0 0.0
        %3724 = vmatpush1.msra.mxu0 0.0
        %3725 = vmatprep.subr.mxu0 0.0
        %3726 = vmatpush1.msra.mxu0 0.0
        %3727 = vmatprep.subr.mxu0 0.0
        %3728 = vmatpush1.msra.mxu0 0.0
        %3729 = vmatprep.subr.mxu0 0.0
        %3730 = vmatpush1.msra.mxu0 0.0
        %3731 = vmatprep.subr.mxu0 0.0
        %3732 = vmatpush1.msra.mxu0 0.0
        %3733 = vmatprep.subr.mxu0 %v3622
        %3734 = vmatpush1.msra.mxu0 %v3620
        %3735 = vmatprep.subr.mxu0 0.0
        %3736 = vmatpush2.msra.mxu0 0.0
        %3737 = vmatprep.subr.mxu0 0.0
        %3738 = vmatpush2.msra.mxu0 0.0
        %3739 = vmatprep.subr.mxu0 0.0
        %3740 = vmatpush2.msra.mxu0 0.0
        %3741 = vmatprep.subr.mxu0 0.0
        %3742 = vmatpush2.msra.mxu0 0.0
        %3743 = vmatprep.subr.mxu0 0.0
        %3744 = vmatpush2.msra.mxu0 0.0
        %3745 = vmatprep.subr.mxu0 0.0
        %3746 = vmatpush2.msra.mxu0 0.0
        %3747 = vmatprep.subr.mxu0 0.0
        %3748 = vmatpush2.msra.mxu0 0.0
        %3749 = vmatprep.subr.mxu0 0.0
        %3750 = vmatpush2.msra.mxu0 0.0
        %3751 = vmatprep.subr.mxu0 0.0
        %3752 = vmatpush2.msra.mxu0 0.0
        %3753 = vmatprep.subr.mxu0 0.0
        %3754 = vmatpush2.msra.mxu0 0.0
        %3755 = vmatprep.subr.mxu0 0.0
        %3756 = vmatpush2.msra.mxu0 0.0
        %3757 = vmatprep.subr.mxu0 0.0
        %3758 = vmatpush2.msra.mxu0 0.0
        %3759 = vmatprep.subr.mxu0 0.0
        %3760 = vmatpush2.msra.mxu0 0.0
        %3761 = vmatprep.subr.mxu0 0.0
        %3762 = vmatpush2.msra.mxu0 0.0
        %3763 = vmatprep.subr.mxu0 0.0
        %3764 = vmatpush2.msra.mxu0 0.0
        %3765 = vmatprep.subr.mxu0 0.0
        %3766 = vmatpush2.msra.mxu0 0.0
        %3767 = vmatprep.mubr.f32.mxu0 0.0
        %3768 = vmatmul.mubr.f32.gmra.mxu0 %v3614
        %v3769 = vpop.f32.mrf.mxu0
        %v3770 = vadd.f32 0.0, %v3769
        %v3771 = vpop.f32.mrf.mxu0
        %v3772 = vadd.f32 0.0, %v3771
        %3773 = vdwg.mxu0
        %3774 = vmatprep.subr.mxu0 0.0
        %3775 = vmatpush1.msra.mxu0 0.0
        %3776 = vmatprep.subr.mxu0 0.0
        %3777 = vmatpush1.msra.mxu0 0.0
        %3778 = vmatprep.subr.mxu0 0.0
        %3779 = vmatpush1.msra.mxu0 0.0
        %3780 = vmatprep.subr.mxu0 0.0
        %3781 = vmatpush1.msra.mxu0 0.0
        %3782 = vmatprep.subr.mxu0 0.0
        %3783 = vmatpush1.msra.mxu0 0.0
        %3784 = vmatprep.subr.mxu0 0.0
        %3785 = vmatpush1.msra.mxu0 0.0
        %3786 = vmatprep.subr.mxu0 0.0
        %3787 = vmatpush1.msra.mxu0 0.0
        %3788 = vmatprep.subr.mxu0 0.0
        %3789 = vmatpush1.msra.mxu0 0.0
        %3790 = vmatprep.subr.mxu0 0.0
        %3791 = vmatpush1.msra.mxu0 0.0
        %3792 = vmatprep.subr.mxu0 0.0
        %3793 = vmatpush1.msra.mxu0 0.0
        %3794 = vmatprep.subr.mxu0 0.0
        %3795 = vmatpush1.msra.mxu0 0.0
        %3796 = vmatprep.subr.mxu0 0.0
        %3797 = vmatpush1.msra.mxu0 0.0
        %3798 = vmatprep.subr.mxu0 0.0
        %3799 = vmatpush1.msra.mxu0 0.0
        %3800 = vmatprep.subr.mxu0 0.0
        %3801 = vmatpush1.msra.mxu0 0.0
        %3802 = vmatprep.subr.mxu0 0.0
        %3803 = vmatpush1.msra.mxu0 0.0
        %3804 = vmatprep.subr.mxu0 %v3626
        %3805 = vmatpush1.msra.mxu0 %v3624
        %3806 = vmatprep.subr.mxu0 0.0
        %3807 = vmatpush2.msra.mxu0 0.0
        %3808 = vmatprep.subr.mxu0 0.0
        %3809 = vmatpush2.msra.mxu0 0.0
        %3810 = vmatprep.subr.mxu0 0.0
        %3811 = vmatpush2.msra.mxu0 0.0
        %3812 = vmatprep.subr.mxu0 0.0
        %3813 = vmatpush2.msra.mxu0 0.0
        %3814 = vmatprep.subr.mxu0 0.0
        %3815 = vmatpush2.msra.mxu0 0.0
        %3816 = vmatprep.subr.mxu0 0.0
        %3817 = vmatpush2.msra.mxu0 0.0
        %3818 = vmatprep.subr.mxu0 0.0
        %3819 = vmatpush2.msra.mxu0 0.0
        %3820 = vmatprep.subr.mxu0 0.0
        %3821 = vmatpush2.msra.mxu0 0.0
        %3822 = vmatprep.subr.mxu0 0.0
        %3823 = vmatpush2.msra.mxu0 0.0
        %3824 = vmatprep.subr.mxu0 0.0
        %3825 = vmatpush2.msra.mxu0 0.0
        %3826 = vmatprep.subr.mxu0 0.0
        %3827 = vmatpush2.msra.mxu0 0.0
        %3828 = vmatprep.subr.mxu0 0.0
        %3829 = vmatpush2.msra.mxu0 0.0
        %3830 = vmatprep.subr.mxu0 0.0
        %3831 = vmatpush2.msra.mxu0 0.0
        %3832 = vmatprep.subr.mxu0 0.0
        %3833 = vmatpush2.msra.mxu0 0.0
        %3834 = vmatprep.subr.mxu0 0.0
        %3835 = vmatpush2.msra.mxu0 0.0
        %3836 = vmatprep.subr.mxu0 0.0
        %3837 = vmatpush2.msra.mxu0 0.0
        %3838 = vmatprep.mubr.f32.mxu0 0.0
        %3839 = vmatmul.mubr.f32.gmra.mxu0 %v3614
        %v3840 = vpop.f32.mrf.mxu0
        %v3841 = vadd.f32 0.0, %v3840
        %v3842 = vpop.f32.mrf.mxu0
        %v3843 = vadd.f32 0.0, %v3842
        %3844 = vdwg.mxu0
        %3845 = vmatprep.subr.mxu0 0.0
        %3846 = vmatpush1.msra.mxu0 0.0
        %3847 = vmatprep.subr.mxu0 0.0
        %3848 = vmatpush1.msra.mxu0 0.0
        %3849 = vmatprep.subr.mxu0 0.0
        %3850 = vmatpush1.msra.mxu0 0.0
        %3851 = vmatprep.subr.mxu0 0.0
        %3852 = vmatpush1.msra.mxu0 0.0
        %3853 = vmatprep.subr.mxu0 0.0
        %3854 = vmatpush1.msra.mxu0 0.0
        %3855 = vmatprep.subr.mxu0 0.0
        %3856 = vmatpush1.msra.mxu0 0.0
        %3857 = vmatprep.subr.mxu0 0.0
        %3858 = vmatpush1.msra.mxu0 0.0
        %3859 = vmatprep.subr.mxu0 0.0
        %3860 = vmatpush1.msra.mxu0 0.0
        %3861 = vmatprep.subr.mxu0 0.0
        %3862 = vmatpush1.msra.mxu0 0.0
        %3863 = vmatprep.subr.mxu0 0.0
        %3864 = vmatpush1.msra.mxu0 0.0
        %3865 = vmatprep.subr.mxu0 0.0
        %3866 = vmatpush1.msra.mxu0 0.0
        %3867 = vmatprep.subr.mxu0 0.0
        %3868 = vmatpush1.msra.mxu0 0.0
        %3869 = vmatprep.subr.mxu0 0.0
        %3870 = vmatpush1.msra.mxu0 0.0
        %3871 = vmatprep.subr.mxu0 0.0
        %3872 = vmatpush1.msra.mxu0 0.0
        %3873 = vmatprep.subr.mxu0 0.0
        %3874 = vmatpush1.msra.mxu0 0.0
        %3875 = vmatprep.subr.mxu0 %v3630
        %3876 = vmatpush1.msra.mxu0 %v3628
        %3877 = vmatprep.subr.mxu0 0.0
        %3878 = vmatpush2.msra.mxu0 0.0
        %3879 = vmatprep.subr.mxu0 0.0
        %3880 = vmatpush2.msra.mxu0 0.0
        %3881 = vmatprep.subr.mxu0 0.0
        %3882 = vmatpush2.msra.mxu0 0.0
        %3883 = vmatprep.subr.mxu0 0.0
        %3884 = vmatpush2.msra.mxu0 0.0
        %3885 = vmatprep.subr.mxu0 0.0
        %3886 = vmatpush2.msra.mxu0 0.0
        %3887 = vmatprep.subr.mxu0 0.0
        %3888 = vmatpush2.msra.mxu0 0.0
        %3889 = vmatprep.subr.mxu0 0.0
        %3890 = vmatpush2.msra.mxu0 0.0
        %3891 = vmatprep.subr.mxu0 0.0
        %3892 = vmatpush2.msra.mxu0 0.0
        %3893 = vmatprep.subr.mxu0 0.0
        %3894 = vmatpush2.msra.mxu0 0.0
        %3895 = vmatprep.subr.mxu0 0.0
        %3896 = vmatpush2.msra.mxu0 0.0
        %3897 = vmatprep.subr.mxu0 0.0
        %3898 = vmatpush2.msra.mxu0 0.0
        %3899 = vmatprep.subr.mxu0 0.0
        %3900 = vmatpush2.msra.mxu0 0.0
        %3901 = vmatprep.subr.mxu0 0.0
        %3902 = vmatpush2.msra.mxu0 0.0
        %3903 = vmatprep.subr.mxu0 0.0
        %3904 = vmatpush2.msra.mxu0 0.0
        %3905 = vmatprep.subr.mxu0 0.0
        %3906 = vmatpush2.msra.mxu0 0.0
        %3907 = vmatprep.subr.mxu0 0.0
        %3908 = vmatpush2.msra.mxu0 0.0
        %3909 = vmatprep.mubr.f32.mxu0 0.0
        %3910 = vmatmul.mubr.f32.gmra.mxu0 %v3614
        %v3911 = vpop.f32.mrf.mxu0
        %v3912 = vadd.f32 0.0, %v3911
        %v3913 = vpop.f32.mrf.mxu0
        %v3914 = vadd.f32 0.0, %v3913
        %3915 = vdwg.mxu0
        %v3916 = vadd.f32 %v3576, %v3699
        %v3917 = vadd.f32 %v3577, %v3701
        %v3918 = vadd.f32 %v3578, %v3770
        %v3919 = vadd.f32 %v3579, %v3772
        %v3920 = vadd.f32 %v3580, %v3841
        %v3921 = vadd.f32 %v3581, %v3843
        %v3922 = vadd.f32 %v3582, %v3912
        %v3923 = vadd.f32 %v3583, %v3914
        %3924 = vrot.lane.b32.xlu0 %v1652, 66
        %v3925 = vpop.permute.xlu0 %3924
        %3926 = vrot.lane.b32.xlu0 %v1656, 66
        %v3927 = vpop.permute.xlu0 %3926
        %3928 = vrot.lane.b32.xlu0 %v1660, 66
        %v3929 = vpop.permute.xlu0 %3928
        %3930 = vrot.lane.b32.xlu0 %v1664, 66
        %v3931 = vpop.permute.xlu0 %3930
        %3932 = vrot.lane.b32.xlu0 %v1668, 66
        %v3933 = vpop.permute.xlu0 %3932
        %3934 = vrot.lane.b32.xlu0 %v1672, 66
        %v3935 = vpop.permute.xlu0 %3934
        %3936 = vrot.lane.b32.xlu0 %v1676, 66
        %v3937 = vpop.permute.xlu0 %3936
        %3938 = vrot.lane.b32.xlu0 %v1680, 66
        %v3939 = vpop.permute.xlu0 %3938
        %vm3940 = vcmask 539648
        %v3941 = vsel %vm3940, %v3925, %v3927
        %v3942 = vsel %vm3940, %v3927, %v3929
        %v3943 = vsel %vm3940, %v3929, %v3931
        %v3944 = vsel %vm3940, %v3931, %v3933
        %v3945 = vsel %vm3940, %v3933, %v3935
        %v3946 = vsel %vm3940, %v3935, %v3937
        %v3947 = vsel %vm3940, %v3937, %v3939
        %v3957 = vmul.f32 %v654, %v3925
        %v3958 = vmul.f32 %v656, %v3941
        %v3959 = vmul.f32 %v725, %v3942
        %v3960 = vmul.f32 %v727, %v3943
        %v3961 = vmul.f32 %v796, %v3944
        %v3962 = vmul.f32 %v798, %v3945
        %v3963 = vmul.f32 %v867, %v3946
        %v3964 = vmul.f32 %v869, %v3947
        %v3965 = vmul.f32 %v938, %v3939
        %s3966 = scalar_lea.vmem %s2, 64
        %v3967 = vld [vmem:[%s3966] sm:$0xff]
        %3977 = vrot.lane.b32.xlu0 %v3957, 62
        %v3978 = vpop.permute.xlu0 %3977
        %3979 = vrot.lane.b32.xlu0 %v3958, 62
        %v3980 = vpop.permute.xlu0 %3979
        %3981 = vrot.lane.b32.xlu0 %v3959, 62
        %v3982 = vpop.permute.xlu0 %3981
        %3983 = vrot.lane.b32.xlu0 %v3960, 62
        %v3984 = vpop.permute.xlu0 %3983
        %3985 = vrot.lane.b32.xlu0 %v3961, 62
        %v3986 = vpop.permute.xlu0 %3985
        %3987 = vrot.lane.b32.xlu0 %v3962, 62
        %v3988 = vpop.permute.xlu0 %3987
        %3989 = vrot.lane.b32.xlu0 %v3963, 62
        %v3990 = vpop.permute.xlu0 %3989
        %3991 = vrot.lane.b32.xlu0 %v3964, 62
        %v3992 = vpop.permute.xlu0 %3991
        %3993 = vrot.lane.b32.xlu0 %v3965, 62
        %v3994 = vpop.permute.xlu0 %3993
        %vm3995 = vcmask 506880
        %v3996 = vsel %vm3995, %v3978, %v3980
        %v3997 = vsel %vm3995, %v3980, %v3982
        %v3998 = vsel %vm3995, %v3982, %v3984
        %v3999 = vsel %vm3995, %v3984, %v3986
        %v4000 = vsel %vm3995, %v3986, %v3988
        %v4001 = vsel %vm3995, %v3988, %v3990
        %v4002 = vsel %vm3995, %v3990, %v3992
        %v4003 = vsel %vm3995, %v3992, %v3994
        %v4005 = vsel %vm1030, %v3967, 0
        %v4007 = vsel %vm1034, %v3996, 0
        %v4009 = vsel %vm1034, %v3997, 0
        %v4011 = vsel %vm1034, %v3998, 0
        %v4013 = vsel %vm1034, %v3999, 0
        %v4015 = vsel %vm1034, %v4000, 0
        %v4017 = vsel %vm1034, %v4001, 0
        %v4019 = vsel %vm1034, %v4002, 0
        %v4021 = vsel %vm1034, %v4003, 0
        %4023 = vmatprep.subr.mxu0 0.0
        %4024 = vmatpush1.msra.mxu0 0.0
        %4025 = vmatprep.subr.mxu0 0.0
        %4026 = vmatpush1.msra.mxu0 0.0
        %4027 = vmatprep.subr.mxu0 0.0
        %4028 = vmatpush1.msra.mxu0 0.0
        %4029 = vmatprep.subr.mxu0 0.0
        %4030 = vmatpush1.msra.mxu0 0.0
        %4031 = vmatprep.subr.mxu0 0.0
        %4032 = vmatpush1.msra.mxu0 0.0
        %4033 = vmatprep.subr.mxu0 0.0
        %4034 = vmatpush1.msra.mxu0 0.0
        %4035 = vmatprep.subr.mxu0 0.0
        %4036 = vmatpush1.msra.mxu0 0.0
        %4037 = vmatprep.subr.mxu0 0.0
        %4038 = vmatpush1.msra.mxu0 0.0
        %4039 = vmatprep.subr.mxu0 0.0
        %4040 = vmatpush1.msra.mxu0 0.0
        %4041 = vmatprep.subr.mxu0 0.0
        %4042 = vmatpush1.msra.mxu0 0.0
        %4043 = vmatprep.subr.mxu0 0.0
        %4044 = vmatpush1.msra.mxu0 0.0
        %4045 = vmatprep.subr.mxu0 0.0
        %4046 = vmatpush1.msra.mxu0 0.0
        %4047 = vmatprep.subr.mxu0 0.0
        %4048 = vmatpush1.msra.mxu0 0.0
        %4049 = vmatprep.subr.mxu0 0.0
        %4050 = vmatpush1.msra.mxu0 0.0
        %4051 = vmatprep.subr.mxu0 0.0
        %4052 = vmatpush1.msra.mxu0 0.0
        %4053 = vmatprep.subr.mxu0 %v4009
        %4054 = vmatpush1.msra.mxu0 %v4007
        %4055 = vmatprep.subr.mxu0 0.0
        %4056 = vmatpush2.msra.mxu0 0.0
        %4057 = vmatprep.subr.mxu0 0.0
        %4058 = vmatpush2.msra.mxu0 0.0
        %4059 = vmatprep.subr.mxu0 0.0
        %4060 = vmatpush2.msra.mxu0 0.0
        %4061 = vmatprep.subr.mxu0 0.0
        %4062 = vmatpush2.msra.mxu0 0.0
        %4063 = vmatprep.subr.mxu0 0.0
        %4064 = vmatpush2.msra.mxu0 0.0
        %4065 = vmatprep.subr.mxu0 0.0
        %4066 = vmatpush2.msra.mxu0 0.0
        %4067 = vmatprep.subr.mxu0 0.0
        %4068 = vmatpush2.msra.mxu0 0.0
        %4069 = vmatprep.subr.mxu0 0.0
        %4070 = vmatpush2.msra.mxu0 0.0
        %4071 = vmatprep.subr.mxu0 0.0
        %4072 = vmatpush2.msra.mxu0 0.0
        %4073 = vmatprep.subr.mxu0 0.0
        %4074 = vmatpush2.msra.mxu0 0.0
        %4075 = vmatprep.subr.mxu0 0.0
        %4076 = vmatpush2.msra.mxu0 0.0
        %4077 = vmatprep.subr.mxu0 0.0
        %4078 = vmatpush2.msra.mxu0 0.0
        %4079 = vmatprep.subr.mxu0 0.0
        %4080 = vmatpush2.msra.mxu0 0.0
        %4081 = vmatprep.subr.mxu0 0.0
        %4082 = vmatpush2.msra.mxu0 0.0
        %4083 = vmatprep.subr.mxu0 0.0
        %4084 = vmatpush2.msra.mxu0 0.0
        %4085 = vmatprep.subr.mxu0 0.0
        %4086 = vmatpush2.msra.mxu0 0.0
        %4087 = vmatprep.mubr.f32.mxu0 0.0
        %4088 = vmatmul.mubr.f32.gmra.mxu0 %v4005
        %v4089 = vpop.f32.mrf.mxu0
        %v4090 = vadd.f32 0.0, %v4089
        %v4091 = vpop.f32.mrf.mxu0
        %v4092 = vadd.f32 0.0, %v4091
        %4093 = vdwg.mxu0
        %4094 = vmatprep.subr.mxu0 0.0
        %4095 = vmatpush1.msra.mxu0 0.0
        %4096 = vmatprep.subr.mxu0 0.0
        %4097 = vmatpush1.msra.mxu0 0.0
        %4098 = vmatprep.subr.mxu0 0.0
        %4099 = vmatpush1.msra.mxu0 0.0
        %4100 = vmatprep.subr.mxu0 0.0
        %4101 = vmatpush1.msra.mxu0 0.0
        %4102 = vmatprep.subr.mxu0 0.0
        %4103 = vmatpush1.msra.mxu0 0.0
        %4104 = vmatprep.subr.mxu0 0.0
        %4105 = vmatpush1.msra.mxu0 0.0
        %4106 = vmatprep.subr.mxu0 0.0
        %4107 = vmatpush1.msra.mxu0 0.0
        %4108 = vmatprep.subr.mxu0 0.0
        %4109 = vmatpush1.msra.mxu0 0.0
        %4110 = vmatprep.subr.mxu0 0.0
        %4111 = vmatpush1.msra.mxu0 0.0
        %4112 = vmatprep.subr.mxu0 0.0
        %4113 = vmatpush1.msra.mxu0 0.0
        %4114 = vmatprep.subr.mxu0 0.0
        %4115 = vmatpush1.msra.mxu0 0.0
        %4116 = vmatprep.subr.mxu0 0.0
        %4117 = vmatpush1.msra.mxu0 0.0
        %4118 = vmatprep.subr.mxu0 0.0
        %4119 = vmatpush1.msra.mxu0 0.0
        %4120 = vmatprep.subr.mxu0 0.0
        %4121 = vmatpush1.msra.mxu0 0.0
        %4122 = vmatprep.subr.mxu0 0.0
        %4123 = vmatpush1.msra.mxu0 0.0
        %4124 = vmatprep.subr.mxu0 %v4013
        %4125 = vmatpush1.msra.mxu0 %v4011
        %4126 = vmatprep.subr.mxu0 0.0
        %4127 = vmatpush2.msra.mxu0 0.0
        %4128 = vmatprep.subr.mxu0 0.0
        %4129 = vmatpush2.msra.mxu0 0.0
        %4130 = vmatprep.subr.mxu0 0.0
        %4131 = vmatpush2.msra.mxu0 0.0
        %4132 = vmatprep.subr.mxu0 0.0
        %4133 = vmatpush2.msra.mxu0 0.0
        %4134 = vmatprep.subr.mxu0 0.0
        %4135 = vmatpush2.msra.mxu0 0.0
        %4136 = vmatprep.subr.mxu0 0.0
        %4137 = vmatpush2.msra.mxu0 0.0
        %4138 = vmatprep.subr.mxu0 0.0
        %4139 = vmatpush2.msra.mxu0 0.0
        %4140 = vmatprep.subr.mxu0 0.0
        %4141 = vmatpush2.msra.mxu0 0.0
        %4142 = vmatprep.subr.mxu0 0.0
        %4143 = vmatpush2.msra.mxu0 0.0
        %4144 = vmatprep.subr.mxu0 0.0
        %4145 = vmatpush2.msra.mxu0 0.0
        %4146 = vmatprep.subr.mxu0 0.0
        %4147 = vmatpush2.msra.mxu0 0.0
        %4148 = vmatprep.subr.mxu0 0.0
        %4149 = vmatpush2.msra.mxu0 0.0
        %4150 = vmatprep.subr.mxu0 0.0
        %4151 = vmatpush2.msra.mxu0 0.0
        %4152 = vmatprep.subr.mxu0 0.0
        %4153 = vmatpush2.msra.mxu0 0.0
        %4154 = vmatprep.subr.mxu0 0.0
        %4155 = vmatpush2.msra.mxu0 0.0
        %4156 = vmatprep.subr.mxu0 0.0
        %4157 = vmatpush2.msra.mxu0 0.0
        %4158 = vmatprep.mubr.f32.mxu0 0.0
        %4159 = vmatmul.mubr.f32.gmra.mxu0 %v4005
        %v4160 = vpop.f32.mrf.mxu0
        %v4161 = vadd.f32 0.0, %v4160
        %v4162 = vpop.f32.mrf.mxu0
        %v4163 = vadd.f32 0.0, %v4162
        %4164 = vdwg.mxu0
        %4165 = vmatprep.subr.mxu0 0.0
        %4166 = vmatpush1.msra.mxu0 0.0
        %4167 = vmatprep.subr.mxu0 0.0
        %4168 = vmatpush1.msra.mxu0 0.0
        %4169 = vmatprep.subr.mxu0 0.0
        %4170 = vmatpush1.msra.mxu0 0.0
        %4171 = vmatprep.subr.mxu0 0.0
        %4172 = vmatpush1.msra.mxu0 0.0
        %4173 = vmatprep.subr.mxu0 0.0
        %4174 = vmatpush1.msra.mxu0 0.0
        %4175 = vmatprep.subr.mxu0 0.0
        %4176 = vmatpush1.msra.mxu0 0.0
        %4177 = vmatprep.subr.mxu0 0.0
        %4178 = vmatpush1.msra.mxu0 0.0
        %4179 = vmatprep.subr.mxu0 0.0
        %4180 = vmatpush1.msra.mxu0 0.0
        %4181 = vmatprep.subr.mxu0 0.0
        %4182 = vmatpush1.msra.mxu0 0.0
        %4183 = vmatprep.subr.mxu0 0.0
        %4184 = vmatpush1.msra.mxu0 0.0
        %4185 = vmatprep.subr.mxu0 0.0
        %4186 = vmatpush1.msra.mxu0 0.0
        %4187 = vmatprep.subr.mxu0 0.0
        %4188 = vmatpush1.msra.mxu0 0.0
        %4189 = vmatprep.subr.mxu0 0.0
        %4190 = vmatpush1.msra.mxu0 0.0
        %4191 = vmatprep.subr.mxu0 0.0
        %4192 = vmatpush1.msra.mxu0 0.0
        %4193 = vmatprep.subr.mxu0 0.0
        %4194 = vmatpush1.msra.mxu0 0.0
        %4195 = vmatprep.subr.mxu0 %v4017
        %4196 = vmatpush1.msra.mxu0 %v4015
        %4197 = vmatprep.subr.mxu0 0.0
        %4198 = vmatpush2.msra.mxu0 0.0
        %4199 = vmatprep.subr.mxu0 0.0
        %4200 = vmatpush2.msra.mxu0 0.0
        %4201 = vmatprep.subr.mxu0 0.0
        %4202 = vmatpush2.msra.mxu0 0.0
        %4203 = vmatprep.subr.mxu0 0.0
        %4204 = vmatpush2.msra.mxu0 0.0
        %4205 = vmatprep.subr.mxu0 0.0
        %4206 = vmatpush2.msra.mxu0 0.0
        %4207 = vmatprep.subr.mxu0 0.0
        %4208 = vmatpush2.msra.mxu0 0.0
        %4209 = vmatprep.subr.mxu0 0.0
        %4210 = vmatpush2.msra.mxu0 0.0
        %4211 = vmatprep.subr.mxu0 0.0
        %4212 = vmatpush2.msra.mxu0 0.0
        %4213 = vmatprep.subr.mxu0 0.0
        %4214 = vmatpush2.msra.mxu0 0.0
        %4215 = vmatprep.subr.mxu0 0.0
        %4216 = vmatpush2.msra.mxu0 0.0
        %4217 = vmatprep.subr.mxu0 0.0
        %4218 = vmatpush2.msra.mxu0 0.0
        %4219 = vmatprep.subr.mxu0 0.0
        %4220 = vmatpush2.msra.mxu0 0.0
        %4221 = vmatprep.subr.mxu0 0.0
        %4222 = vmatpush2.msra.mxu0 0.0
        %4223 = vmatprep.subr.mxu0 0.0
        %4224 = vmatpush2.msra.mxu0 0.0
        %4225 = vmatprep.subr.mxu0 0.0
        %4226 = vmatpush2.msra.mxu0 0.0
        %4227 = vmatprep.subr.mxu0 0.0
        %4228 = vmatpush2.msra.mxu0 0.0
        %4229 = vmatprep.mubr.f32.mxu0 0.0
        %4230 = vmatmul.mubr.f32.gmra.mxu0 %v4005
        %v4231 = vpop.f32.mrf.mxu0
        %v4232 = vadd.f32 0.0, %v4231
        %v4233 = vpop.f32.mrf.mxu0
        %v4234 = vadd.f32 0.0, %v4233
        %4235 = vdwg.mxu0
        %4236 = vmatprep.subr.mxu0 0.0
        %4237 = vmatpush1.msra.mxu0 0.0
        %4238 = vmatprep.subr.mxu0 0.0
        %4239 = vmatpush1.msra.mxu0 0.0
        %4240 = vmatprep.subr.mxu0 0.0
        %4241 = vmatpush1.msra.mxu0 0.0
        %4242 = vmatprep.subr.mxu0 0.0
        %4243 = vmatpush1.msra.mxu0 0.0
        %4244 = vmatprep.subr.mxu0 0.0
        %4245 = vmatpush1.msra.mxu0 0.0
        %4246 = vmatprep.subr.mxu0 0.0
        %4247 = vmatpush1.msra.mxu0 0.0
        %4248 = vmatprep.subr.mxu0 0.0
        %4249 = vmatpush1.msra.mxu0 0.0
        %4250 = vmatprep.subr.mxu0 0.0
        %4251 = vmatpush1.msra.mxu0 0.0
        %4252 = vmatprep.subr.mxu0 0.0
        %4253 = vmatpush1.msra.mxu0 0.0
        %4254 = vmatprep.subr.mxu0 0.0
        %4255 = vmatpush1.msra.mxu0 0.0
        %4256 = vmatprep.subr.mxu0 0.0
        %4257 = vmatpush1.msra.mxu0 0.0
        %4258 = vmatprep.subr.mxu0 0.0
        %4259 = vmatpush1.msra.mxu0 0.0
        %4260 = vmatprep.subr.mxu0 0.0
        %4261 = vmatpush1.msra.mxu0 0.0
        %4262 = vmatprep.subr.mxu0 0.0
        %4263 = vmatpush1.msra.mxu0 0.0
        %4264 = vmatprep.subr.mxu0 0.0
        %4265 = vmatpush1.msra.mxu0 0.0
        %4266 = vmatprep.subr.mxu0 %v4021
        %4267 = vmatpush1.msra.mxu0 %v4019
        %4268 = vmatprep.subr.mxu0 0.0
        %4269 = vmatpush2.msra.mxu0 0.0
        %4270 = vmatprep.subr.mxu0 0.0
        %4271 = vmatpush2.msra.mxu0 0.0
        %4272 = vmatprep.subr.mxu0 0.0
        %4273 = vmatpush2.msra.mxu0 0.0
        %4274 = vmatprep.subr.mxu0 0.0
        %4275 = vmatpush2.msra.mxu0 0.0
        %4276 = vmatprep.subr.mxu0 0.0
        %4277 = vmatpush2.msra.mxu0 0.0
        %4278 = vmatprep.subr.mxu0 0.0
        %4279 = vmatpush2.msra.mxu0 0.0
        %4280 = vmatprep.subr.mxu0 0.0
        %4281 = vmatpush2.msra.mxu0 0.0
        %4282 = vmatprep.subr.mxu0 0.0
        %4283 = vmatpush2.msra.mxu0 0.0
        %4284 = vmatprep.subr.mxu0 0.0
        %4285 = vmatpush2.msra.mxu0 0.0
        %4286 = vmatprep.subr.mxu0 0.0
        %4287 = vmatpush2.msra.mxu0 0.0
        %4288 = vmatprep.subr.mxu0 0.0
        %4289 = vmatpush2.msra.mxu0 0.0
        %4290 = vmatprep.subr.mxu0 0.0
        %4291 = vmatpush2.msra.mxu0 0.0
        %4292 = vmatprep.subr.mxu0 0.0
        %4293 = vmatpush2.msra.mxu0 0.0
        %4294 = vmatprep.subr.mxu0 0.0
        %4295 = vmatpush2.msra.mxu0 0.0
        %4296 = vmatprep.subr.mxu0 0.0
        %4297 = vmatpush2.msra.mxu0 0.0
        %4298 = vmatprep.subr.mxu0 0.0
        %4299 = vmatpush2.msra.mxu0 0.0
        %4300 = vmatprep.mubr.f32.mxu0 0.0
        %4301 = vmatmul.mubr.f32.gmra.mxu0 %v4005
        %v4302 = vpop.f32.mrf.mxu0
        %v4303 = vadd.f32 0.0, %v4302
        %v4304 = vpop.f32.mrf.mxu0
        %v4305 = vadd.f32 0.0, %v4304
        %4306 = vdwg.mxu0
        %v4307 = vadd.f32 %v3916, %v4090
        %v4308 = vadd.f32 %v3917, %v4092
        %v4309 = vadd.f32 %v3918, %v4161
        %v4310 = vadd.f32 %v3919, %v4163
        %v4311 = vadd.f32 %v3920, %v4232
        %v4312 = vadd.f32 %v3921, %v4234
        %v4313 = vadd.f32 %v3922, %v4303
        %v4314 = vadd.f32 %v3923, %v4305
        %v4315 = vld [vmem:[%s4] sm:$0xff]
        %4317 = vset.pattern.permute.xlu0 0
        %4318 = vperm.xlu0 %4317, %v4315
        %v4319 = vpop.permute.xlu0 %4318
        %v4321 = vmul.f32 %v4307, %v4319
        %v4322 = vmul.f32 %v4308, %v4319
        %v4323 = vmul.f32 %v4309, %v4319
        %v4324 = vmul.f32 %v4310, %v4319
        %v4325 = vmul.f32 %v4311, %v4319
        %v4326 = vmul.f32 %v4312, %v4319
        %v4327 = vmul.f32 %v4313, %v4319
        %v4328 = vmul.f32 %v4314, %v4319
        %v4329 = vld [vmem:[%s5] sm:$0xff]
        %4331 = vset.pattern.permute.xlu0 0
        %4332 = vperm.xlu0 %4331, %v4329
        %v4333 = vpop.permute.xlu0 %4332
        %v4335 = vadd.f32 %v4321, %v4333
        %v4336 = vadd.f32 %v4322, %v4333
        %v4337 = vadd.f32 %v4323, %v4333
        %v4338 = vadd.f32 %v4324, %v4333
        %v4339 = vadd.f32 %v4325, %v4333
        %v4340 = vadd.f32 %v4326, %v4333
        %v4341 = vadd.f32 %v4327, %v4333
        %v4342 = vadd.f32 %v4328, %v4333
        %v4343 = vmax.f32 %v4335, 0.0
        %v4344 = vmax.f32 %v4336, 0.0
        %v4345 = vmax.f32 %v4337, 0.0
        %v4346 = vmax.f32 %v4338, 0.0
        %v4347 = vmax.f32 %v4339, 0.0
        %v4348 = vmax.f32 %v4340, 0.0
        %v4349 = vmax.f32 %v4341, 0.0
        %v4350 = vmax.f32 %v4342, 0.0
        %4351 = vst [vmem:[%s294] sm:$0xff] %v4343
        %4352 = vst [vmem:[%s294 + $0x8] sm:$0xff] %v4344
        %4353 = vst [vmem:[%s294 + $0x10] sm:$0xff] %v4345
        %4354 = vst [vmem:[%s294 + $0x18] sm:$0xff] %v4346
        %4355 = vst [vmem:[%s294 + $0x20] sm:$0xff] %v4347
        %4356 = vst [vmem:[%s294 + $0x28] sm:$0xff] %v4348
        %4357 = vst [vmem:[%s294 + $0x30] sm:$0xff] %v4349
        %4358 = vst [vmem:[%s294 + $0x38] sm:$0xff] %v4350
        %s4359 = sand.u32 %s163, 1
        %s4360 = scalar_lea.sflag [#allocation4], %s4359
        %s4361 = sand.u32 %s163, 1
        %s4362 = smul.addr %s4361, 64
        %s4363 = scalar_lea.vmem [#allocation8], %s4362
        // Predicated region
        $region57: #{tpu_custom_call.1} parent=43 // pred_check
          %p4364 = pneg %p173
        $region58: #{tpu_custom_call.1} parent=43 // pred_check_branch
          %4366 = sbr.rel (%p4364) target = $region60
        $region59: #{tpu_custom_call.1} parent=43 // pred_region
          %s4368 = ssub.s32 1024, 1024
          %4369 = vsyncadd %s4360, %s4368
          %s4370 = smul.addr %s24, 8
          %s4371 = smul.addr %s4370, 128
          %s4372 = scalar_lea.hbm %s6, %s4371
          %s4374 = sshll.u32 %s4363, 4
          %s4375 = int_to_ptr.vmem [resolvable:$true] %s4374
          %4377 = dma.vmem_to_hbm [thread:$0]  %s4375, 1024, %s4372, %s4360
        $region60: #{tpu_custom_call.1} parent=43 // pred_fallthru
          _
      $region44: #{tpu_custom_call.1} parent=5 // pred_fallthru
        _
      %p4378 = scmp.le.s32.totalorder 2, %s19
      // Predicated region
      $region61: #{tpu_custom_call.1} parent=5 // pred_check
        %p4379 = pneg %p4378
      $region62: #{tpu_custom_call.1} parent=5 // pred_check_branch
        %4381 = sbr.rel (%p4379) target = $region64
      $region63: #{tpu_custom_call.1} parent=5 // pred_region
        %s4382 = ssub.s32 %s19, 2
        // Predicated region
        $region65: #{tpu_custom_call.1} parent=63 // pred_check
          %p4383 = pneg %p179
        $region66: #{tpu_custom_call.1} parent=63 // pred_check_branch
          %4385 = sbr.rel (%p4383) target = $region68
        $region67: #{tpu_custom_call.1} parent=63 // pred_region
          %s4386 = sand.u32 %s164, 1
          %s4387 = scalar_lea.sflag [#allocation4], %s4386
          %s4388 = sand.u32 %s164, 1
          %s4389 = smul.addr %s4388, 64
          %s4390 = scalar_lea.vmem [#allocation8], %s4389
          %4391 = dma.done %s4387, 1024
        $region68: #{tpu_custom_call.1} parent=63 // pred_fallthru
          _
      $region64: #{tpu_custom_call.1} parent=5 // pred_fallthru
        _
    $region6: #{tpu_custom_call.1} parent=1 // loop_footer
      %s23 = sadd.s32 1, %s19
    $region7: #{tpu_custom_call.1} parent=1 // loop_footer_branch
      %18 = sbr.rel target = $region3
    $region8: #{tpu_custom_call.1} parent=1 // loop_exit
      _
    %4392 = vsyncpa [#allocation3], 1
    %s4393 = scalar_lea.sflag [#allocation3], 1
    %4394 = vsyncpa %s4393, 1
    %4395 = vsyncpa [#allocation6], 1
    %4396 = vsyncpa [#allocation4], 1
    %s4397 = scalar_lea.sflag [#allocation4], 1
    %4398 = vsyncpa %s4397, 1

</llo_original>
